<compile_context>
chip_gen: v5e
topology: v5e:2x2
jax: 0.10.0
libtpu: 0.0.40
codegen_flags: <defaults>
</compile_context>

<pallas_src>
import jax
import jax.numpy as jnp
from jax.experimental import pallas as pl
from jax.experimental.pallas import tpu as pltpu


# ---------------------------------------------------------------------------
# Kernel 1: (t, n)-only precompute, single invocation (no grid).
#   s1     = (2*lambda - 2) / lambda                      -> (T*N, 1)
#   adj_s2 = (2 / lambda) * softmax(attention scores)     -> (T, N, N)
# ---------------------------------------------------------------------------
def adj_scale_kernel(st_ref, wq_ref, bq_ref, wk_ref, bk_ref, wvec_ref,
                     fw1_ref, fb1_ref, fw2_ref, fb2_ref,
                     s1_ref, adj_ref):
    T, N, _ = adj_ref.shape
    st = st_ref[...]                                               # (T*N, E)
    E = st.shape[-1]

    # Q/K projections on the full (T*N, E) slab.  The Linear(num_heads->1)
    # head-combine and the 1/sqrt(head_dim) scale are folded into the
    # per-column vector `wvec`, so the multi-head score collapses into one
    # q_scaled @ k^T matmul per time step.
    q = (jnp.dot(st, wq_ref[...], preferred_element_type=jnp.float32)
         + bq_ref[...]) * wvec_ref[...]
    k = jnp.dot(st, wk_ref[...], preferred_element_type=jnp.float32) + bk_ref[...]

    # lambda MLP (DGCN.lambda_fc) + get_actual_lambda, also on the full slab.
    h = jnp.maximum(
        jnp.dot(st, fw1_ref[...], preferred_element_type=jnp.float32)
        + fb1_ref[...], 0.0)
    lam = 1.0 + jnp.maximum(
        jnp.dot(h, fw2_ref[...], preferred_element_type=jnp.float32)
        + fb2_ref[0], 0.0)                                         # (T*N, 1)
    inv = 1.0 / lam
    s1_ref[...] = (2.0 - 2.0 * inv).astype(s1_ref.dtype)

    # Per-time-step scores as one t-batched matmul, then softmax with the row
    # normalization and the 2/lambda scale fused into a single multiplier.
    # (conv bias dropped: softmax is invariant to a constant logit shift.)
    q3 = q.reshape(T, N, E)
    k3 = k.reshape(T, N, E)
    logits = jnp.einsum('tne,tme->tnm', q3, k3,
                        preferred_element_type=jnp.float32)        # (T, N, N)
    m = jnp.max(logits, axis=-1, keepdims=True)
    e = jnp.exp(logits - m)
    rowsum = jnp.sum(e, axis=-1, keepdims=True)
    scale = (2.0 * inv).reshape(T, N, 1) / rowsum                  # (T, N, 1)
    adj_ref[...] = (e * scale).astype(adj_ref.dtype)


# ---------------------------------------------------------------------------
# Kernel 2: graph conv + projections + residual + LayerNorm.
# One grid step = one (batch, T-tile) slab; grid is fully parallel.
# ---------------------------------------------------------------------------
def st_gconv_kernel(x_ref, s1_ref, adj_ref, w0_ref, w1_ref, b_ref,
                    gamma_ref, beta_ref, o_ref):
    x3 = x_ref[...]                                                # (TT, N, C)
    TT, N, C = x3.shape
    x2 = x3.reshape(TT * N, C)

    # Support-2 branch: (2/lambda * softmax-adj) @ x, then @ W1.
    xg2 = jnp.einsum('tnm,tmc->tnc', adj_ref[...], x3,
                     preferred_element_type=jnp.float32)           # (TT, N, C)
    p2 = jnp.dot(xg2.reshape(TT * N, C), w1_ref[...],
                 preferred_element_type=jnp.float32)

    # Support-1 branch: per-row scaling commutes with the right matmul, so
    # x_g1 never materializes (no concat, no extra relayout copies).
    p1 = s1_ref[...] * jnp.dot(x2, w0_ref[...],
                               preferred_element_type=jnp.float32)

    # Residual + bias + LayerNorm over channels (dropout p=0 -> identity).
    y = x2 + p1 + p2 + b_ref[...]
    mu = jnp.mean(y, axis=-1, keepdims=True)
    var = jnp.mean((y - mu) * (y - mu), axis=-1, keepdims=True)
    y = (y - mu) * jax.lax.rsqrt(var + 1e-5)
    y = y * gamma_ref[...] + beta_ref[...]

    o_ref[...] = y.reshape(TT, N, C).astype(o_ref.dtype)


# ---------------------------------------------------------------------------
# Wrapper
# ---------------------------------------------------------------------------
def spatial_temporal_layer_forward(x, st_emb, params, num_heads):
    B, T, N, C = x.shape
    E = st_emb.shape[-1]
    hd = E // num_heads
    H = params["fc_w1"].shape[-1]

    # Head-combine weights folded with the 1/sqrt(head_dim) attention scale.
    wvec = (jnp.repeat(params["conv_w"], hd) / (float(hd) ** 0.5)).reshape(1, E)
    wvec = wvec.astype(jnp.float32)
    st2 = st_emb.reshape(T * N, E).astype(jnp.float32)
    fb2 = params["fc_b2"].reshape(1).astype(jnp.float32)           # scalar -> SMEM

    # TODO(synk): make this generation-dependent (<=48 MiB on v7x, up to
    # ~100 MiB on v5e/v6e) once T/N/C reach production sizes; tiny here.
    vmem_bytes = 32 * 1024 * 1024
    vmem_spec = pl.BlockSpec(memory_space=pltpu.MemorySpace.VMEM)
    smem_spec = pl.BlockSpec(memory_space=pltpu.MemorySpace.SMEM)

    cost1 = pl.CostEstimate(
        flops=int(2 * T * N * (2 * E * E + E * H + H) + 2 * T * N * N * E),
        transcendentals=int(T * N * N + 2 * T * N),
        bytes_accessed=int(4 * (T * N * E + 2 * E * E + 3 * E + E * H + 2 * H + 1
                                + T * N * N + T * N)))

    s1, adj_s2 = pl.pallas_call(
        adj_scale_kernel,
        out_shape=(jax.ShapeDtypeStruct((T * N, 1), jnp.float32),
                   jax.ShapeDtypeStruct((T, N, N), jnp.float32)),
        in_specs=[vmem_spec] * 9 + [smem_spec],
        out_specs=(vmem_spec, vmem_spec),
        compiler_params=pltpu.CompilerParams(vmem_limit_bytes=vmem_bytes),
        cost_estimate=cost1,
    )(st2, params["wq"], params["bq"], params["wk"], params["bk"], wvec,
      params["fc_w1"], params["fc_b1"], params["fc_w2"], fb2)

    # Split cheb_k weights; no concat / fused (2C, C) weight needed anymore.
    w0 = params["weights"][0]
    w1 = params["weights"][1]

    # T-tiling: >=2 grid steps per TensorCore on v7x megacore.
    TT = T // 2 if (T % 2 == 0 and T >= 2) else T
    S = T // TT

    cost2 = pl.CostEstimate(
        flops=int(2 * B * T * N * N * C + 4 * B * T * N * C * C
                  + 10 * B * T * N * C),
        transcendentals=int(B * T * N),
        bytes_accessed=int(4 * (2 * B * T * N * C + B * T * N * N + T * N
                                + 2 * C * C + 3 * C)))

    return pl.pallas_call(
        st_gconv_kernel,
        out_shape=jax.ShapeDtypeStruct((B, T, N, C), jnp.float32),
        grid_spec=pltpu.PrefetchScalarGridSpec(
            num_scalar_prefetch=0,
            grid=(B, S),
            in_specs=[
                pl.BlockSpec((pl.Squeezed(), TT, N, C), lambda b, s: (b, s, 0, 0)),
                pl.BlockSpec((TT * N, 1), lambda b, s: (s, 0)),
                pl.BlockSpec((TT, N, N), lambda b, s: (s, 0, 0)),
                pl.BlockSpec((C, C), lambda b, s: (0, 0)),
                pl.BlockSpec((C, C), lambda b, s: (0, 0)),
                pl.BlockSpec((1, C), lambda b, s: (0, 0)),
                pl.BlockSpec((1, C), lambda b, s: (0, 0)),
                pl.BlockSpec((1, C), lambda b, s: (0, 0)),
            ],
            out_specs=pl.BlockSpec((pl.Squeezed(), TT, N, C),
                                   lambda b, s: (b, s, 0, 0)),
        ),
        compiler_params=pltpu.CompilerParams(
            dimension_semantics=("parallel", "parallel"),
            vmem_limit_bytes=vmem_bytes),
        cost_estimate=cost2,
    )(x, s1, adj_s2, w0, w1, params["bias"], params["ln_gamma"], params["ln_beta"])


# ---------------------------------------------------------------------------
# Pure-JAX reference mirroring the PyTorch SpatialTemporalLayer.forward
# ---------------------------------------------------------------------------
def spatial_temporal_layer_reference(x, st_emb, params, num_heads):
    T, N, E = st_emb.shape
    hd = E // num_heads

    q = st_emb @ params["wq"] + params["bq"]
    k = st_emb @ params["wk"] + params["bk"]
    qh = q.reshape(T, N, num_heads, hd)
    kh = k.reshape(T, N, num_heads, hd)
    score = jnp.einsum('tnhd,tmhd->tnmh', qh, kh) / (float(hd) ** 0.5)    # (T,N,N,H)
    logits = jnp.einsum('tnmh,h->tnm', score, params["conv_w"]) + params["conv_b"][0, 0]
    adj = jax.nn.softmax(logits, axis=-1)                                 # (T, N, N)

    h = jnp.maximum(st_emb @ params["fc_w1"] + params["fc_b1"], 0.0)
    lam = 1.0 + jnp.maximum(h @ params["fc_w2"] + params["fc_b2"], 0.0)   # (T, N, 1)

    eye = jnp.eye(N, dtype=x.dtype)
    sup1 = (2.0 * lam - 2.0) / lam * eye                                  # (T, N, N)
    sup2 = 2.0 / lam * adj                                                # (T, N, N)
    x_g1 = jnp.einsum('tnm,btmc->btnc', sup1, x)
    x_g2 = jnp.einsum('tnm,btmc->btnc', sup2, x)
    x_g = jnp.stack([x_g1, x_g2], axis=3)                                 # (B,T,N,2,C)
    gconv = jnp.einsum('btnki,kio->btno', x_g, params["weights"]) + params["bias"]

    y = x + gconv                                                         # dropout p=0
    mu = y.mean(-1, keepdims=True)
    var = ((y - mu) ** 2).mean(-1, keepdims=True)
    return (y - mu) / jnp.sqrt(var + 1e-5) * params["ln_gamma"] + params["ln_beta"]


if __name__ == "__main__":
    # Full-precision matmuls for both the Pallas kernels and the XLA reference
    # so the comparison tolerance is meaningful.
    jax.config.update("jax_default_matmul_precision", "highest")

    B, T, N = 2, 8, 16            # batch, seq, spatial (nodes)
    model_dim = 16                # channels (dim_in == dim_out in this layer)
    st_emb_size = 16
    num_heads = 8                 # head_dim = 2
    hidden = 32                   # lambda MLP hidden width (fixed to 32 in DGCN)

    key = jax.random.PRNGKey(0)
    ks = jax.random.split(key, 16)

    x = jax.random.normal(ks[0], (B, T, N, model_dim), jnp.float32)
    st_emb = jax.random.normal(ks[1], (T, N, st_emb_size), jnp.float32)

    params = {
        # AttentionScoreLayer (FC_V / out_proj never affect the returned score).
        "wq":      0.3 * jax.random.normal(ks[2], (st_emb_size, st_emb_size), jnp.float32),
        "bq":      0.1 * jax.random.normal(ks[3], (1, st_emb_size), jnp.float32),
        "wk":      0.3 * jax.random.normal(ks[4], (st_emb_size, st_emb_size), jnp.float32),
        "bk":      0.1 * jax.random.normal(ks[5], (1, st_emb_size), jnp.float32),
        # conv = Linear(num_heads, 1)
        "conv_w":  0.3 * jax.random.normal(ks[6], (num_heads,), jnp.float32),
        "conv_b":  0.1 * jax.random.normal(ks[7], (1, 1), jnp.float32),
        # DGCN (cheb_k = 2)
        "weights": 0.2 * jax.random.normal(ks[8], (2, model_dim, model_dim), jnp.float32),
        "bias":    0.1 * jax.random.normal(ks[9], (1, model_dim), jnp.float32),
        "fc_w1":   0.2 * jax.random.normal(ks[10], (st_emb_size, hidden), jnp.float32),
        "fc_b1":   0.1 * jax.random.normal(ks[11], (1, hidden), jnp.float32),
        "fc_w2":   0.2 * jax.random.normal(ks[12], (hidden, 1), jnp.float32),
        "fc_b2":   0.1 * jax.random.normal(ks[13], (1, 1), jnp.float32),
        # LayerNorm(model_dim)
        "ln_gamma": 1.0 + 0.1 * jax.random.normal(ks[14], (1, model_dim), jnp.float32),
        "ln_beta":  0.1 * jax.random.normal(ks[15], (1, model_dim), jnp.float32),
    }

    out = jax.block_until_ready(
        spatial_temporal_layer_forward(x, st_emb, params, num_heads))
    ref = jax.block_until_ready(
        spatial_temporal_layer_reference(x, st_emb, params, num_heads))

    assert out.shape == (B, T, N, model_dim)
    assert jnp.allclose(out, ref, atol=1e-4, rtol=1e-4), (
        "mismatch vs reference: max abs err = "
        + str(float(jnp.max(jnp.abs(out - ref)))))

    print("KERNEL_OK")
</pallas_src>

<mosaic_0001>
module attributes {stable_mosaic.version = 11 : i64} {
  func.func @adj_scale_kernel(%arg0: memref<128x16xf32, #tpu.memory_space<vmem>>, %arg1: memref<16x16xf32, #tpu.memory_space<vmem>>, %arg2: memref<1x16xf32, #tpu.memory_space<vmem>>, %arg3: memref<16x16xf32, #tpu.memory_space<vmem>>, %arg4: memref<1x16xf32, #tpu.memory_space<vmem>>, %arg5: memref<1x16xf32, #tpu.memory_space<vmem>>, %arg6: memref<16x32xf32, #tpu.memory_space<vmem>>, %arg7: memref<1x32xf32, #tpu.memory_space<vmem>>, %arg8: memref<32x1xf32, #tpu.memory_space<vmem>>, %arg9: memref<1xf32, #tpu.memory_space<smem>>, %arg10: memref<128x1xf32, #tpu.memory_space<vmem>>, %arg11: memref<8x16x16xf32, #tpu.memory_space<vmem>>) attributes {dimension_semantics = [], scalar_prefetch = 0 : i64, scratch_operands = 0 : i64, tpu.core_type = #tpu.core_type<tc>} {
    %c0 = arith.constant 0 : index
    %c0_0 = arith.constant 0 : index
    %0 = vector.load %arg0[%c0, %c0_0] : memref<128x16xf32, #tpu.memory_space<vmem>>, vector<128x16xf32>
    %c0_1 = arith.constant 0 : index
    %c0_2 = arith.constant 0 : index
    %1 = vector.load %arg1[%c0_1, %c0_2] : memref<16x16xf32, #tpu.memory_space<vmem>>, vector<16x16xf32>
    %cst = arith.constant dense<0.000000e+00> : vector<128x16xf32>
    %2 = tpu.matmul %0, %1, %cst {dimension_numbers = #tpu.dot_dimension_numbers<[1], [0], [0], [1], [0, 0, 1, 1], [], []>, precision = #tpu.contract_precision<fp32>} : vector<128x16xf32>, vector<16x16xf32>, vector<128x16xf32> -> vector<128x16xf32>
    %c0_3 = arith.constant 0 : index
    %c0_4 = arith.constant 0 : index
    %3 = vector.load %arg2[%c0_3, %c0_4] : memref<1x16xf32, #tpu.memory_space<vmem>>, vector<1x16xf32>
    %4 = vector.broadcast %3 : vector<1x16xf32> to vector<128x16xf32>
    %5 = arith.addf %2, %4 : vector<128x16xf32>
    %c0_5 = arith.constant 0 : index
    %c0_6 = arith.constant 0 : index
    %6 = vector.load %arg5[%c0_5, %c0_6] : memref<1x16xf32, #tpu.memory_space<vmem>>, vector<1x16xf32>
    %7 = vector.broadcast %6 : vector<1x16xf32> to vector<128x16xf32>
    %8 = arith.mulf %5, %7 : vector<128x16xf32>
    %c0_7 = arith.constant 0 : index
    %c0_8 = arith.constant 0 : index
    %9 = vector.load %arg3[%c0_7, %c0_8] : memref<16x16xf32, #tpu.memory_space<vmem>>, vector<16x16xf32>
    %cst_9 = arith.constant dense<0.000000e+00> : vector<128x16xf32>
    %10 = tpu.matmul %0, %9, %cst_9 {dimension_numbers = #tpu.dot_dimension_numbers<[1], [0], [0], [1], [0, 0, 1, 1], [], []>, precision = #tpu.contract_precision<fp32>} : vector<128x16xf32>, vector<16x16xf32>, vector<128x16xf32> -> vector<128x16xf32>
    %c0_10 = arith.constant 0 : index
    %c0_11 = arith.constant 0 : index
    %11 = vector.load %arg4[%c0_10, %c0_11] : memref<1x16xf32, #tpu.memory_space<vmem>>, vector<1x16xf32>
    %12 = vector.broadcast %11 : vector<1x16xf32> to vector<128x16xf32>
    %13 = arith.addf %10, %12 : vector<128x16xf32>
    %c0_12 = arith.constant 0 : index
    %c0_13 = arith.constant 0 : index
    %14 = vector.load %arg6[%c0_12, %c0_13] : memref<16x32xf32, #tpu.memory_space<vmem>>, vector<16x32xf32>
    %cst_14 = arith.constant dense<0.000000e+00> : vector<128x32xf32>
    %15 = tpu.matmul %0, %14, %cst_14 {dimension_numbers = #tpu.dot_dimension_numbers<[1], [0], [0], [1], [0, 0, 1, 1], [], []>, precision = #tpu.contract_precision<fp32>} : vector<128x16xf32>, vector<16x32xf32>, vector<128x32xf32> -> vector<128x32xf32>
    %c0_15 = arith.constant 0 : index
    %c0_16 = arith.constant 0 : index
    %16 = vector.load %arg7[%c0_15, %c0_16] : memref<1x32xf32, #tpu.memory_space<vmem>>, vector<1x32xf32>
    %17 = vector.broadcast %16 : vector<1x32xf32> to vector<128x32xf32>
    %18 = arith.addf %15, %17 : vector<128x32xf32>
    %cst_17 = arith.constant 0.000000e+00 : f32
    %19 = vector.broadcast %cst_17 : f32 to vector<128x32xf32>
    %20 = arith.maximumf %18, %19 : vector<128x32xf32>
    %c0_18 = arith.constant 0 : index
    %c0_19 = arith.constant 0 : index
    %21 = vector.load %arg8[%c0_18, %c0_19] : memref<32x1xf32, #tpu.memory_space<vmem>>, vector<32x1xf32>
    %cst_20 = arith.constant dense<0.000000e+00> : vector<128x1xf32>
    %22 = tpu.matmul %20, %21, %cst_20 {dimension_numbers = #tpu.dot_dimension_numbers<[1], [0], [0], [1], [0, 0, 1, 1], [], []>, precision = #tpu.contract_precision<fp32>} : vector<128x32xf32>, vector<32x1xf32>, vector<128x1xf32> -> vector<128x1xf32>
    %c0_21 = arith.constant 0 : index
    %23 = memref.load %arg9[%c0_21] : memref<1xf32, #tpu.memory_space<smem>>
    %24 = vector.broadcast %23 : f32 to vector<128x1xf32>
    %25 = arith.addf %22, %24 : vector<128x1xf32>
    %cst_22 = arith.constant 0.000000e+00 : f32
    %26 = vector.broadcast %cst_22 : f32 to vector<128x1xf32>
    %27 = arith.maximumf %25, %26 : vector<128x1xf32>
    %cst_23 = arith.constant 1.000000e+00 : f32
    %28 = vector.broadcast %cst_23 : f32 to vector<128x1xf32>
    %29 = arith.addf %28, %27 : vector<128x1xf32>
    %cst_24 = arith.constant 1.000000e+00 : f32
    %30 = vector.broadcast %cst_24 : f32 to vector<128x1xf32>
    %31 = arith.divf %30, %29 : vector<128x1xf32>
    %cst_25 = arith.constant 2.000000e+00 : f32
    %32 = vector.broadcast %cst_25 : f32 to vector<128x1xf32>
    %33 = arith.mulf %32, %31 : vector<128x1xf32>
    %cst_26 = arith.constant 2.000000e+00 : f32
    %34 = vector.broadcast %cst_26 : f32 to vector<128x1xf32>
    %35 = arith.subf %34, %33 : vector<128x1xf32>
    %c0_27 = arith.constant 0 : index
    %c0_28 = arith.constant 0 : index
    %36 = vector.load %arg10[%c0_27, %c0_28] : memref<128x1xf32, #tpu.memory_space<vmem>>, vector<128x1xf32>
    tpu.vector_store %arg10[%c0_27, %c0_28], %35 {strides = array<i32>} : memref<128x1xf32, #tpu.memory_space<vmem>>, vector<128x1xf32>,
    %37 = vector.shape_cast %8 : vector<128x16xf32> to vector<8x16x16xf32>
    %38 = vector.shape_cast %13 : vector<128x16xf32> to vector<8x16x16xf32>
    "tpu.trace_start"() <{level = 10 : i32, message = "tne,tme->tnm"}> : () -> ()
    %cst_29 = arith.constant dense<0.000000e+00> : vector<8x16x16xf32>
    %39 = tpu.matmul %37, %38, %cst_29 {dimension_numbers = #tpu.dot_dimension_numbers<[2], [2], [1], [1], [0, 0, 0, 1, 1, 1], [0], [0]>, precision = #tpu.contract_precision<fp32>} : vector<8x16x16xf32>, vector<8x16x16xf32>, vector<8x16x16xf32> -> vector<8x16x16xf32>
    "tpu.trace_stop"() : () -> ()
    %cst_30 = arith.constant dense<0xFF800000> : vector<8x16xf32>
    %40 = vector.multi_reduction <maximumf>, %39, %cst_30 [2] : vector<8x16x16xf32> to vector<8x16xf32>
    %41 = vector.shape_cast %40 : vector<8x16xf32> to vector<8x16x1xf32>
    %42 = vector.broadcast %41 : vector<8x16x1xf32> to vector<8x16x16xf32>
    %43 = arith.subf %39, %42 : vector<8x16x16xf32>
    %44 = math.exp %43 : vector<8x16x16xf32>
    %cst_31 = arith.constant dense<0.000000e+00> : vector<8x16xf32>
    %45 = vector.multi_reduction <add>, %44, %cst_31 [2] : vector<8x16x16xf32> to vector<8x16xf32>
    %46 = vector.shape_cast %45 : vector<8x16xf32> to vector<8x16x1xf32>
    %cst_32 = arith.constant 2.000000e+00 : f32
    %47 = vector.broadcast %cst_32 : f32 to vector<128x1xf32>
    %48 = arith.mulf %47, %31 : vector<128x1xf32>
    %49 = vector.shape_cast %48 : vector<128x1xf32> to vector<8x16x1xf32>
    %50 = arith.divf %49, %46 : vector<8x16x1xf32>
    %51 = vector.broadcast %50 : vector<8x16x1xf32> to vector<8x16x16xf32>
    %52 = arith.mulf %44, %51 : vector<8x16x16xf32>
    %c0_33 = arith.constant 0 : index
    %c0_34 = arith.constant 0 : index
    %c0_35 = arith.constant 0 : index
    %53 = vector.load %arg11[%c0_33, %c0_34, %c0_35] : memref<8x16x16xf32, #tpu.memory_space<vmem>>, vector<8x16x16xf32>
    tpu.vector_store %arg11[%c0_33, %c0_34, %c0_35], %52 {strides = array<i32>} : memref<8x16x16xf32, #tpu.memory_space<vmem>>, vector<8x16x16xf32>,
    return
  }
}

</mosaic_0001>

<llo_original>
// kernel: tpu_custom_call.1
$region0: #{tpu_custom_call.1}
  #allocation0 [shape = 'u32[]', space=smem, size = 0x4, offset = 0x4, fixed_abs, tag = 'smem constant byte address 0x4 - core index']
  #allocation1 [shape = 'u32[72,128]{1,0:T(1,128)}', space=vmem, size = 0x9000, scoped, tag = 'internal scratch']
  #allocation2 [shape = 'f32[1]{0:T(128)S(6)}', space=smem, size = 0x200, scoped, tag = 'scoped memory for tpu_custom_call.1']
  %s0 = inlined_call_operand.vmem [shape: f32[128,16], index: 0, kind: input, shape index: {}]
  %s1 = inlined_call_operand.vmem [shape: f32[16,16], index: 1, kind: input, shape index: {}]
  %s2 = inlined_call_operand.vmem [shape: f32[1,16], index: 2, kind: input, shape index: {}]
  %s3 = inlined_call_operand.vmem [shape: f32[16,16], index: 3, kind: input, shape index: {}]
  %s4 = inlined_call_operand.vmem [shape: f32[1,16], index: 4, kind: input, shape index: {}]
  %s5 = inlined_call_operand.vmem [shape: f32[1,16], index: 5, kind: input, shape index: {}]
  %s6 = inlined_call_operand.vmem [shape: f32[16,32], index: 6, kind: input, shape index: {}]
  %s7 = inlined_call_operand.vmem [shape: f32[1,32], index: 7, kind: input, shape index: {}]
  %s8 = inlined_call_operand.vmem [shape: f32[32,1], index: 8, kind: input, shape index: {}]
  %s9 = inlined_call_operand.<no memory space> [shape: f32[1], index: 9, kind: input, shape index: {}]
  %s10 = inlined_call_operand.vmem [shape: f32[128,1], index: 10, kind: output, shape index: {0}]
  %s11 = inlined_call_operand.hbm [shape: f32[8,16,16], index: 11, kind: output, shape index: {1}]
  %12 = xla_tuple %s10, %s11
  %s13 = sld [smem:[#allocation0]]
  $region58: #{tpu_custom_call.1} parent=0
    _
  %s15 = ssub.s32 1, %s13
  %s16 = scalar_select 0, %s15, %s13
  %17 = sst [smem:[#allocation2]] %s9
  $region1: #{tpu_custom_call.1} parent=0
    #allocation3 [shape = 'u8[65536]{0}', space=vmem, size = 0x10000, scoped, tag = 'output window, operand 1, single buffered']
    #allocation4 [shape = 's32[1]{0}', space=sflag, size = 0x4, scoped, tag = 'scoped memory for tpu_custom_call.1']
    %18 = vsyncpa [#allocation4], 0
    // Predicated region
    $region2: #{tpu_custom_call.1} parent=1 // pred_check
      _
    $region3: #{tpu_custom_call.1} parent=1 // pred_check_branch
      %20 = sbr.rel (0) target = $region5
    $region4: #{tpu_custom_call.1} parent=1 // pred_region
      _
    $region5: #{tpu_custom_call.1} parent=1 // pred_fallthru
      _
    // Predicated region
    $region6: #{tpu_custom_call.1} parent=1 // pred_check
      _
    $region7: #{tpu_custom_call.1} parent=1 // pred_check_branch
      %22 = sbr.rel (0) target = $region9
    $region8: #{tpu_custom_call.1} parent=1 // pred_region
      _
    $region9: #{tpu_custom_call.1} parent=1 // pred_fallthru
      _
    // Predicated region
    $region10: #{tpu_custom_call.1} parent=1 // pred_check
      _
    $region11: #{tpu_custom_call.1} parent=1 // pred_check_branch
      %24 = sbr.rel (0) target = $region13
    $region12: #{tpu_custom_call.1} parent=1 // pred_region
      _
    $region13: #{tpu_custom_call.1} parent=1 // pred_fallthru
      _
    // Predicated region
    $region14: #{tpu_custom_call.1} parent=1 // pred_check
      _
    $region15: #{tpu_custom_call.1} parent=1 // pred_check_branch
      %26 = sbr.rel (0) target = $region17
    $region16: #{tpu_custom_call.1} parent=1 // pred_region
      _
    $region17: #{tpu_custom_call.1} parent=1 // pred_fallthru
      _
    // Predicated region
    $region18: #{tpu_custom_call.1} parent=1 // pred_check
      _
    $region19: #{tpu_custom_call.1} parent=1 // pred_check_branch
      %28 = sbr.rel (0) target = $region21
    $region20: #{tpu_custom_call.1} parent=1 // pred_region
      _
    $region21: #{tpu_custom_call.1} parent=1 // pred_fallthru
      _
    // Predicated region
    $region22: #{tpu_custom_call.1} parent=1 // pred_check
      _
    $region23: #{tpu_custom_call.1} parent=1 // pred_check_branch
      %30 = sbr.rel (0) target = $region25
    $region24: #{tpu_custom_call.1} parent=1 // pred_region
      _
    $region25: #{tpu_custom_call.1} parent=1 // pred_fallthru
      _
    // Predicated region
    $region26: #{tpu_custom_call.1} parent=1 // pred_check
      _
    $region27: #{tpu_custom_call.1} parent=1 // pred_check_branch
      %32 = sbr.rel (0) target = $region29
    $region28: #{tpu_custom_call.1} parent=1 // pred_region
      _
    $region29: #{tpu_custom_call.1} parent=1 // pred_fallthru
      _
    // Predicated region
    $region30: #{tpu_custom_call.1} parent=1 // pred_check
      _
    $region31: #{tpu_custom_call.1} parent=1 // pred_check_branch
      %34 = sbr.rel (0) target = $region33
    $region32: #{tpu_custom_call.1} parent=1 // pred_region
      _
    $region33: #{tpu_custom_call.1} parent=1 // pred_fallthru
      _
    // Predicated region
    $region34: #{tpu_custom_call.1} parent=1 // pred_check
      _
    $region35: #{tpu_custom_call.1} parent=1 // pred_check_branch
      %36 = sbr.rel (0) target = $region37
    $region36: #{tpu_custom_call.1} parent=1 // pred_region
      _
    $region37: #{tpu_custom_call.1} parent=1 // pred_fallthru
      _
    // Predicated region
    $region38: #{tpu_custom_call.1} parent=1 // pred_check
      _
    $region39: #{tpu_custom_call.1} parent=1 // pred_check_branch
      %38 = sbr.rel (0) target = $region41
    $region40: #{tpu_custom_call.1} parent=1 // pred_region
      _
    $region41: #{tpu_custom_call.1} parent=1 // pred_fallthru
      _
    %v39 = vld [vmem:[%s0] sm:$0xff]
    %v40 = vld [vmem:[%s0 + $0x8] sm:$0xff]
    %v41 = vld [vmem:[%s0 + $0x10] sm:$0xff]
    %v42 = vld [vmem:[%s0 + $0x18] sm:$0xff]
    %v43 = vld [vmem:[%s0 + $0x20] sm:$0xff]
    %v44 = vld [vmem:[%s0 + $0x28] sm:$0xff]
    %v45 = vld [vmem:[%s0 + $0x30] sm:$0xff]
    %v46 = vld [vmem:[%s0 + $0x38] sm:$0xff]
    %v47 = vld [vmem:[%s0 + $0x40] sm:$0xff]
    %v48 = vld [vmem:[%s0 + $0x48] sm:$0xff]
    %v49 = vld [vmem:[%s0 + $0x50] sm:$0xff]
    %v50 = vld [vmem:[%s0 + $0x58] sm:$0xff]
    %v51 = vld [vmem:[%s0 + $0x60] sm:$0xff]
    %v52 = vld [vmem:[%s0 + $0x68] sm:$0xff]
    %v53 = vld [vmem:[%s0 + $0x70] sm:$0xff]
    %v54 = vld [vmem:[%s0 + $0x78] sm:$0xff]
    %v55 = vld [vmem:[%s1] sm:$0xff]
    %v56 = vld [vmem:[%s1 + $0x8] sm:$0xff]
    %v57 = vld [vmem:[%s2] sm:$0x1]
    %v59 = vperm.slane %v57, 0
    %vm61 = vcmask 130048
    %v63 = vsel %vm61, %v39, 0
    %v66 = vsel %vm61, %v40, 0
    %v69 = vsel %vm61, %v41, 0
    %v72 = vsel %vm61, %v42, 0
    %v75 = vsel %vm61, %v43, 0
    %v78 = vsel %vm61, %v44, 0
    %v81 = vsel %vm61, %v45, 0
    %v84 = vsel %vm61, %v46, 0
    %v87 = vsel %vm61, %v47, 0
    %v90 = vsel %vm61, %v48, 0
    %v93 = vsel %vm61, %v49, 0
    %v96 = vsel %vm61, %v50, 0
    %v99 = vsel %vm61, %v51, 0
    %v102 = vsel %vm61, %v52, 0
    %v105 = vsel %vm61, %v53, 0
    %v108 = vsel %vm61, %v54, 0
    %110 = vmatpush.msra.mxu0 0.0
    %111 = vmatpush.msra.mxu0 0.0
    %112 = vmatpush.msra.mxu0 0.0
    %113 = vmatpush.msra.mxu0 0.0
    %114 = vmatpush.msra.mxu0 0.0
    %115 = vmatpush.msra.mxu0 0.0
    %116 = vmatpush.msra.mxu0 0.0
    %117 = vmatpush.msra.mxu0 0.0
    %118 = vmatpush.msra.mxu0 0.0
    %119 = vmatpush.msra.mxu0 0.0
    %120 = vmatpush.msra.mxu0 0.0
    %121 = vmatpush.msra.mxu0 0.0
    %122 = vmatpush.msra.mxu0 0.0
    %123 = vmatpush.msra.mxu0 0.0
    %v124 = vand.u32 %v56, 4294901760
    %125 = vmatpush.msra.mxu0 %v124
    %v126 = vand.u32 %v55, 4294901760
    %127 = vmatpush.msra.mxu0 %v126
    %v128 = vand.u32 %v63, 4294901760
    %v129 = vsub.f32 %v63, %v128
    %v130 = vand.u32 %v129, 4294901760
    %v131 = vsub.f32 %v129, %v130
    %v132 = vand.u32 %v131, 4294901760
    %133 = vmatmul.f32.gmra.mxu0 %v132
    %v134 = vpop.f32.mrf.mxu0
    %v135 = vadd.f32 %v59, %v134
    %v136 = vand.u32 %v66, 4294901760
    %v137 = vsub.f32 %v66, %v136
    %v138 = vand.u32 %v137, 4294901760
    %v139 = vsub.f32 %v137, %v138
    %v140 = vand.u32 %v139, 4294901760
    %141 = vmatmul.f32.gmra.mxu0 %v140
    %v142 = vpop.f32.mrf.mxu0
    %v143 = vadd.f32 %v59, %v142
    %v144 = vand.u32 %v69, 4294901760
    %v145 = vsub.f32 %v69, %v144
    %v146 = vand.u32 %v145, 4294901760
    %v147 = vsub.f32 %v145, %v146
    %v148 = vand.u32 %v147, 4294901760
    %149 = vmatmul.f32.gmra.mxu0 %v148
    %v150 = vpop.f32.mrf.mxu0
    %v151 = vadd.f32 %v59, %v150
    %v152 = vand.u32 %v72, 4294901760
    %v153 = vsub.f32 %v72, %v152
    %v154 = vand.u32 %v153, 4294901760
    %v155 = vsub.f32 %v153, %v154
    %v156 = vand.u32 %v155, 4294901760
    %157 = vmatmul.f32.gmra.mxu0 %v156
    %v158 = vpop.f32.mrf.mxu0
    %v159 = vadd.f32 %v59, %v158
    %v160 = vand.u32 %v75, 4294901760
    %v161 = vsub.f32 %v75, %v160
    %v162 = vand.u32 %v161, 4294901760
    %v163 = vsub.f32 %v161, %v162
    %v164 = vand.u32 %v163, 4294901760
    %165 = vmatmul.f32.gmra.mxu0 %v164
    %v166 = vpop.f32.mrf.mxu0
    %v167 = vadd.f32 %v59, %v166
    %v168 = vand.u32 %v78, 4294901760
    %v169 = vsub.f32 %v78, %v168
    %v170 = vand.u32 %v169, 4294901760
    %v171 = vsub.f32 %v169, %v170
    %v172 = vand.u32 %v171, 4294901760
    %173 = vmatmul.f32.gmra.mxu0 %v172
    %v174 = vpop.f32.mrf.mxu0
    %v175 = vadd.f32 %v59, %v174
    %v176 = vand.u32 %v81, 4294901760
    %v177 = vsub.f32 %v81, %v176
    %v178 = vand.u32 %v177, 4294901760
    %v179 = vsub.f32 %v177, %v178
    %v180 = vand.u32 %v179, 4294901760
    %181 = vmatmul.f32.gmra.mxu0 %v180
    %v182 = vpop.f32.mrf.mxu0
    %v183 = vadd.f32 %v59, %v182
    %v184 = vand.u32 %v84, 4294901760
    %v185 = vsub.f32 %v84, %v184
    %v186 = vand.u32 %v185, 4294901760
    %v187 = vsub.f32 %v185, %v186
    %v188 = vand.u32 %v187, 4294901760
    %189 = vmatmul.f32.gmra.mxu0 %v188
    %v190 = vpop.f32.mrf.mxu0
    %v191 = vadd.f32 %v59, %v190
    %v192 = vand.u32 %v87, 4294901760
    %v193 = vsub.f32 %v87, %v192
    %v194 = vand.u32 %v193, 4294901760
    %v195 = vsub.f32 %v193, %v194
    %v196 = vand.u32 %v195, 4294901760
    %197 = vmatmul.f32.gmra.mxu0 %v196
    %v198 = vpop.f32.mrf.mxu0
    %v199 = vadd.f32 %v59, %v198
    %v200 = vand.u32 %v90, 4294901760
    %v201 = vsub.f32 %v90, %v200
    %v202 = vand.u32 %v201, 4294901760
    %v203 = vsub.f32 %v201, %v202
    %v204 = vand.u32 %v203, 4294901760
    %205 = vmatmul.f32.gmra.mxu0 %v204
    %v206 = vpop.f32.mrf.mxu0
    %v207 = vadd.f32 %v59, %v206
    %v208 = vand.u32 %v93, 4294901760
    %v209 = vsub.f32 %v93, %v208
    %v210 = vand.u32 %v209, 4294901760
    %v211 = vsub.f32 %v209, %v210
    %v212 = vand.u32 %v211, 4294901760
    %213 = vmatmul.f32.gmra.mxu0 %v212
    %v214 = vpop.f32.mrf.mxu0
    %v215 = vadd.f32 %v59, %v214
    %v216 = vand.u32 %v96, 4294901760
    %v217 = vsub.f32 %v96, %v216
    %v218 = vand.u32 %v217, 4294901760
    %v219 = vsub.f32 %v217, %v218
    %v220 = vand.u32 %v219, 4294901760
    %221 = vmatmul.f32.gmra.mxu0 %v220
    %v222 = vpop.f32.mrf.mxu0
    %v223 = vadd.f32 %v59, %v222
    %v224 = vand.u32 %v99, 4294901760
    %v225 = vsub.f32 %v99, %v224
    %v226 = vand.u32 %v225, 4294901760
    %v227 = vsub.f32 %v225, %v226
    %v228 = vand.u32 %v227, 4294901760
    %229 = vmatmul.f32.gmra.mxu0 %v228
    %v230 = vpop.f32.mrf.mxu0
    %v231 = vadd.f32 %v59, %v230
    %v232 = vand.u32 %v102, 4294901760
    %v233 = vsub.f32 %v102, %v232
    %v234 = vand.u32 %v233, 4294901760
    %v235 = vsub.f32 %v233, %v234
    %v236 = vand.u32 %v235, 4294901760
    %237 = vmatmul.f32.gmra.mxu0 %v236
    %v238 = vpop.f32.mrf.mxu0
    %v239 = vadd.f32 %v59, %v238
    %v240 = vand.u32 %v105, 4294901760
    %v241 = vsub.f32 %v105, %v240
    %v242 = vand.u32 %v241, 4294901760
    %v243 = vsub.f32 %v241, %v242
    %v244 = vand.u32 %v243, 4294901760
    %245 = vmatmul.f32.gmra.mxu0 %v244
    %v246 = vpop.f32.mrf.mxu0
    %v247 = vadd.f32 %v59, %v246
    %v248 = vand.u32 %v108, 4294901760
    %v249 = vsub.f32 %v108, %v248
    %v250 = vand.u32 %v249, 4294901760
    %v251 = vsub.f32 %v249, %v250
    %v252 = vand.u32 %v251, 4294901760
    %253 = vmatmul.f32.gmra.mxu0 %v252
    %v254 = vpop.f32.mrf.mxu0
    %v255 = vadd.f32 %v59, %v254
    %256 = vdwg.mxu0
    %257 = vmatpush.msra.mxu0 0.0
    %258 = vmatpush.msra.mxu0 0.0
    %259 = vmatpush.msra.mxu0 0.0
    %260 = vmatpush.msra.mxu0 0.0
    %261 = vmatpush.msra.mxu0 0.0
    %262 = vmatpush.msra.mxu0 0.0
    %263 = vmatpush.msra.mxu0 0.0
    %264 = vmatpush.msra.mxu0 0.0
    %265 = vmatpush.msra.mxu0 0.0
    %266 = vmatpush.msra.mxu0 0.0
    %267 = vmatpush.msra.mxu0 0.0
    %268 = vmatpush.msra.mxu0 0.0
    %269 = vmatpush.msra.mxu0 0.0
    %270 = vmatpush.msra.mxu0 0.0
    %v271 = vand.u32 %v56, 4294901760
    %v272 = vsub.f32 %v56, %v271
    %v273 = vand.u32 %v272, 4294901760
    %v274 = vsub.f32 %v272, %v273
    %v275 = vand.u32 %v274, 4294901760
    %276 = vmatpush.msra.mxu0 %v275
    %v277 = vand.u32 %v55, 4294901760
    %v278 = vsub.f32 %v55, %v277
    %v279 = vand.u32 %v278, 4294901760
    %v280 = vsub.f32 %v278, %v279
    %v281 = vand.u32 %v280, 4294901760
    %282 = vmatpush.msra.mxu0 %v281
    %v283 = vand.u32 %v63, 4294901760
    %284 = vmatmul.f32.gmra.mxu0 %v283
    %v285 = vpop.f32.mrf.mxu0
    %v286 = vadd.f32 %v135, %v285
    %v287 = vand.u32 %v66, 4294901760
    %288 = vmatmul.f32.gmra.mxu0 %v287
    %v289 = vpop.f32.mrf.mxu0
    %v290 = vadd.f32 %v143, %v289
    %v291 = vand.u32 %v69, 4294901760
    %292 = vmatmul.f32.gmra.mxu0 %v291
    %v293 = vpop.f32.mrf.mxu0
    %v294 = vadd.f32 %v151, %v293
    %v295 = vand.u32 %v72, 4294901760
    %296 = vmatmul.f32.gmra.mxu0 %v295
    %v297 = vpop.f32.mrf.mxu0
    %v298 = vadd.f32 %v159, %v297
    %v299 = vand.u32 %v75, 4294901760
    %300 = vmatmul.f32.gmra.mxu0 %v299
    %v301 = vpop.f32.mrf.mxu0
    %v302 = vadd.f32 %v167, %v301
    %v303 = vand.u32 %v78, 4294901760
    %304 = vmatmul.f32.gmra.mxu0 %v303
    %v305 = vpop.f32.mrf.mxu0
    %v306 = vadd.f32 %v175, %v305
    %v307 = vand.u32 %v81, 4294901760
    %308 = vmatmul.f32.gmra.mxu0 %v307
    %v309 = vpop.f32.mrf.mxu0
    %v310 = vadd.f32 %v183, %v309
    %v311 = vand.u32 %v84, 4294901760
    %312 = vmatmul.f32.gmra.mxu0 %v311
    %v313 = vpop.f32.mrf.mxu0
    %v314 = vadd.f32 %v191, %v313
    %v315 = vand.u32 %v87, 4294901760
    %316 = vmatmul.f32.gmra.mxu0 %v315
    %v317 = vpop.f32.mrf.mxu0
    %v318 = vadd.f32 %v199, %v317
    %v319 = vand.u32 %v90, 4294901760
    %320 = vmatmul.f32.gmra.mxu0 %v319
    %v321 = vpop.f32.mrf.mxu0
    %v322 = vadd.f32 %v207, %v321
    %v323 = vand.u32 %v93, 4294901760
    %324 = vmatmul.f32.gmra.mxu0 %v323
    %v325 = vpop.f32.mrf.mxu0
    %v326 = vadd.f32 %v215, %v325
    %v327 = vand.u32 %v96, 4294901760
    %328 = vmatmul.f32.gmra.mxu0 %v327
    %v329 = vpop.f32.mrf.mxu0
    %v330 = vadd.f32 %v223, %v329
    %v331 = vand.u32 %v99, 4294901760
    %332 = vmatmul.f32.gmra.mxu0 %v331
    %v333 = vpop.f32.mrf.mxu0
    %v334 = vadd.f32 %v231, %v333
    %v335 = vand.u32 %v102, 4294901760
    %336 = vmatmul.f32.gmra.mxu0 %v335
    %v337 = vpop.f32.mrf.mxu0
    %v338 = vadd.f32 %v239, %v337
    %v339 = vand.u32 %v105, 4294901760
    %340 = vmatmul.f32.gmra.mxu0 %v339
    %v341 = vpop.f32.mrf.mxu0
    %v342 = vadd.f32 %v247, %v341
    %v343 = vand.u32 %v108, 4294901760
    %344 = vmatmul.f32.gmra.mxu0 %v343
    %v345 = vpop.f32.mrf.mxu0
    %v346 = vadd.f32 %v255, %v345
    %347 = vdwg.mxu0
    %348 = vmatpush.msra.mxu0 0.0
    %349 = vmatpush.msra.mxu0 0.0
    %350 = vmatpush.msra.mxu0 0.0
    %351 = vmatpush.msra.mxu0 0.0
    %352 = vmatpush.msra.mxu0 0.0
    %353 = vmatpush.msra.mxu0 0.0
    %354 = vmatpush.msra.mxu0 0.0
    %355 = vmatpush.msra.mxu0 0.0
    %356 = vmatpush.msra.mxu0 0.0
    %357 = vmatpush.msra.mxu0 0.0
    %358 = vmatpush.msra.mxu0 0.0
    %359 = vmatpush.msra.mxu0 0.0
    %360 = vmatpush.msra.mxu0 0.0
    %361 = vmatpush.msra.mxu0 0.0
    %v362 = vand.u32 %v56, 4294901760
    %v363 = vsub.f32 %v56, %v362
    %364 = vmatpush.msra.mxu0 %v363
    %v365 = vand.u32 %v55, 4294901760
    %v366 = vsub.f32 %v55, %v365
    %367 = vmatpush.msra.mxu0 %v366
    %v368 = vand.u32 %v63, 4294901760
    %v369 = vsub.f32 %v63, %v368
    %370 = vmatmul.f32.gmra.mxu0 %v369
    %v371 = vpop.f32.mrf.mxu0
    %v372 = vadd.f32 %v286, %v371
    %v373 = vand.u32 %v66, 4294901760
    %v374 = vsub.f32 %v66, %v373
    %375 = vmatmul.f32.gmra.mxu0 %v374
    %v376 = vpop.f32.mrf.mxu0
    %v377 = vadd.f32 %v290, %v376
    %v378 = vand.u32 %v69, 4294901760
    %v379 = vsub.f32 %v69, %v378
    %380 = vmatmul.f32.gmra.mxu0 %v379
    %v381 = vpop.f32.mrf.mxu0
    %v382 = vadd.f32 %v294, %v381
    %v383 = vand.u32 %v72, 4294901760
    %v384 = vsub.f32 %v72, %v383
    %385 = vmatmul.f32.gmra.mxu0 %v384
    %v386 = vpop.f32.mrf.mxu0
    %v387 = vadd.f32 %v298, %v386
    %v388 = vand.u32 %v75, 4294901760
    %v389 = vsub.f32 %v75, %v388
    %390 = vmatmul.f32.gmra.mxu0 %v389
    %v391 = vpop.f32.mrf.mxu0
    %v392 = vadd.f32 %v302, %v391
    %v393 = vand.u32 %v78, 4294901760
    %v394 = vsub.f32 %v78, %v393
    %395 = vmatmul.f32.gmra.mxu0 %v394
    %v396 = vpop.f32.mrf.mxu0
    %v397 = vadd.f32 %v306, %v396
    %v398 = vand.u32 %v81, 4294901760
    %v399 = vsub.f32 %v81, %v398
    %400 = vmatmul.f32.gmra.mxu0 %v399
    %v401 = vpop.f32.mrf.mxu0
    %v402 = vadd.f32 %v310, %v401
    %v403 = vand.u32 %v84, 4294901760
    %v404 = vsub.f32 %v84, %v403
    %405 = vmatmul.f32.gmra.mxu0 %v404
    %v406 = vpop.f32.mrf.mxu0
    %v407 = vadd.f32 %v314, %v406
    %v408 = vand.u32 %v87, 4294901760
    %v409 = vsub.f32 %v87, %v408
    %410 = vmatmul.f32.gmra.mxu0 %v409
    %v411 = vpop.f32.mrf.mxu0
    %v412 = vadd.f32 %v318, %v411
    %v413 = vand.u32 %v90, 4294901760
    %v414 = vsub.f32 %v90, %v413
    %415 = vmatmul.f32.gmra.mxu0 %v414
    %v416 = vpop.f32.mrf.mxu0
    %v417 = vadd.f32 %v322, %v416
    %v418 = vand.u32 %v93, 4294901760
    %v419 = vsub.f32 %v93, %v418
    %420 = vmatmul.f32.gmra.mxu0 %v419
    %v421 = vpop.f32.mrf.mxu0
    %v422 = vadd.f32 %v326, %v421
    %v423 = vand.u32 %v96, 4294901760
    %v424 = vsub.f32 %v96, %v423
    %425 = vmatmul.f32.gmra.mxu0 %v424
    %v426 = vpop.f32.mrf.mxu0
    %v427 = vadd.f32 %v330, %v426
    %v428 = vand.u32 %v99, 4294901760
    %v429 = vsub.f32 %v99, %v428
    %430 = vmatmul.f32.gmra.mxu0 %v429
    %v431 = vpop.f32.mrf.mxu0
    %v432 = vadd.f32 %v334, %v431
    %v433 = vand.u32 %v102, 4294901760
    %v434 = vsub.f32 %v102, %v433
    %435 = vmatmul.f32.gmra.mxu0 %v434
    %v436 = vpop.f32.mrf.mxu0
    %v437 = vadd.f32 %v338, %v436
    %v438 = vand.u32 %v105, 4294901760
    %v439 = vsub.f32 %v105, %v438
    %440 = vmatmul.f32.gmra.mxu0 %v439
    %v441 = vpop.f32.mrf.mxu0
    %v442 = vadd.f32 %v342, %v441
    %v443 = vand.u32 %v108, 4294901760
    %v444 = vsub.f32 %v108, %v443
    %445 = vmatmul.f32.gmra.mxu0 %v444
    %v446 = vpop.f32.mrf.mxu0
    %v447 = vadd.f32 %v346, %v446
    %448 = vdwg.mxu0
    %449 = vmatpush.msra.mxu0 0.0
    %450 = vmatpush.msra.mxu0 0.0
    %451 = vmatpush.msra.mxu0 0.0
    %452 = vmatpush.msra.mxu0 0.0
    %453 = vmatpush.msra.mxu0 0.0
    %454 = vmatpush.msra.mxu0 0.0
    %455 = vmatpush.msra.mxu0 0.0
    %456 = vmatpush.msra.mxu0 0.0
    %457 = vmatpush.msra.mxu0 0.0
    %458 = vmatpush.msra.mxu0 0.0
    %459 = vmatpush.msra.mxu0 0.0
    %460 = vmatpush.msra.mxu0 0.0
    %461 = vmatpush.msra.mxu0 0.0
    %462 = vmatpush.msra.mxu0 0.0
    %v463 = vand.u32 %v56, 4294901760
    %464 = vmatpush.msra.mxu0 %v463
    %v465 = vand.u32 %v55, 4294901760
    %466 = vmatpush.msra.mxu0 %v465
    %v467 = vand.u32 %v63, 4294901760
    %v468 = vsub.f32 %v63, %v467
    %v469 = vand.u32 %v468, 4294901760
    %470 = vmatmul.f32.gmra.mxu0 %v469
    %v471 = vpop.f32.mrf.mxu0
    %v472 = vadd.f32 %v372, %v471
    %v473 = vand.u32 %v66, 4294901760
    %v474 = vsub.f32 %v66, %v473
    %v475 = vand.u32 %v474, 4294901760
    %476 = vmatmul.f32.gmra.mxu0 %v475
    %v477 = vpop.f32.mrf.mxu0
    %v478 = vadd.f32 %v377, %v477
    %v479 = vand.u32 %v69, 4294901760
    %v480 = vsub.f32 %v69, %v479
    %v481 = vand.u32 %v480, 4294901760
    %482 = vmatmul.f32.gmra.mxu0 %v481
    %v483 = vpop.f32.mrf.mxu0
    %v484 = vadd.f32 %v382, %v483
    %v485 = vand.u32 %v72, 4294901760
    %v486 = vsub.f32 %v72, %v485
    %v487 = vand.u32 %v486, 4294901760
    %488 = vmatmul.f32.gmra.mxu0 %v487
    %v489 = vpop.f32.mrf.mxu0
    %v490 = vadd.f32 %v387, %v489
    %v491 = vand.u32 %v75, 4294901760
    %v492 = vsub.f32 %v75, %v491
    %v493 = vand.u32 %v492, 4294901760
    %494 = vmatmul.f32.gmra.mxu0 %v493
    %v495 = vpop.f32.mrf.mxu0
    %v496 = vadd.f32 %v392, %v495
    %v497 = vand.u32 %v78, 4294901760
    %v498 = vsub.f32 %v78, %v497
    %v499 = vand.u32 %v498, 4294901760
    %500 = vmatmul.f32.gmra.mxu0 %v499
    %v501 = vpop.f32.mrf.mxu0
    %v502 = vadd.f32 %v397, %v501
    %v503 = vand.u32 %v81, 4294901760
    %v504 = vsub.f32 %v81, %v503
    %v505 = vand.u32 %v504, 4294901760
    %506 = vmatmul.f32.gmra.mxu0 %v505
    %v507 = vpop.f32.mrf.mxu0
    %v508 = vadd.f32 %v402, %v507
    %v509 = vand.u32 %v84, 4294901760
    %v510 = vsub.f32 %v84, %v509
    %v511 = vand.u32 %v510, 4294901760
    %512 = vmatmul.f32.gmra.mxu0 %v511
    %v513 = vpop.f32.mrf.mxu0
    %v514 = vadd.f32 %v407, %v513
    %v515 = vand.u32 %v87, 4294901760
    %v516 = vsub.f32 %v87, %v515
    %v517 = vand.u32 %v516, 4294901760
    %518 = vmatmul.f32.gmra.mxu0 %v517
    %v519 = vpop.f32.mrf.mxu0
    %v520 = vadd.f32 %v412, %v519
    %v521 = vand.u32 %v90, 4294901760
    %v522 = vsub.f32 %v90, %v521
    %v523 = vand.u32 %v522, 4294901760
    %524 = vmatmul.f32.gmra.mxu0 %v523
    %v525 = vpop.f32.mrf.mxu0
    %v526 = vadd.f32 %v417, %v525
    %v527 = vand.u32 %v93, 4294901760
    %v528 = vsub.f32 %v93, %v527
    %v529 = vand.u32 %v528, 4294901760
    %530 = vmatmul.f32.gmra.mxu0 %v529
    %v531 = vpop.f32.mrf.mxu0
    %v532 = vadd.f32 %v422, %v531
    %v533 = vand.u32 %v96, 4294901760
    %v534 = vsub.f32 %v96, %v533
    %v535 = vand.u32 %v534, 4294901760
    %536 = vmatmul.f32.gmra.mxu0 %v535
    %v537 = vpop.f32.mrf.mxu0
    %v538 = vadd.f32 %v427, %v537
    %v539 = vand.u32 %v99, 4294901760
    %v540 = vsub.f32 %v99, %v539
    %v541 = vand.u32 %v540, 4294901760
    %542 = vmatmul.f32.gmra.mxu0 %v541
    %v543 = vpop.f32.mrf.mxu0
    %v544 = vadd.f32 %v432, %v543
    %v545 = vand.u32 %v102, 4294901760
    %v546 = vsub.f32 %v102, %v545
    %v547 = vand.u32 %v546, 4294901760
    %548 = vmatmul.f32.gmra.mxu0 %v547
    %v549 = vpop.f32.mrf.mxu0
    %v550 = vadd.f32 %v437, %v549
    %v551 = vand.u32 %v105, 4294901760
    %v552 = vsub.f32 %v105, %v551
    %v553 = vand.u32 %v552, 4294901760
    %554 = vmatmul.f32.gmra.mxu0 %v553
    %v555 = vpop.f32.mrf.mxu0
    %v556 = vadd.f32 %v442, %v555
    %v557 = vand.u32 %v108, 4294901760
    %v558 = vsub.f32 %v108, %v557
    %v559 = vand.u32 %v558, 4294901760
    %560 = vmatmul.f32.gmra.mxu0 %v559
    %v561 = vpop.f32.mrf.mxu0
    %v562 = vadd.f32 %v447, %v561
    %563 = vdwg.mxu0
    %564 = vmatpush.msra.mxu0 0.0
    %565 = vmatpush.msra.mxu0 0.0
    %566 = vmatpush.msra.mxu0 0.0
    %567 = vmatpush.msra.mxu0 0.0
    %568 = vmatpush.msra.mxu0 0.0
    %569 = vmatpush.msra.mxu0 0.0
    %570 = vmatpush.msra.mxu0 0.0
    %571 = vmatpush.msra.mxu0 0.0
    %572 = vmatpush.msra.mxu0 0.0
    %573 = vmatpush.msra.mxu0 0.0
    %574 = vmatpush.msra.mxu0 0.0
    %575 = vmatpush.msra.mxu0 0.0
    %576 = vmatpush.msra.mxu0 0.0
    %577 = vmatpush.msra.mxu0 0.0
    %v578 = vand.u32 %v56, 4294901760
    %v579 = vsub.f32 %v56, %v578
    %v580 = vand.u32 %v579, 4294901760
    %581 = vmatpush.msra.mxu0 %v580
    %v582 = vand.u32 %v55, 4294901760
    %v583 = vsub.f32 %v55, %v582
    %v584 = vand.u32 %v583, 4294901760
    %585 = vmatpush.msra.mxu0 %v584
    %v586 = vand.u32 %v63, 4294901760
    %587 = vmatmul.f32.gmra.mxu0 %v586
    %v588 = vpop.f32.mrf.mxu0
    %v589 = vadd.f32 %v472, %v588
    %v590 = vand.u32 %v66, 4294901760
    %591 = vmatmul.f32.gmra.mxu0 %v590
    %v592 = vpop.f32.mrf.mxu0
    %v593 = vadd.f32 %v478, %v592
    %v594 = vand.u32 %v69, 4294901760
    %595 = vmatmul.f32.gmra.mxu0 %v594
    %v596 = vpop.f32.mrf.mxu0
    %v597 = vadd.f32 %v484, %v596
    %v598 = vand.u32 %v72, 4294901760
    %599 = vmatmul.f32.gmra.mxu0 %v598
    %v600 = vpop.f32.mrf.mxu0
    %v601 = vadd.f32 %v490, %v600
    %v602 = vand.u32 %v75, 4294901760
    %603 = vmatmul.f32.gmra.mxu0 %v602
    %v604 = vpop.f32.mrf.mxu0
    %v605 = vadd.f32 %v496, %v604
    %v606 = vand.u32 %v78, 4294901760
    %607 = vmatmul.f32.gmra.mxu0 %v606
    %v608 = vpop.f32.mrf.mxu0
    %v609 = vadd.f32 %v502, %v608
    %v610 = vand.u32 %v81, 4294901760
    %611 = vmatmul.f32.gmra.mxu0 %v610
    %v612 = vpop.f32.mrf.mxu0
    %v613 = vadd.f32 %v508, %v612
    %v614 = vand.u32 %v84, 4294901760
    %615 = vmatmul.f32.gmra.mxu0 %v614
    %v616 = vpop.f32.mrf.mxu0
    %v617 = vadd.f32 %v514, %v616
    %v618 = vand.u32 %v87, 4294901760
    %619 = vmatmul.f32.gmra.mxu0 %v618
    %v620 = vpop.f32.mrf.mxu0
    %v621 = vadd.f32 %v520, %v620
    %v622 = vand.u32 %v90, 4294901760
    %623 = vmatmul.f32.gmra.mxu0 %v622
    %v624 = vpop.f32.mrf.mxu0
    %v625 = vadd.f32 %v526, %v624
    %v626 = vand.u32 %v93, 4294901760
    %627 = vmatmul.f32.gmra.mxu0 %v626
    %v628 = vpop.f32.mrf.mxu0
    %v629 = vadd.f32 %v532, %v628
    %v630 = vand.u32 %v96, 4294901760
    %631 = vmatmul.f32.gmra.mxu0 %v630
    %v632 = vpop.f32.mrf.mxu0
    %v633 = vadd.f32 %v538, %v632
    %v634 = vand.u32 %v99, 4294901760
    %635 = vmatmul.f32.gmra.mxu0 %v634
    %v636 = vpop.f32.mrf.mxu0
    %v637 = vadd.f32 %v544, %v636
    %v638 = vand.u32 %v102, 4294901760
    %639 = vmatmul.f32.gmra.mxu0 %v638
    %v640 = vpop.f32.mrf.mxu0
    %v641 = vadd.f32 %v550, %v640
    %v642 = vand.u32 %v105, 4294901760
    %643 = vmatmul.f32.gmra.mxu0 %v642
    %v644 = vpop.f32.mrf.mxu0
    %v645 = vadd.f32 %v556, %v644
    %v646 = vand.u32 %v108, 4294901760
    %647 = vmatmul.f32.gmra.mxu0 %v646
    %v648 = vpop.f32.mrf.mxu0
    %v649 = vadd.f32 %v562, %v648
    %650 = vdwg.mxu0
    %651 = vmatpush.msra.mxu0 0.0
    %652 = vmatpush.msra.mxu0 0.0
    %653 = vmatpush.msra.mxu0 0.0
    %654 = vmatpush.msra.mxu0 0.0
    %655 = vmatpush.msra.mxu0 0.0
    %656 = vmatpush.msra.mxu0 0.0
    %657 = vmatpush.msra.mxu0 0.0
    %658 = vmatpush.msra.mxu0 0.0
    %659 = vmatpush.msra.mxu0 0.0
    %660 = vmatpush.msra.mxu0 0.0
    %661 = vmatpush.msra.mxu0 0.0
    %662 = vmatpush.msra.mxu0 0.0
    %663 = vmatpush.msra.mxu0 0.0
    %664 = vmatpush.msra.mxu0 0.0
    %v665 = vand.u32 %v56, 4294901760
    %666 = vmatpush.msra.mxu0 %v665
    %v667 = vand.u32 %v55, 4294901760
    %668 = vmatpush.msra.mxu0 %v667
    %v669 = vand.u32 %v63, 4294901760
    %670 = vmatmul.f32.gmra.mxu0 %v669
    %v671 = vpop.f32.mrf.mxu0
    %v672 = vadd.f32 %v589, %v671
    %v673 = vand.u32 %v66, 4294901760
    %674 = vmatmul.f32.gmra.mxu0 %v673
    %v675 = vpop.f32.mrf.mxu0
    %v676 = vadd.f32 %v593, %v675
    %v677 = vand.u32 %v69, 4294901760
    %678 = vmatmul.f32.gmra.mxu0 %v677
    %v679 = vpop.f32.mrf.mxu0
    %v680 = vadd.f32 %v597, %v679
    %v681 = vand.u32 %v72, 4294901760
    %682 = vmatmul.f32.gmra.mxu0 %v681
    %v683 = vpop.f32.mrf.mxu0
    %v684 = vadd.f32 %v601, %v683
    %v685 = vand.u32 %v75, 4294901760
    %686 = vmatmul.f32.gmra.mxu0 %v685
    %v687 = vpop.f32.mrf.mxu0
    %v688 = vadd.f32 %v605, %v687
    %v689 = vand.u32 %v78, 4294901760
    %690 = vmatmul.f32.gmra.mxu0 %v689
    %v691 = vpop.f32.mrf.mxu0
    %v692 = vadd.f32 %v609, %v691
    %v693 = vand.u32 %v81, 4294901760
    %694 = vmatmul.f32.gmra.mxu0 %v693
    %v695 = vpop.f32.mrf.mxu0
    %v696 = vadd.f32 %v613, %v695
    %v697 = vand.u32 %v84, 4294901760
    %698 = vmatmul.f32.gmra.mxu0 %v697
    %v699 = vpop.f32.mrf.mxu0
    %v700 = vadd.f32 %v617, %v699
    %v701 = vand.u32 %v87, 4294901760
    %702 = vmatmul.f32.gmra.mxu0 %v701
    %v703 = vpop.f32.mrf.mxu0
    %v704 = vadd.f32 %v621, %v703
    %v705 = vand.u32 %v90, 4294901760
    %706 = vmatmul.f32.gmra.mxu0 %v705
    %v707 = vpop.f32.mrf.mxu0
    %v708 = vadd.f32 %v625, %v707
    %v709 = vand.u32 %v93, 4294901760
    %710 = vmatmul.f32.gmra.mxu0 %v709
    %v711 = vpop.f32.mrf.mxu0
    %v712 = vadd.f32 %v629, %v711
    %v713 = vand.u32 %v96, 4294901760
    %714 = vmatmul.f32.gmra.mxu0 %v713
    %v715 = vpop.f32.mrf.mxu0
    %v716 = vadd.f32 %v633, %v715
    %v717 = vand.u32 %v99, 4294901760
    %718 = vmatmul.f32.gmra.mxu0 %v717
    %v719 = vpop.f32.mrf.mxu0
    %v720 = vadd.f32 %v637, %v719
    %v721 = vand.u32 %v102, 4294901760
    %722 = vmatmul.f32.gmra.mxu0 %v721
    %v723 = vpop.f32.mrf.mxu0
    %v724 = vadd.f32 %v641, %v723
    %v725 = vand.u32 %v105, 4294901760
    %726 = vmatmul.f32.gmra.mxu0 %v725
    %v727 = vpop.f32.mrf.mxu0
    %v728 = vadd.f32 %v645, %v727
    %v729 = vand.u32 %v108, 4294901760
    %730 = vmatmul.f32.gmra.mxu0 %v729
    %v731 = vpop.f32.mrf.mxu0
    %v732 = vadd.f32 %v649, %v731
    %733 = vdwg.mxu0
    %v734 = vld [vmem:[%s5] sm:$0x1]
    %v736 = vperm.slane %v734, 0
    %v738 = vmul.f32 %v672, %v736
    %v739 = vmul.f32 %v676, %v736
    %v740 = vmul.f32 %v680, %v736
    %v741 = vmul.f32 %v684, %v736
    %v742 = vmul.f32 %v688, %v736
    %v743 = vmul.f32 %v692, %v736
    %v744 = vmul.f32 %v696, %v736
    %v745 = vmul.f32 %v700, %v736
    %v746 = vmul.f32 %v704, %v736
    %v747 = vmul.f32 %v708, %v736
    %v748 = vmul.f32 %v712, %v736
    %v749 = vmul.f32 %v716, %v736
    %v750 = vmul.f32 %v720, %v736
    %v751 = vmul.f32 %v724, %v736
    %v752 = vmul.f32 %v728, %v736
    %v753 = vmul.f32 %v732, %v736
    %v754 = vld [vmem:[%s3] sm:$0xff]
    %v755 = vld [vmem:[%s3 + $0x8] sm:$0xff]
    %v756 = vld [vmem:[%s4] sm:$0x1]
    %v758 = vperm.slane %v756, 0
    %760 = vmatpush.msra.mxu0 0.0
    %761 = vmatpush.msra.mxu0 0.0
    %762 = vmatpush.msra.mxu0 0.0
    %763 = vmatpush.msra.mxu0 0.0
    %764 = vmatpush.msra.mxu0 0.0
    %765 = vmatpush.msra.mxu0 0.0
    %766 = vmatpush.msra.mxu0 0.0
    %767 = vmatpush.msra.mxu0 0.0
    %768 = vmatpush.msra.mxu0 0.0
    %769 = vmatpush.msra.mxu0 0.0
    %770 = vmatpush.msra.mxu0 0.0
    %771 = vmatpush.msra.mxu0 0.0
    %772 = vmatpush.msra.mxu0 0.0
    %773 = vmatpush.msra.mxu0 0.0
    %v774 = vand.u32 %v755, 4294901760
    %775 = vmatpush.msra.mxu0 %v774
    %v776 = vand.u32 %v754, 4294901760
    %777 = vmatpush.msra.mxu0 %v776
    %v778 = vand.u32 %v63, 4294901760
    %v779 = vsub.f32 %v63, %v778
    %v780 = vand.u32 %v779, 4294901760
    %v781 = vsub.f32 %v779, %v780
    %v782 = vand.u32 %v781, 4294901760
    %783 = vmatmul.f32.gmra.mxu0 %v782
    %v784 = vpop.f32.mrf.mxu0
    %v785 = vadd.f32 %v758, %v784
    %v786 = vand.u32 %v66, 4294901760
    %v787 = vsub.f32 %v66, %v786
    %v788 = vand.u32 %v787, 4294901760
    %v789 = vsub.f32 %v787, %v788
    %v790 = vand.u32 %v789, 4294901760
    %791 = vmatmul.f32.gmra.mxu0 %v790
    %v792 = vpop.f32.mrf.mxu0
    %v793 = vadd.f32 %v758, %v792
    %v794 = vand.u32 %v69, 4294901760
    %v795 = vsub.f32 %v69, %v794
    %v796 = vand.u32 %v795, 4294901760
    %v797 = vsub.f32 %v795, %v796
    %v798 = vand.u32 %v797, 4294901760
    %799 = vmatmul.f32.gmra.mxu0 %v798
    %v800 = vpop.f32.mrf.mxu0
    %v801 = vadd.f32 %v758, %v800
    %v802 = vand.u32 %v72, 4294901760
    %v803 = vsub.f32 %v72, %v802
    %v804 = vand.u32 %v803, 4294901760
    %v805 = vsub.f32 %v803, %v804
    %v806 = vand.u32 %v805, 4294901760
    %807 = vmatmul.f32.gmra.mxu0 %v806
    %v808 = vpop.f32.mrf.mxu0
    %v809 = vadd.f32 %v758, %v808
    %v810 = vand.u32 %v75, 4294901760
    %v811 = vsub.f32 %v75, %v810
    %v812 = vand.u32 %v811, 4294901760
    %v813 = vsub.f32 %v811, %v812
    %v814 = vand.u32 %v813, 4294901760
    %815 = vmatmul.f32.gmra.mxu0 %v814
    %v816 = vpop.f32.mrf.mxu0
    %v817 = vadd.f32 %v758, %v816
    %v818 = vand.u32 %v78, 4294901760
    %v819 = vsub.f32 %v78, %v818
    %v820 = vand.u32 %v819, 4294901760
    %v821 = vsub.f32 %v819, %v820
    %v822 = vand.u32 %v821, 4294901760
    %823 = vmatmul.f32.gmra.mxu0 %v822
    %v824 = vpop.f32.mrf.mxu0
    %v825 = vadd.f32 %v758, %v824
    %v826 = vand.u32 %v81, 4294901760
    %v827 = vsub.f32 %v81, %v826
    %v828 = vand.u32 %v827, 4294901760
    %v829 = vsub.f32 %v827, %v828
    %v830 = vand.u32 %v829, 4294901760
    %831 = vmatmul.f32.gmra.mxu0 %v830
    %v832 = vpop.f32.mrf.mxu0
    %v833 = vadd.f32 %v758, %v832
    %v834 = vand.u32 %v84, 4294901760
    %v835 = vsub.f32 %v84, %v834
    %v836 = vand.u32 %v835, 4294901760
    %v837 = vsub.f32 %v835, %v836
    %v838 = vand.u32 %v837, 4294901760
    %839 = vmatmul.f32.gmra.mxu0 %v838
    %v840 = vpop.f32.mrf.mxu0
    %v841 = vadd.f32 %v758, %v840
    %v842 = vand.u32 %v87, 4294901760
    %v843 = vsub.f32 %v87, %v842
    %v844 = vand.u32 %v843, 4294901760
    %v845 = vsub.f32 %v843, %v844
    %v846 = vand.u32 %v845, 4294901760
    %847 = vmatmul.f32.gmra.mxu0 %v846
    %v848 = vpop.f32.mrf.mxu0
    %v849 = vadd.f32 %v758, %v848
    %v850 = vand.u32 %v90, 4294901760
    %v851 = vsub.f32 %v90, %v850
    %v852 = vand.u32 %v851, 4294901760
    %v853 = vsub.f32 %v851, %v852
    %v854 = vand.u32 %v853, 4294901760
    %855 = vmatmul.f32.gmra.mxu0 %v854
    %v856 = vpop.f32.mrf.mxu0
    %v857 = vadd.f32 %v758, %v856
    %v858 = vand.u32 %v93, 4294901760
    %v859 = vsub.f32 %v93, %v858
    %v860 = vand.u32 %v859, 4294901760
    %v861 = vsub.f32 %v859, %v860
    %v862 = vand.u32 %v861, 4294901760
    %863 = vmatmul.f32.gmra.mxu0 %v862
    %v864 = vpop.f32.mrf.mxu0
    %v865 = vadd.f32 %v758, %v864
    %v866 = vand.u32 %v96, 4294901760
    %v867 = vsub.f32 %v96, %v866
    %v868 = vand.u32 %v867, 4294901760
    %v869 = vsub.f32 %v867, %v868
    %v870 = vand.u32 %v869, 4294901760
    %871 = vmatmul.f32.gmra.mxu0 %v870
    %v872 = vpop.f32.mrf.mxu0
    %v873 = vadd.f32 %v758, %v872
    %v874 = vand.u32 %v99, 4294901760
    %v875 = vsub.f32 %v99, %v874
    %v876 = vand.u32 %v875, 4294901760
    %v877 = vsub.f32 %v875, %v876
    %v878 = vand.u32 %v877, 4294901760
    %879 = vmatmul.f32.gmra.mxu0 %v878
    %v880 = vpop.f32.mrf.mxu0
    %v881 = vadd.f32 %v758, %v880
    %v882 = vand.u32 %v102, 4294901760
    %v883 = vsub.f32 %v102, %v882
    %v884 = vand.u32 %v883, 4294901760
    %v885 = vsub.f32 %v883, %v884
    %v886 = vand.u32 %v885, 4294901760
    %887 = vmatmul.f32.gmra.mxu0 %v886
    %v888 = vpop.f32.mrf.mxu0
    %v889 = vadd.f32 %v758, %v888
    %v890 = vand.u32 %v105, 4294901760
    %v891 = vsub.f32 %v105, %v890
    %v892 = vand.u32 %v891, 4294901760
    %v893 = vsub.f32 %v891, %v892
    %v894 = vand.u32 %v893, 4294901760
    %895 = vmatmul.f32.gmra.mxu0 %v894
    %v896 = vpop.f32.mrf.mxu0
    %v897 = vadd.f32 %v758, %v896
    %v898 = vand.u32 %v108, 4294901760
    %v899 = vsub.f32 %v108, %v898
    %v900 = vand.u32 %v899, 4294901760
    %v901 = vsub.f32 %v899, %v900
    %v902 = vand.u32 %v901, 4294901760
    %903 = vmatmul.f32.gmra.mxu0 %v902
    %v904 = vpop.f32.mrf.mxu0
    %v905 = vadd.f32 %v758, %v904
    %906 = vdwg.mxu0
    %907 = vmatpush.msra.mxu0 0.0
    %908 = vmatpush.msra.mxu0 0.0
    %909 = vmatpush.msra.mxu0 0.0
    %910 = vmatpush.msra.mxu0 0.0
    %911 = vmatpush.msra.mxu0 0.0
    %912 = vmatpush.msra.mxu0 0.0
    %913 = vmatpush.msra.mxu0 0.0
    %914 = vmatpush.msra.mxu0 0.0
    %915 = vmatpush.msra.mxu0 0.0
    %916 = vmatpush.msra.mxu0 0.0
    %917 = vmatpush.msra.mxu0 0.0
    %918 = vmatpush.msra.mxu0 0.0
    %919 = vmatpush.msra.mxu0 0.0
    %920 = vmatpush.msra.mxu0 0.0
    %v921 = vand.u32 %v755, 4294901760
    %v922 = vsub.f32 %v755, %v921
    %v923 = vand.u32 %v922, 4294901760
    %v924 = vsub.f32 %v922, %v923
    %v925 = vand.u32 %v924, 4294901760
    %926 = vmatpush.msra.mxu0 %v925
    %v927 = vand.u32 %v754, 4294901760
    %v928 = vsub.f32 %v754, %v927
    %v929 = vand.u32 %v928, 4294901760
    %v930 = vsub.f32 %v928, %v929
    %v931 = vand.u32 %v930, 4294901760
    %932 = vmatpush.msra.mxu0 %v931
    %v933 = vand.u32 %v63, 4294901760
    %934 = vmatmul.f32.gmra.mxu0 %v933
    %v935 = vpop.f32.mrf.mxu0
    %v936 = vadd.f32 %v785, %v935
    %v937 = vand.u32 %v66, 4294901760
    %938 = vmatmul.f32.gmra.mxu0 %v937
    %v939 = vpop.f32.mrf.mxu0
    %v940 = vadd.f32 %v793, %v939
    %v941 = vand.u32 %v69, 4294901760
    %942 = vmatmul.f32.gmra.mxu0 %v941
    %v943 = vpop.f32.mrf.mxu0
    %v944 = vadd.f32 %v801, %v943
    %v945 = vand.u32 %v72, 4294901760
    %946 = vmatmul.f32.gmra.mxu0 %v945
    %v947 = vpop.f32.mrf.mxu0
    %v948 = vadd.f32 %v809, %v947
    %v949 = vand.u32 %v75, 4294901760
    %950 = vmatmul.f32.gmra.mxu0 %v949
    %v951 = vpop.f32.mrf.mxu0
    %v952 = vadd.f32 %v817, %v951
    %v953 = vand.u32 %v78, 4294901760
    %954 = vmatmul.f32.gmra.mxu0 %v953
    %v955 = vpop.f32.mrf.mxu0
    %v956 = vadd.f32 %v825, %v955
    %v957 = vand.u32 %v81, 4294901760
    %958 = vmatmul.f32.gmra.mxu0 %v957
    %v959 = vpop.f32.mrf.mxu0
    %v960 = vadd.f32 %v833, %v959
    %v961 = vand.u32 %v84, 4294901760
    %962 = vmatmul.f32.gmra.mxu0 %v961
    %v963 = vpop.f32.mrf.mxu0
    %v964 = vadd.f32 %v841, %v963
    %v965 = vand.u32 %v87, 4294901760
    %966 = vmatmul.f32.gmra.mxu0 %v965
    %v967 = vpop.f32.mrf.mxu0
    %v968 = vadd.f32 %v849, %v967
    %v969 = vand.u32 %v90, 4294901760
    %970 = vmatmul.f32.gmra.mxu0 %v969
    %v971 = vpop.f32.mrf.mxu0
    %v972 = vadd.f32 %v857, %v971
    %v973 = vand.u32 %v93, 4294901760
    %974 = vmatmul.f32.gmra.mxu0 %v973
    %v975 = vpop.f32.mrf.mxu0
    %v976 = vadd.f32 %v865, %v975
    %v977 = vand.u32 %v96, 4294901760
    %978 = vmatmul.f32.gmra.mxu0 %v977
    %v979 = vpop.f32.mrf.mxu0
    %v980 = vadd.f32 %v873, %v979
    %v981 = vand.u32 %v99, 4294901760
    %982 = vmatmul.f32.gmra.mxu0 %v981
    %v983 = vpop.f32.mrf.mxu0
    %v984 = vadd.f32 %v881, %v983
    %v985 = vand.u32 %v102, 4294901760
    %986 = vmatmul.f32.gmra.mxu0 %v985
    %v987 = vpop.f32.mrf.mxu0
    %v988 = vadd.f32 %v889, %v987
    %v989 = vand.u32 %v105, 4294901760
    %990 = vmatmul.f32.gmra.mxu0 %v989
    %v991 = vpop.f32.mrf.mxu0
    %v992 = vadd.f32 %v897, %v991
    %v993 = vand.u32 %v108, 4294901760
    %994 = vmatmul.f32.gmra.mxu0 %v993
    %v995 = vpop.f32.mrf.mxu0
    %v996 = vadd.f32 %v905, %v995
    %997 = vdwg.mxu0
    %998 = vmatpush.msra.mxu0 0.0
    %999 = vmatpush.msra.mxu0 0.0
    %1000 = vmatpush.msra.mxu0 0.0
    %1001 = vmatpush.msra.mxu0 0.0
    %1002 = vmatpush.msra.mxu0 0.0
    %1003 = vmatpush.msra.mxu0 0.0
    %1004 = vmatpush.msra.mxu0 0.0
    %1005 = vmatpush.msra.mxu0 0.0
    %1006 = vmatpush.msra.mxu0 0.0
    %1007 = vmatpush.msra.mxu0 0.0
    %1008 = vmatpush.msra.mxu0 0.0
    %1009 = vmatpush.msra.mxu0 0.0
    %1010 = vmatpush.msra.mxu0 0.0
    %1011 = vmatpush.msra.mxu0 0.0
    %v1012 = vand.u32 %v755, 4294901760
    %v1013 = vsub.f32 %v755, %v1012
    %1014 = vmatpush.msra.mxu0 %v1013
    %v1015 = vand.u32 %v754, 4294901760
    %v1016 = vsub.f32 %v754, %v1015
    %1017 = vmatpush.msra.mxu0 %v1016
    %v1018 = vand.u32 %v63, 4294901760
    %v1019 = vsub.f32 %v63, %v1018
    %1020 = vmatmul.f32.gmra.mxu0 %v1019
    %v1021 = vpop.f32.mrf.mxu0
    %v1022 = vadd.f32 %v936, %v1021
    %v1023 = vand.u32 %v66, 4294901760
    %v1024 = vsub.f32 %v66, %v1023
    %1025 = vmatmul.f32.gmra.mxu0 %v1024
    %v1026 = vpop.f32.mrf.mxu0
    %v1027 = vadd.f32 %v940, %v1026
    %v1028 = vand.u32 %v69, 4294901760
    %v1029 = vsub.f32 %v69, %v1028
    %1030 = vmatmul.f32.gmra.mxu0 %v1029
    %v1031 = vpop.f32.mrf.mxu0
    %v1032 = vadd.f32 %v944, %v1031
    %v1033 = vand.u32 %v72, 4294901760
    %v1034 = vsub.f32 %v72, %v1033
    %1035 = vmatmul.f32.gmra.mxu0 %v1034
    %v1036 = vpop.f32.mrf.mxu0
    %v1037 = vadd.f32 %v948, %v1036
    %v1038 = vand.u32 %v75, 4294901760
    %v1039 = vsub.f32 %v75, %v1038
    %1040 = vmatmul.f32.gmra.mxu0 %v1039
    %v1041 = vpop.f32.mrf.mxu0
    %v1042 = vadd.f32 %v952, %v1041
    %v1043 = vand.u32 %v78, 4294901760
    %v1044 = vsub.f32 %v78, %v1043
    %1045 = vmatmul.f32.gmra.mxu0 %v1044
    %v1046 = vpop.f32.mrf.mxu0
    %v1047 = vadd.f32 %v956, %v1046
    %v1048 = vand.u32 %v81, 4294901760
    %v1049 = vsub.f32 %v81, %v1048
    %1050 = vmatmul.f32.gmra.mxu0 %v1049
    %v1051 = vpop.f32.mrf.mxu0
    %v1052 = vadd.f32 %v960, %v1051
    %v1053 = vand.u32 %v84, 4294901760
    %v1054 = vsub.f32 %v84, %v1053
    %1055 = vmatmul.f32.gmra.mxu0 %v1054
    %v1056 = vpop.f32.mrf.mxu0
    %v1057 = vadd.f32 %v964, %v1056
    %v1058 = vand.u32 %v87, 4294901760
    %v1059 = vsub.f32 %v87, %v1058
    %1060 = vmatmul.f32.gmra.mxu0 %v1059
    %v1061 = vpop.f32.mrf.mxu0
    %v1062 = vadd.f32 %v968, %v1061
    %v1063 = vand.u32 %v90, 4294901760
    %v1064 = vsub.f32 %v90, %v1063
    %1065 = vmatmul.f32.gmra.mxu0 %v1064
    %v1066 = vpop.f32.mrf.mxu0
    %v1067 = vadd.f32 %v972, %v1066
    %v1068 = vand.u32 %v93, 4294901760
    %v1069 = vsub.f32 %v93, %v1068
    %1070 = vmatmul.f32.gmra.mxu0 %v1069
    %v1071 = vpop.f32.mrf.mxu0
    %v1072 = vadd.f32 %v976, %v1071
    %v1073 = vand.u32 %v96, 4294901760
    %v1074 = vsub.f32 %v96, %v1073
    %1075 = vmatmul.f32.gmra.mxu0 %v1074
    %v1076 = vpop.f32.mrf.mxu0
    %v1077 = vadd.f32 %v980, %v1076
    %v1078 = vand.u32 %v99, 4294901760
    %v1079 = vsub.f32 %v99, %v1078
    %1080 = vmatmul.f32.gmra.mxu0 %v1079
    %v1081 = vpop.f32.mrf.mxu0
    %v1082 = vadd.f32 %v984, %v1081
    %v1083 = vand.u32 %v102, 4294901760
    %v1084 = vsub.f32 %v102, %v1083
    %1085 = vmatmul.f32.gmra.mxu0 %v1084
    %v1086 = vpop.f32.mrf.mxu0
    %v1087 = vadd.f32 %v988, %v1086
    %v1088 = vand.u32 %v105, 4294901760
    %v1089 = vsub.f32 %v105, %v1088
    %1090 = vmatmul.f32.gmra.mxu0 %v1089
    %v1091 = vpop.f32.mrf.mxu0
    %v1092 = vadd.f32 %v992, %v1091
    %v1093 = vand.u32 %v108, 4294901760
    %v1094 = vsub.f32 %v108, %v1093
    %1095 = vmatmul.f32.gmra.mxu0 %v1094
    %v1096 = vpop.f32.mrf.mxu0
    %v1097 = vadd.f32 %v996, %v1096
    %1098 = vdwg.mxu0
    %1099 = vmatpush.msra.mxu0 0.0
    %1100 = vmatpush.msra.mxu0 0.0
    %1101 = vmatpush.msra.mxu0 0.0
    %1102 = vmatpush.msra.mxu0 0.0
    %1103 = vmatpush.msra.mxu0 0.0
    %1104 = vmatpush.msra.mxu0 0.0
    %1105 = vmatpush.msra.mxu0 0.0
    %1106 = vmatpush.msra.mxu0 0.0
    %1107 = vmatpush.msra.mxu0 0.0
    %1108 = vmatpush.msra.mxu0 0.0
    %1109 = vmatpush.msra.mxu0 0.0
    %1110 = vmatpush.msra.mxu0 0.0
    %1111 = vmatpush.msra.mxu0 0.0
    %1112 = vmatpush.msra.mxu0 0.0
    %v1113 = vand.u32 %v755, 4294901760
    %1114 = vmatpush.msra.mxu0 %v1113
    %v1115 = vand.u32 %v754, 4294901760
    %1116 = vmatpush.msra.mxu0 %v1115
    %v1117 = vand.u32 %v63, 4294901760
    %v1118 = vsub.f32 %v63, %v1117
    %v1119 = vand.u32 %v1118, 4294901760
    %1120 = vmatmul.f32.gmra.mxu0 %v1119
    %v1121 = vpop.f32.mrf.mxu0
    %v1122 = vadd.f32 %v1022, %v1121
    %v1123 = vand.u32 %v66, 4294901760
    %v1124 = vsub.f32 %v66, %v1123
    %v1125 = vand.u32 %v1124, 4294901760
    %1126 = vmatmul.f32.gmra.mxu0 %v1125
    %v1127 = vpop.f32.mrf.mxu0
    %v1128 = vadd.f32 %v1027, %v1127
    %v1129 = vand.u32 %v69, 4294901760
    %v1130 = vsub.f32 %v69, %v1129
    %v1131 = vand.u32 %v1130, 4294901760
    %1132 = vmatmul.f32.gmra.mxu0 %v1131
    %v1133 = vpop.f32.mrf.mxu0
    %v1134 = vadd.f32 %v1032, %v1133
    %v1135 = vand.u32 %v72, 4294901760
    %v1136 = vsub.f32 %v72, %v1135
    %v1137 = vand.u32 %v1136, 4294901760
    %1138 = vmatmul.f32.gmra.mxu0 %v1137
    %v1139 = vpop.f32.mrf.mxu0
    %v1140 = vadd.f32 %v1037, %v1139
    %v1141 = vand.u32 %v75, 4294901760
    %v1142 = vsub.f32 %v75, %v1141
    %v1143 = vand.u32 %v1142, 4294901760
    %1144 = vmatmul.f32.gmra.mxu0 %v1143
    %v1145 = vpop.f32.mrf.mxu0
    %v1146 = vadd.f32 %v1042, %v1145
    %v1147 = vand.u32 %v78, 4294901760
    %v1148 = vsub.f32 %v78, %v1147
    %v1149 = vand.u32 %v1148, 4294901760
    %1150 = vmatmul.f32.gmra.mxu0 %v1149
    %v1151 = vpop.f32.mrf.mxu0
    %v1152 = vadd.f32 %v1047, %v1151
    %v1153 = vand.u32 %v81, 4294901760
    %v1154 = vsub.f32 %v81, %v1153
    %v1155 = vand.u32 %v1154, 4294901760
    %1156 = vmatmul.f32.gmra.mxu0 %v1155
    %v1157 = vpop.f32.mrf.mxu0
    %v1158 = vadd.f32 %v1052, %v1157
    %v1159 = vand.u32 %v84, 4294901760
    %v1160 = vsub.f32 %v84, %v1159
    %v1161 = vand.u32 %v1160, 4294901760
    %1162 = vmatmul.f32.gmra.mxu0 %v1161
    %v1163 = vpop.f32.mrf.mxu0
    %v1164 = vadd.f32 %v1057, %v1163
    %v1165 = vand.u32 %v87, 4294901760
    %v1166 = vsub.f32 %v87, %v1165
    %v1167 = vand.u32 %v1166, 4294901760
    %1168 = vmatmul.f32.gmra.mxu0 %v1167
    %v1169 = vpop.f32.mrf.mxu0
    %v1170 = vadd.f32 %v1062, %v1169
    %v1171 = vand.u32 %v90, 4294901760
    %v1172 = vsub.f32 %v90, %v1171
    %v1173 = vand.u32 %v1172, 4294901760
    %1174 = vmatmul.f32.gmra.mxu0 %v1173
    %v1175 = vpop.f32.mrf.mxu0
    %v1176 = vadd.f32 %v1067, %v1175
    %v1177 = vand.u32 %v93, 4294901760
    %v1178 = vsub.f32 %v93, %v1177
    %v1179 = vand.u32 %v1178, 4294901760
    %1180 = vmatmul.f32.gmra.mxu0 %v1179
    %v1181 = vpop.f32.mrf.mxu0
    %v1182 = vadd.f32 %v1072, %v1181
    %v1183 = vand.u32 %v96, 4294901760
    %v1184 = vsub.f32 %v96, %v1183
    %v1185 = vand.u32 %v1184, 4294901760
    %1186 = vmatmul.f32.gmra.mxu0 %v1185
    %v1187 = vpop.f32.mrf.mxu0
    %v1188 = vadd.f32 %v1077, %v1187
    %v1189 = vand.u32 %v99, 4294901760
    %v1190 = vsub.f32 %v99, %v1189
    %v1191 = vand.u32 %v1190, 4294901760
    %1192 = vmatmul.f32.gmra.mxu0 %v1191
    %v1193 = vpop.f32.mrf.mxu0
    %v1194 = vadd.f32 %v1082, %v1193
    %v1195 = vand.u32 %v102, 4294901760
    %v1196 = vsub.f32 %v102, %v1195
    %v1197 = vand.u32 %v1196, 4294901760
    %1198 = vmatmul.f32.gmra.mxu0 %v1197
    %v1199 = vpop.f32.mrf.mxu0
    %v1200 = vadd.f32 %v1087, %v1199
    %v1201 = vand.u32 %v105, 4294901760
    %v1202 = vsub.f32 %v105, %v1201
    %v1203 = vand.u32 %v1202, 4294901760
    %1204 = vmatmul.f32.gmra.mxu0 %v1203
    %v1205 = vpop.f32.mrf.mxu0
    %v1206 = vadd.f32 %v1092, %v1205
    %v1207 = vand.u32 %v108, 4294901760
    %v1208 = vsub.f32 %v108, %v1207
    %v1209 = vand.u32 %v1208, 4294901760
    %1210 = vmatmul.f32.gmra.mxu0 %v1209
    %v1211 = vpop.f32.mrf.mxu0
    %v1212 = vadd.f32 %v1097, %v1211
    %1213 = vdwg.mxu0
    %1214 = vmatpush.msra.mxu0 0.0
    %1215 = vmatpush.msra.mxu0 0.0
    %1216 = vmatpush.msra.mxu0 0.0
    %1217 = vmatpush.msra.mxu0 0.0
    %1218 = vmatpush.msra.mxu0 0.0
    %1219 = vmatpush.msra.mxu0 0.0
    %1220 = vmatpush.msra.mxu0 0.0
    %1221 = vmatpush.msra.mxu0 0.0
    %1222 = vmatpush.msra.mxu0 0.0
    %1223 = vmatpush.msra.mxu0 0.0
    %1224 = vmatpush.msra.mxu0 0.0
    %1225 = vmatpush.msra.mxu0 0.0
    %1226 = vmatpush.msra.mxu0 0.0
    %1227 = vmatpush.msra.mxu0 0.0
    %v1228 = vand.u32 %v755, 4294901760
    %v1229 = vsub.f32 %v755, %v1228
    %v1230 = vand.u32 %v1229, 4294901760
    %1231 = vmatpush.msra.mxu0 %v1230
    %v1232 = vand.u32 %v754, 4294901760
    %v1233 = vsub.f32 %v754, %v1232
    %v1234 = vand.u32 %v1233, 4294901760
    %1235 = vmatpush.msra.mxu0 %v1234
    %v1236 = vand.u32 %v63, 4294901760
    %1237 = vmatmul.f32.gmra.mxu0 %v1236
    %v1238 = vpop.f32.mrf.mxu0
    %v1239 = vadd.f32 %v1122, %v1238
    %v1240 = vand.u32 %v66, 4294901760
    %1241 = vmatmul.f32.gmra.mxu0 %v1240
    %v1242 = vpop.f32.mrf.mxu0
    %v1243 = vadd.f32 %v1128, %v1242
    %v1244 = vand.u32 %v69, 4294901760
    %1245 = vmatmul.f32.gmra.mxu0 %v1244
    %v1246 = vpop.f32.mrf.mxu0
    %v1247 = vadd.f32 %v1134, %v1246
    %v1248 = vand.u32 %v72, 4294901760
    %1249 = vmatmul.f32.gmra.mxu0 %v1248
    %v1250 = vpop.f32.mrf.mxu0
    %v1251 = vadd.f32 %v1140, %v1250
    %v1252 = vand.u32 %v75, 4294901760
    %1253 = vmatmul.f32.gmra.mxu0 %v1252
    %v1254 = vpop.f32.mrf.mxu0
    %v1255 = vadd.f32 %v1146, %v1254
    %v1256 = vand.u32 %v78, 4294901760
    %1257 = vmatmul.f32.gmra.mxu0 %v1256
    %v1258 = vpop.f32.mrf.mxu0
    %v1259 = vadd.f32 %v1152, %v1258
    %v1260 = vand.u32 %v81, 4294901760
    %1261 = vmatmul.f32.gmra.mxu0 %v1260
    %v1262 = vpop.f32.mrf.mxu0
    %v1263 = vadd.f32 %v1158, %v1262
    %v1264 = vand.u32 %v84, 4294901760
    %1265 = vmatmul.f32.gmra.mxu0 %v1264
    %v1266 = vpop.f32.mrf.mxu0
    %v1267 = vadd.f32 %v1164, %v1266
    %v1268 = vand.u32 %v87, 4294901760
    %1269 = vmatmul.f32.gmra.mxu0 %v1268
    %v1270 = vpop.f32.mrf.mxu0
    %v1271 = vadd.f32 %v1170, %v1270
    %v1272 = vand.u32 %v90, 4294901760
    %1273 = vmatmul.f32.gmra.mxu0 %v1272
    %v1274 = vpop.f32.mrf.mxu0
    %v1275 = vadd.f32 %v1176, %v1274
    %v1276 = vand.u32 %v93, 4294901760
    %1277 = vmatmul.f32.gmra.mxu0 %v1276
    %v1278 = vpop.f32.mrf.mxu0
    %v1279 = vadd.f32 %v1182, %v1278
    %v1280 = vand.u32 %v96, 4294901760
    %1281 = vmatmul.f32.gmra.mxu0 %v1280
    %v1282 = vpop.f32.mrf.mxu0
    %v1283 = vadd.f32 %v1188, %v1282
    %v1284 = vand.u32 %v99, 4294901760
    %1285 = vmatmul.f32.gmra.mxu0 %v1284
    %v1286 = vpop.f32.mrf.mxu0
    %v1287 = vadd.f32 %v1194, %v1286
    %v1288 = vand.u32 %v102, 4294901760
    %1289 = vmatmul.f32.gmra.mxu0 %v1288
    %v1290 = vpop.f32.mrf.mxu0
    %v1291 = vadd.f32 %v1200, %v1290
    %v1292 = vand.u32 %v105, 4294901760
    %1293 = vmatmul.f32.gmra.mxu0 %v1292
    %v1294 = vpop.f32.mrf.mxu0
    %v1295 = vadd.f32 %v1206, %v1294
    %v1296 = vand.u32 %v108, 4294901760
    %1297 = vmatmul.f32.gmra.mxu0 %v1296
    %v1298 = vpop.f32.mrf.mxu0
    %v1299 = vadd.f32 %v1212, %v1298
    %1300 = vdwg.mxu0
    %1301 = vmatpush.msra.mxu0 0.0
    %1302 = vmatpush.msra.mxu0 0.0
    %1303 = vmatpush.msra.mxu0 0.0
    %1304 = vmatpush.msra.mxu0 0.0
    %1305 = vmatpush.msra.mxu0 0.0
    %1306 = vmatpush.msra.mxu0 0.0
    %1307 = vmatpush.msra.mxu0 0.0
    %1308 = vmatpush.msra.mxu0 0.0
    %1309 = vmatpush.msra.mxu0 0.0
    %1310 = vmatpush.msra.mxu0 0.0
    %1311 = vmatpush.msra.mxu0 0.0
    %1312 = vmatpush.msra.mxu0 0.0
    %1313 = vmatpush.msra.mxu0 0.0
    %1314 = vmatpush.msra.mxu0 0.0
    %v1315 = vand.u32 %v755, 4294901760
    %1316 = vmatpush.msra.mxu0 %v1315
    %v1317 = vand.u32 %v754, 4294901760
    %1318 = vmatpush.msra.mxu0 %v1317
    %v1319 = vand.u32 %v63, 4294901760
    %1320 = vmatmul.f32.gmra.mxu0 %v1319
    %v1321 = vpop.f32.mrf.mxu0
    %v1322 = vadd.f32 %v1239, %v1321
    %v1323 = vand.u32 %v66, 4294901760
    %1324 = vmatmul.f32.gmra.mxu0 %v1323
    %v1325 = vpop.f32.mrf.mxu0
    %v1326 = vadd.f32 %v1243, %v1325
    %v1327 = vand.u32 %v69, 4294901760
    %1328 = vmatmul.f32.gmra.mxu0 %v1327
    %v1329 = vpop.f32.mrf.mxu0
    %v1330 = vadd.f32 %v1247, %v1329
    %v1331 = vand.u32 %v72, 4294901760
    %1332 = vmatmul.f32.gmra.mxu0 %v1331
    %v1333 = vpop.f32.mrf.mxu0
    %v1334 = vadd.f32 %v1251, %v1333
    %v1335 = vand.u32 %v75, 4294901760
    %1336 = vmatmul.f32.gmra.mxu0 %v1335
    %v1337 = vpop.f32.mrf.mxu0
    %v1338 = vadd.f32 %v1255, %v1337
    %v1339 = vand.u32 %v78, 4294901760
    %1340 = vmatmul.f32.gmra.mxu0 %v1339
    %v1341 = vpop.f32.mrf.mxu0
    %v1342 = vadd.f32 %v1259, %v1341
    %v1343 = vand.u32 %v81, 4294901760
    %1344 = vmatmul.f32.gmra.mxu0 %v1343
    %v1345 = vpop.f32.mrf.mxu0
    %v1346 = vadd.f32 %v1263, %v1345
    %v1347 = vand.u32 %v84, 4294901760
    %1348 = vmatmul.f32.gmra.mxu0 %v1347
    %v1349 = vpop.f32.mrf.mxu0
    %v1350 = vadd.f32 %v1267, %v1349
    %v1351 = vand.u32 %v87, 4294901760
    %1352 = vmatmul.f32.gmra.mxu0 %v1351
    %v1353 = vpop.f32.mrf.mxu0
    %v1354 = vadd.f32 %v1271, %v1353
    %v1355 = vand.u32 %v90, 4294901760
    %1356 = vmatmul.f32.gmra.mxu0 %v1355
    %v1357 = vpop.f32.mrf.mxu0
    %v1358 = vadd.f32 %v1275, %v1357
    %v1359 = vand.u32 %v93, 4294901760
    %1360 = vmatmul.f32.gmra.mxu0 %v1359
    %v1361 = vpop.f32.mrf.mxu0
    %v1362 = vadd.f32 %v1279, %v1361
    %v1363 = vand.u32 %v96, 4294901760
    %1364 = vmatmul.f32.gmra.mxu0 %v1363
    %v1365 = vpop.f32.mrf.mxu0
    %v1366 = vadd.f32 %v1283, %v1365
    %v1367 = vand.u32 %v99, 4294901760
    %1368 = vmatmul.f32.gmra.mxu0 %v1367
    %v1369 = vpop.f32.mrf.mxu0
    %v1370 = vadd.f32 %v1287, %v1369
    %v1371 = vand.u32 %v102, 4294901760
    %1372 = vmatmul.f32.gmra.mxu0 %v1371
    %v1373 = vpop.f32.mrf.mxu0
    %v1374 = vadd.f32 %v1291, %v1373
    %v1375 = vand.u32 %v105, 4294901760
    %1376 = vmatmul.f32.gmra.mxu0 %v1375
    %v1377 = vpop.f32.mrf.mxu0
    %v1378 = vadd.f32 %v1295, %v1377
    %v1379 = vand.u32 %v108, 4294901760
    %1380 = vmatmul.f32.gmra.mxu0 %v1379
    %v1381 = vpop.f32.mrf.mxu0
    %v1382 = vadd.f32 %v1299, %v1381
    %1383 = vdwg.mxu0
    %v1384 = vld [vmem:[%s6] sm:$0xff]
    %v1385 = vld [vmem:[%s6 + $0x8] sm:$0xff]
    %v1386 = vld [vmem:[%s7] sm:$0x1]
    %v1388 = vperm.slane %v1386, 0
    %1390 = vmatpush.msra.mxu0 0.0
    %1391 = vmatpush.msra.mxu0 0.0
    %1392 = vmatpush.msra.mxu0 0.0
    %1393 = vmatpush.msra.mxu0 0.0
    %1394 = vmatpush.msra.mxu0 0.0
    %1395 = vmatpush.msra.mxu0 0.0
    %1396 = vmatpush.msra.mxu0 0.0
    %1397 = vmatpush.msra.mxu0 0.0
    %1398 = vmatpush.msra.mxu0 0.0
    %1399 = vmatpush.msra.mxu0 0.0
    %1400 = vmatpush.msra.mxu0 0.0
    %1401 = vmatpush.msra.mxu0 0.0
    %1402 = vmatpush.msra.mxu0 0.0
    %1403 = vmatpush.msra.mxu0 0.0
    %v1404 = vand.u32 %v1385, 4294901760
    %1405 = vmatpush.msra.mxu0 %v1404
    %v1406 = vand.u32 %v1384, 4294901760
    %1407 = vmatpush.msra.mxu0 %v1406
    %v1408 = vand.u32 %v63, 4294901760
    %v1409 = vsub.f32 %v63, %v1408
    %v1410 = vand.u32 %v1409, 4294901760
    %v1411 = vsub.f32 %v1409, %v1410
    %v1412 = vand.u32 %v1411, 4294901760
    %1413 = vmatmul.f32.gmra.mxu0 %v1412
    %v1414 = vpop.f32.mrf.mxu0
    %v1415 = vadd.f32 %v1388, %v1414
    %v1416 = vand.u32 %v66, 4294901760
    %v1417 = vsub.f32 %v66, %v1416
    %v1418 = vand.u32 %v1417, 4294901760
    %v1419 = vsub.f32 %v1417, %v1418
    %v1420 = vand.u32 %v1419, 4294901760
    %1421 = vmatmul.f32.gmra.mxu0 %v1420
    %v1422 = vpop.f32.mrf.mxu0
    %v1423 = vadd.f32 %v1388, %v1422
    %v1424 = vand.u32 %v69, 4294901760
    %v1425 = vsub.f32 %v69, %v1424
    %v1426 = vand.u32 %v1425, 4294901760
    %v1427 = vsub.f32 %v1425, %v1426
    %v1428 = vand.u32 %v1427, 4294901760
    %1429 = vmatmul.f32.gmra.mxu0 %v1428
    %v1430 = vpop.f32.mrf.mxu0
    %v1431 = vadd.f32 %v1388, %v1430
    %v1432 = vand.u32 %v72, 4294901760
    %v1433 = vsub.f32 %v72, %v1432
    %v1434 = vand.u32 %v1433, 4294901760
    %v1435 = vsub.f32 %v1433, %v1434
    %v1436 = vand.u32 %v1435, 4294901760
    %1437 = vmatmul.f32.gmra.mxu0 %v1436
    %v1438 = vpop.f32.mrf.mxu0
    %v1439 = vadd.f32 %v1388, %v1438
    %v1440 = vand.u32 %v75, 4294901760
    %v1441 = vsub.f32 %v75, %v1440
    %v1442 = vand.u32 %v1441, 4294901760
    %v1443 = vsub.f32 %v1441, %v1442
    %v1444 = vand.u32 %v1443, 4294901760
    %1445 = vmatmul.f32.gmra.mxu0 %v1444
    %v1446 = vpop.f32.mrf.mxu0
    %v1447 = vadd.f32 %v1388, %v1446
    %v1448 = vand.u32 %v78, 4294901760
    %v1449 = vsub.f32 %v78, %v1448
    %v1450 = vand.u32 %v1449, 4294901760
    %v1451 = vsub.f32 %v1449, %v1450
    %v1452 = vand.u32 %v1451, 4294901760
    %1453 = vmatmul.f32.gmra.mxu0 %v1452
    %v1454 = vpop.f32.mrf.mxu0
    %v1455 = vadd.f32 %v1388, %v1454
    %v1456 = vand.u32 %v81, 4294901760
    %v1457 = vsub.f32 %v81, %v1456
    %v1458 = vand.u32 %v1457, 4294901760
    %v1459 = vsub.f32 %v1457, %v1458
    %v1460 = vand.u32 %v1459, 4294901760
    %1461 = vmatmul.f32.gmra.mxu0 %v1460
    %v1462 = vpop.f32.mrf.mxu0
    %v1463 = vadd.f32 %v1388, %v1462
    %v1464 = vand.u32 %v84, 4294901760
    %v1465 = vsub.f32 %v84, %v1464
    %v1466 = vand.u32 %v1465, 4294901760
    %v1467 = vsub.f32 %v1465, %v1466
    %v1468 = vand.u32 %v1467, 4294901760
    %1469 = vmatmul.f32.gmra.mxu0 %v1468
    %v1470 = vpop.f32.mrf.mxu0
    %v1471 = vadd.f32 %v1388, %v1470
    %v1472 = vand.u32 %v87, 4294901760
    %v1473 = vsub.f32 %v87, %v1472
    %v1474 = vand.u32 %v1473, 4294901760
    %v1475 = vsub.f32 %v1473, %v1474
    %v1476 = vand.u32 %v1475, 4294901760
    %1477 = vmatmul.f32.gmra.mxu0 %v1476
    %v1478 = vpop.f32.mrf.mxu0
    %v1479 = vadd.f32 %v1388, %v1478
    %v1480 = vand.u32 %v90, 4294901760
    %v1481 = vsub.f32 %v90, %v1480
    %v1482 = vand.u32 %v1481, 4294901760
    %v1483 = vsub.f32 %v1481, %v1482
    %v1484 = vand.u32 %v1483, 4294901760
    %1485 = vmatmul.f32.gmra.mxu0 %v1484
    %v1486 = vpop.f32.mrf.mxu0
    %v1487 = vadd.f32 %v1388, %v1486
    %v1488 = vand.u32 %v93, 4294901760
    %v1489 = vsub.f32 %v93, %v1488
    %v1490 = vand.u32 %v1489, 4294901760
    %v1491 = vsub.f32 %v1489, %v1490
    %v1492 = vand.u32 %v1491, 4294901760
    %1493 = vmatmul.f32.gmra.mxu0 %v1492
    %v1494 = vpop.f32.mrf.mxu0
    %v1495 = vadd.f32 %v1388, %v1494
    %v1496 = vand.u32 %v96, 4294901760
    %v1497 = vsub.f32 %v96, %v1496
    %v1498 = vand.u32 %v1497, 4294901760
    %v1499 = vsub.f32 %v1497, %v1498
    %v1500 = vand.u32 %v1499, 4294901760
    %1501 = vmatmul.f32.gmra.mxu0 %v1500
    %v1502 = vpop.f32.mrf.mxu0
    %v1503 = vadd.f32 %v1388, %v1502
    %v1504 = vand.u32 %v99, 4294901760
    %v1505 = vsub.f32 %v99, %v1504
    %v1506 = vand.u32 %v1505, 4294901760
    %v1507 = vsub.f32 %v1505, %v1506
    %v1508 = vand.u32 %v1507, 4294901760
    %1509 = vmatmul.f32.gmra.mxu0 %v1508
    %v1510 = vpop.f32.mrf.mxu0
    %v1511 = vadd.f32 %v1388, %v1510
    %v1512 = vand.u32 %v102, 4294901760
    %v1513 = vsub.f32 %v102, %v1512
    %v1514 = vand.u32 %v1513, 4294901760
    %v1515 = vsub.f32 %v1513, %v1514
    %v1516 = vand.u32 %v1515, 4294901760
    %1517 = vmatmul.f32.gmra.mxu0 %v1516
    %v1518 = vpop.f32.mrf.mxu0
    %v1519 = vadd.f32 %v1388, %v1518
    %v1520 = vand.u32 %v105, 4294901760
    %v1521 = vsub.f32 %v105, %v1520
    %v1522 = vand.u32 %v1521, 4294901760
    %v1523 = vsub.f32 %v1521, %v1522
    %v1524 = vand.u32 %v1523, 4294901760
    %1525 = vmatmul.f32.gmra.mxu0 %v1524
    %v1526 = vpop.f32.mrf.mxu0
    %v1527 = vadd.f32 %v1388, %v1526
    %v1528 = vand.u32 %v108, 4294901760
    %v1529 = vsub.f32 %v108, %v1528
    %v1530 = vand.u32 %v1529, 4294901760
    %v1531 = vsub.f32 %v1529, %v1530
    %v1532 = vand.u32 %v1531, 4294901760
    %1533 = vmatmul.f32.gmra.mxu0 %v1532
    %v1534 = vpop.f32.mrf.mxu0
    %v1535 = vadd.f32 %v1388, %v1534
    %1536 = vdwg.mxu0
    %1537 = vmatpush.msra.mxu0 0.0
    %1538 = vmatpush.msra.mxu0 0.0
    %1539 = vmatpush.msra.mxu0 0.0
    %1540 = vmatpush.msra.mxu0 0.0
    %1541 = vmatpush.msra.mxu0 0.0
    %1542 = vmatpush.msra.mxu0 0.0
    %1543 = vmatpush.msra.mxu0 0.0
    %1544 = vmatpush.msra.mxu0 0.0
    %1545 = vmatpush.msra.mxu0 0.0
    %1546 = vmatpush.msra.mxu0 0.0
    %1547 = vmatpush.msra.mxu0 0.0
    %1548 = vmatpush.msra.mxu0 0.0
    %1549 = vmatpush.msra.mxu0 0.0
    %1550 = vmatpush.msra.mxu0 0.0
    %v1551 = vand.u32 %v1385, 4294901760
    %v1552 = vsub.f32 %v1385, %v1551
    %v1553 = vand.u32 %v1552, 4294901760
    %v1554 = vsub.f32 %v1552, %v1553
    %v1555 = vand.u32 %v1554, 4294901760
    %1556 = vmatpush.msra.mxu0 %v1555
    %v1557 = vand.u32 %v1384, 4294901760
    %v1558 = vsub.f32 %v1384, %v1557
    %v1559 = vand.u32 %v1558, 4294901760
    %v1560 = vsub.f32 %v1558, %v1559
    %v1561 = vand.u32 %v1560, 4294901760
    %1562 = vmatpush.msra.mxu0 %v1561
    %v1563 = vand.u32 %v63, 4294901760
    %1564 = vmatmul.f32.gmra.mxu0 %v1563
    %v1565 = vpop.f32.mrf.mxu0
    %v1566 = vadd.f32 %v1415, %v1565
    %v1567 = vand.u32 %v66, 4294901760
    %1568 = vmatmul.f32.gmra.mxu0 %v1567
    %v1569 = vpop.f32.mrf.mxu0
    %v1570 = vadd.f32 %v1423, %v1569
    %v1571 = vand.u32 %v69, 4294901760
    %1572 = vmatmul.f32.gmra.mxu0 %v1571
    %v1573 = vpop.f32.mrf.mxu0
    %v1574 = vadd.f32 %v1431, %v1573
    %v1575 = vand.u32 %v72, 4294901760
    %1576 = vmatmul.f32.gmra.mxu0 %v1575
    %v1577 = vpop.f32.mrf.mxu0
    %v1578 = vadd.f32 %v1439, %v1577
    %v1579 = vand.u32 %v75, 4294901760
    %1580 = vmatmul.f32.gmra.mxu0 %v1579
    %v1581 = vpop.f32.mrf.mxu0
    %v1582 = vadd.f32 %v1447, %v1581
    %v1583 = vand.u32 %v78, 4294901760
    %1584 = vmatmul.f32.gmra.mxu0 %v1583
    %v1585 = vpop.f32.mrf.mxu0
    %v1586 = vadd.f32 %v1455, %v1585
    %v1587 = vand.u32 %v81, 4294901760
    %1588 = vmatmul.f32.gmra.mxu0 %v1587
    %v1589 = vpop.f32.mrf.mxu0
    %v1590 = vadd.f32 %v1463, %v1589
    %v1591 = vand.u32 %v84, 4294901760
    %1592 = vmatmul.f32.gmra.mxu0 %v1591
    %v1593 = vpop.f32.mrf.mxu0
    %v1594 = vadd.f32 %v1471, %v1593
    %v1595 = vand.u32 %v87, 4294901760
    %1596 = vmatmul.f32.gmra.mxu0 %v1595
    %v1597 = vpop.f32.mrf.mxu0
    %v1598 = vadd.f32 %v1479, %v1597
    %v1599 = vand.u32 %v90, 4294901760
    %1600 = vmatmul.f32.gmra.mxu0 %v1599
    %v1601 = vpop.f32.mrf.mxu0
    %v1602 = vadd.f32 %v1487, %v1601
    %v1603 = vand.u32 %v93, 4294901760
    %1604 = vmatmul.f32.gmra.mxu0 %v1603
    %v1605 = vpop.f32.mrf.mxu0
    %v1606 = vadd.f32 %v1495, %v1605
    %v1607 = vand.u32 %v96, 4294901760
    %1608 = vmatmul.f32.gmra.mxu0 %v1607
    %v1609 = vpop.f32.mrf.mxu0
    %v1610 = vadd.f32 %v1503, %v1609
    %v1611 = vand.u32 %v99, 4294901760
    %1612 = vmatmul.f32.gmra.mxu0 %v1611
    %v1613 = vpop.f32.mrf.mxu0
    %v1614 = vadd.f32 %v1511, %v1613
    %v1615 = vand.u32 %v102, 4294901760
    %1616 = vmatmul.f32.gmra.mxu0 %v1615
    %v1617 = vpop.f32.mrf.mxu0
    %v1618 = vadd.f32 %v1519, %v1617
    %v1619 = vand.u32 %v105, 4294901760
    %1620 = vmatmul.f32.gmra.mxu0 %v1619
    %v1621 = vpop.f32.mrf.mxu0
    %v1622 = vadd.f32 %v1527, %v1621
    %v1623 = vand.u32 %v108, 4294901760
    %1624 = vmatmul.f32.gmra.mxu0 %v1623
    %v1625 = vpop.f32.mrf.mxu0
    %v1626 = vadd.f32 %v1535, %v1625
    %1627 = vdwg.mxu0
    %1628 = vmatpush.msra.mxu0 0.0
    %1629 = vmatpush.msra.mxu0 0.0
    %1630 = vmatpush.msra.mxu0 0.0
    %1631 = vmatpush.msra.mxu0 0.0
    %1632 = vmatpush.msra.mxu0 0.0
    %1633 = vmatpush.msra.mxu0 0.0
    %1634 = vmatpush.msra.mxu0 0.0
    %1635 = vmatpush.msra.mxu0 0.0
    %1636 = vmatpush.msra.mxu0 0.0
    %1637 = vmatpush.msra.mxu0 0.0
    %1638 = vmatpush.msra.mxu0 0.0
    %1639 = vmatpush.msra.mxu0 0.0
    %1640 = vmatpush.msra.mxu0 0.0
    %1641 = vmatpush.msra.mxu0 0.0
    %v1642 = vand.u32 %v1385, 4294901760
    %v1643 = vsub.f32 %v1385, %v1642
    %1644 = vmatpush.msra.mxu0 %v1643
    %v1645 = vand.u32 %v1384, 4294901760
    %v1646 = vsub.f32 %v1384, %v1645
    %1647 = vmatpush.msra.mxu0 %v1646
    %v1648 = vand.u32 %v63, 4294901760
    %v1649 = vsub.f32 %v63, %v1648
    %1650 = vmatmul.f32.gmra.mxu0 %v1649
    %v1651 = vpop.f32.mrf.mxu0
    %v1652 = vadd.f32 %v1566, %v1651
    %v1653 = vand.u32 %v66, 4294901760
    %v1654 = vsub.f32 %v66, %v1653
    %1655 = vmatmul.f32.gmra.mxu0 %v1654
    %v1656 = vpop.f32.mrf.mxu0
    %v1657 = vadd.f32 %v1570, %v1656
    %v1658 = vand.u32 %v69, 4294901760
    %v1659 = vsub.f32 %v69, %v1658
    %1660 = vmatmul.f32.gmra.mxu0 %v1659
    %v1661 = vpop.f32.mrf.mxu0
    %v1662 = vadd.f32 %v1574, %v1661
    %v1663 = vand.u32 %v72, 4294901760
    %v1664 = vsub.f32 %v72, %v1663
    %1665 = vmatmul.f32.gmra.mxu0 %v1664
    %v1666 = vpop.f32.mrf.mxu0
    %v1667 = vadd.f32 %v1578, %v1666
    %v1668 = vand.u32 %v75, 4294901760
    %v1669 = vsub.f32 %v75, %v1668
    %1670 = vmatmul.f32.gmra.mxu0 %v1669
    %v1671 = vpop.f32.mrf.mxu0
    %v1672 = vadd.f32 %v1582, %v1671
    %v1673 = vand.u32 %v78, 4294901760
    %v1674 = vsub.f32 %v78, %v1673
    %1675 = vmatmul.f32.gmra.mxu0 %v1674
    %v1676 = vpop.f32.mrf.mxu0
    %v1677 = vadd.f32 %v1586, %v1676
    %v1678 = vand.u32 %v81, 4294901760
    %v1679 = vsub.f32 %v81, %v1678
    %1680 = vmatmul.f32.gmra.mxu0 %v1679
    %v1681 = vpop.f32.mrf.mxu0
    %v1682 = vadd.f32 %v1590, %v1681
    %v1683 = vand.u32 %v84, 4294901760
    %v1684 = vsub.f32 %v84, %v1683
    %1685 = vmatmul.f32.gmra.mxu0 %v1684
    %v1686 = vpop.f32.mrf.mxu0
    %v1687 = vadd.f32 %v1594, %v1686
    %v1688 = vand.u32 %v87, 4294901760
    %v1689 = vsub.f32 %v87, %v1688
    %1690 = vmatmul.f32.gmra.mxu0 %v1689
    %v1691 = vpop.f32.mrf.mxu0
    %v1692 = vadd.f32 %v1598, %v1691
    %v1693 = vand.u32 %v90, 4294901760
    %v1694 = vsub.f32 %v90, %v1693
    %1695 = vmatmul.f32.gmra.mxu0 %v1694
    %v1696 = vpop.f32.mrf.mxu0
    %v1697 = vadd.f32 %v1602, %v1696
    %v1698 = vand.u32 %v93, 4294901760
    %v1699 = vsub.f32 %v93, %v1698
    %1700 = vmatmul.f32.gmra.mxu0 %v1699
    %v1701 = vpop.f32.mrf.mxu0
    %v1702 = vadd.f32 %v1606, %v1701
    %v1703 = vand.u32 %v96, 4294901760
    %v1704 = vsub.f32 %v96, %v1703
    %1705 = vmatmul.f32.gmra.mxu0 %v1704
    %v1706 = vpop.f32.mrf.mxu0
    %v1707 = vadd.f32 %v1610, %v1706
    %v1708 = vand.u32 %v99, 4294901760
    %v1709 = vsub.f32 %v99, %v1708
    %1710 = vmatmul.f32.gmra.mxu0 %v1709
    %v1711 = vpop.f32.mrf.mxu0
    %v1712 = vadd.f32 %v1614, %v1711
    %v1713 = vand.u32 %v102, 4294901760
    %v1714 = vsub.f32 %v102, %v1713
    %1715 = vmatmul.f32.gmra.mxu0 %v1714
    %v1716 = vpop.f32.mrf.mxu0
    %v1717 = vadd.f32 %v1618, %v1716
    %v1718 = vand.u32 %v105, 4294901760
    %v1719 = vsub.f32 %v105, %v1718
    %1720 = vmatmul.f32.gmra.mxu0 %v1719
    %v1721 = vpop.f32.mrf.mxu0
    %v1722 = vadd.f32 %v1622, %v1721
    %v1723 = vand.u32 %v108, 4294901760
    %v1724 = vsub.f32 %v108, %v1723
    %1725 = vmatmul.f32.gmra.mxu0 %v1724
    %v1726 = vpop.f32.mrf.mxu0
    %v1727 = vadd.f32 %v1626, %v1726
    %1728 = vdwg.mxu0
    %1729 = vmatpush.msra.mxu0 0.0
    %1730 = vmatpush.msra.mxu0 0.0
    %1731 = vmatpush.msra.mxu0 0.0
    %1732 = vmatpush.msra.mxu0 0.0
    %1733 = vmatpush.msra.mxu0 0.0
    %1734 = vmatpush.msra.mxu0 0.0
    %1735 = vmatpush.msra.mxu0 0.0
    %1736 = vmatpush.msra.mxu0 0.0
    %1737 = vmatpush.msra.mxu0 0.0
    %1738 = vmatpush.msra.mxu0 0.0
    %1739 = vmatpush.msra.mxu0 0.0
    %1740 = vmatpush.msra.mxu0 0.0
    %1741 = vmatpush.msra.mxu0 0.0
    %1742 = vmatpush.msra.mxu0 0.0
    %v1743 = vand.u32 %v1385, 4294901760
    %1744 = vmatpush.msra.mxu0 %v1743
    %v1745 = vand.u32 %v1384, 4294901760
    %1746 = vmatpush.msra.mxu0 %v1745
    %v1747 = vand.u32 %v63, 4294901760
    %v1748 = vsub.f32 %v63, %v1747
    %v1749 = vand.u32 %v1748, 4294901760
    %1750 = vmatmul.f32.gmra.mxu0 %v1749
    %v1751 = vpop.f32.mrf.mxu0
    %v1752 = vadd.f32 %v1652, %v1751
    %v1753 = vand.u32 %v66, 4294901760
    %v1754 = vsub.f32 %v66, %v1753
    %v1755 = vand.u32 %v1754, 4294901760
    %1756 = vmatmul.f32.gmra.mxu0 %v1755
    %v1757 = vpop.f32.mrf.mxu0
    %v1758 = vadd.f32 %v1657, %v1757
    %v1759 = vand.u32 %v69, 4294901760
    %v1760 = vsub.f32 %v69, %v1759
    %v1761 = vand.u32 %v1760, 4294901760
    %1762 = vmatmul.f32.gmra.mxu0 %v1761
    %v1763 = vpop.f32.mrf.mxu0
    %v1764 = vadd.f32 %v1662, %v1763
    %v1765 = vand.u32 %v72, 4294901760
    %v1766 = vsub.f32 %v72, %v1765
    %v1767 = vand.u32 %v1766, 4294901760
    %1768 = vmatmul.f32.gmra.mxu0 %v1767
    %v1769 = vpop.f32.mrf.mxu0
    %v1770 = vadd.f32 %v1667, %v1769
    %v1771 = vand.u32 %v75, 4294901760
    %v1772 = vsub.f32 %v75, %v1771
    %v1773 = vand.u32 %v1772, 4294901760
    %1774 = vmatmul.f32.gmra.mxu0 %v1773
    %v1775 = vpop.f32.mrf.mxu0
    %v1776 = vadd.f32 %v1672, %v1775
    %v1777 = vand.u32 %v78, 4294901760
    %v1778 = vsub.f32 %v78, %v1777
    %v1779 = vand.u32 %v1778, 4294901760
    %1780 = vmatmul.f32.gmra.mxu0 %v1779
    %v1781 = vpop.f32.mrf.mxu0
    %v1782 = vadd.f32 %v1677, %v1781
    %v1783 = vand.u32 %v81, 4294901760
    %v1784 = vsub.f32 %v81, %v1783
    %v1785 = vand.u32 %v1784, 4294901760
    %1786 = vmatmul.f32.gmra.mxu0 %v1785
    %v1787 = vpop.f32.mrf.mxu0
    %v1788 = vadd.f32 %v1682, %v1787
    %v1789 = vand.u32 %v84, 4294901760
    %v1790 = vsub.f32 %v84, %v1789
    %v1791 = vand.u32 %v1790, 4294901760
    %1792 = vmatmul.f32.gmra.mxu0 %v1791
    %v1793 = vpop.f32.mrf.mxu0
    %v1794 = vadd.f32 %v1687, %v1793
    %v1795 = vand.u32 %v87, 4294901760
    %v1796 = vsub.f32 %v87, %v1795
    %v1797 = vand.u32 %v1796, 4294901760
    %1798 = vmatmul.f32.gmra.mxu0 %v1797
    %v1799 = vpop.f32.mrf.mxu0
    %v1800 = vadd.f32 %v1692, %v1799
    %v1801 = vand.u32 %v90, 4294901760
    %v1802 = vsub.f32 %v90, %v1801
    %v1803 = vand.u32 %v1802, 4294901760
    %1804 = vmatmul.f32.gmra.mxu0 %v1803
    %v1805 = vpop.f32.mrf.mxu0
    %v1806 = vadd.f32 %v1697, %v1805
    %v1807 = vand.u32 %v93, 4294901760
    %v1808 = vsub.f32 %v93, %v1807
    %v1809 = vand.u32 %v1808, 4294901760
    %1810 = vmatmul.f32.gmra.mxu0 %v1809
    %v1811 = vpop.f32.mrf.mxu0
    %v1812 = vadd.f32 %v1702, %v1811
    %v1813 = vand.u32 %v96, 4294901760
    %v1814 = vsub.f32 %v96, %v1813
    %v1815 = vand.u32 %v1814, 4294901760
    %1816 = vmatmul.f32.gmra.mxu0 %v1815
    %v1817 = vpop.f32.mrf.mxu0
    %v1818 = vadd.f32 %v1707, %v1817
    %v1819 = vand.u32 %v99, 4294901760
    %v1820 = vsub.f32 %v99, %v1819
    %v1821 = vand.u32 %v1820, 4294901760
    %1822 = vmatmul.f32.gmra.mxu0 %v1821
    %v1823 = vpop.f32.mrf.mxu0
    %v1824 = vadd.f32 %v1712, %v1823
    %v1825 = vand.u32 %v102, 4294901760
    %v1826 = vsub.f32 %v102, %v1825
    %v1827 = vand.u32 %v1826, 4294901760
    %1828 = vmatmul.f32.gmra.mxu0 %v1827
    %v1829 = vpop.f32.mrf.mxu0
    %v1830 = vadd.f32 %v1717, %v1829
    %v1831 = vand.u32 %v105, 4294901760
    %v1832 = vsub.f32 %v105, %v1831
    %v1833 = vand.u32 %v1832, 4294901760
    %1834 = vmatmul.f32.gmra.mxu0 %v1833
    %v1835 = vpop.f32.mrf.mxu0
    %v1836 = vadd.f32 %v1722, %v1835
    %v1837 = vand.u32 %v108, 4294901760
    %v1838 = vsub.f32 %v108, %v1837
    %v1839 = vand.u32 %v1838, 4294901760
    %1840 = vmatmul.f32.gmra.mxu0 %v1839
    %v1841 = vpop.f32.mrf.mxu0
    %v1842 = vadd.f32 %v1727, %v1841
    %1843 = vdwg.mxu0
    %1844 = vmatpush.msra.mxu0 0.0
    %1845 = vmatpush.msra.mxu0 0.0
    %1846 = vmatpush.msra.mxu0 0.0
    %1847 = vmatpush.msra.mxu0 0.0
    %1848 = vmatpush.msra.mxu0 0.0
    %1849 = vmatpush.msra.mxu0 0.0
    %1850 = vmatpush.msra.mxu0 0.0
    %1851 = vmatpush.msra.mxu0 0.0
    %1852 = vmatpush.msra.mxu0 0.0
    %1853 = vmatpush.msra.mxu0 0.0
    %1854 = vmatpush.msra.mxu0 0.0
    %1855 = vmatpush.msra.mxu0 0.0
    %1856 = vmatpush.msra.mxu0 0.0
    %1857 = vmatpush.msra.mxu0 0.0
    %v1858 = vand.u32 %v1385, 4294901760
    %v1859 = vsub.f32 %v1385, %v1858
    %v1860 = vand.u32 %v1859, 4294901760
    %1861 = vmatpush.msra.mxu0 %v1860
    %v1862 = vand.u32 %v1384, 4294901760
    %v1863 = vsub.f32 %v1384, %v1862
    %v1864 = vand.u32 %v1863, 4294901760
    %1865 = vmatpush.msra.mxu0 %v1864
    %v1866 = vand.u32 %v63, 4294901760
    %1867 = vmatmul.f32.gmra.mxu0 %v1866
    %v1868 = vpop.f32.mrf.mxu0
    %v1869 = vadd.f32 %v1752, %v1868
    %v1870 = vand.u32 %v66, 4294901760
    %1871 = vmatmul.f32.gmra.mxu0 %v1870
    %v1872 = vpop.f32.mrf.mxu0
    %v1873 = vadd.f32 %v1758, %v1872
    %v1874 = vand.u32 %v69, 4294901760
    %1875 = vmatmul.f32.gmra.mxu0 %v1874
    %v1876 = vpop.f32.mrf.mxu0
    %v1877 = vadd.f32 %v1764, %v1876
    %v1878 = vand.u32 %v72, 4294901760
    %1879 = vmatmul.f32.gmra.mxu0 %v1878
    %v1880 = vpop.f32.mrf.mxu0
    %v1881 = vadd.f32 %v1770, %v1880
    %v1882 = vand.u32 %v75, 4294901760
    %1883 = vmatmul.f32.gmra.mxu0 %v1882
    %v1884 = vpop.f32.mrf.mxu0
    %v1885 = vadd.f32 %v1776, %v1884
    %v1886 = vand.u32 %v78, 4294901760
    %1887 = vmatmul.f32.gmra.mxu0 %v1886
    %v1888 = vpop.f32.mrf.mxu0
    %v1889 = vadd.f32 %v1782, %v1888
    %v1890 = vand.u32 %v81, 4294901760
    %1891 = vmatmul.f32.gmra.mxu0 %v1890
    %v1892 = vpop.f32.mrf.mxu0
    %v1893 = vadd.f32 %v1788, %v1892
    %v1894 = vand.u32 %v84, 4294901760
    %1895 = vmatmul.f32.gmra.mxu0 %v1894
    %v1896 = vpop.f32.mrf.mxu0
    %v1897 = vadd.f32 %v1794, %v1896
    %v1898 = vand.u32 %v87, 4294901760
    %1899 = vmatmul.f32.gmra.mxu0 %v1898
    %v1900 = vpop.f32.mrf.mxu0
    %v1901 = vadd.f32 %v1800, %v1900
    %v1902 = vand.u32 %v90, 4294901760
    %1903 = vmatmul.f32.gmra.mxu0 %v1902
    %v1904 = vpop.f32.mrf.mxu0
    %v1905 = vadd.f32 %v1806, %v1904
    %v1906 = vand.u32 %v93, 4294901760
    %1907 = vmatmul.f32.gmra.mxu0 %v1906
    %v1908 = vpop.f32.mrf.mxu0
    %v1909 = vadd.f32 %v1812, %v1908
    %v1910 = vand.u32 %v96, 4294901760
    %1911 = vmatmul.f32.gmra.mxu0 %v1910
    %v1912 = vpop.f32.mrf.mxu0
    %v1913 = vadd.f32 %v1818, %v1912
    %v1914 = vand.u32 %v99, 4294901760
    %1915 = vmatmul.f32.gmra.mxu0 %v1914
    %v1916 = vpop.f32.mrf.mxu0
    %v1917 = vadd.f32 %v1824, %v1916
    %v1918 = vand.u32 %v102, 4294901760
    %1919 = vmatmul.f32.gmra.mxu0 %v1918
    %v1920 = vpop.f32.mrf.mxu0
    %v1921 = vadd.f32 %v1830, %v1920
    %v1922 = vand.u32 %v105, 4294901760
    %1923 = vmatmul.f32.gmra.mxu0 %v1922
    %v1924 = vpop.f32.mrf.mxu0
    %v1925 = vadd.f32 %v1836, %v1924
    %v1926 = vand.u32 %v108, 4294901760
    %1927 = vmatmul.f32.gmra.mxu0 %v1926
    %v1928 = vpop.f32.mrf.mxu0
    %v1929 = vadd.f32 %v1842, %v1928
    %1930 = vdwg.mxu0
    %1931 = vmatpush.msra.mxu0 0.0
    %1932 = vmatpush.msra.mxu0 0.0
    %1933 = vmatpush.msra.mxu0 0.0
    %1934 = vmatpush.msra.mxu0 0.0
    %1935 = vmatpush.msra.mxu0 0.0
    %1936 = vmatpush.msra.mxu0 0.0
    %1937 = vmatpush.msra.mxu0 0.0
    %1938 = vmatpush.msra.mxu0 0.0
    %1939 = vmatpush.msra.mxu0 0.0
    %1940 = vmatpush.msra.mxu0 0.0
    %1941 = vmatpush.msra.mxu0 0.0
    %1942 = vmatpush.msra.mxu0 0.0
    %1943 = vmatpush.msra.mxu0 0.0
    %1944 = vmatpush.msra.mxu0 0.0
    %v1945 = vand.u32 %v1385, 4294901760
    %1946 = vmatpush.msra.mxu0 %v1945
    %v1947 = vand.u32 %v1384, 4294901760
    %1948 = vmatpush.msra.mxu0 %v1947
    %v1949 = vand.u32 %v63, 4294901760
    %1950 = vmatmul.f32.gmra.mxu0 %v1949
    %v1951 = vpop.f32.mrf.mxu0
    %v1952 = vadd.f32 %v1869, %v1951
    %v1953 = vand.u32 %v66, 4294901760
    %1954 = vmatmul.f32.gmra.mxu0 %v1953
    %v1955 = vpop.f32.mrf.mxu0
    %v1956 = vadd.f32 %v1873, %v1955
    %v1957 = vand.u32 %v69, 4294901760
    %1958 = vmatmul.f32.gmra.mxu0 %v1957
    %v1959 = vpop.f32.mrf.mxu0
    %v1960 = vadd.f32 %v1877, %v1959
    %v1961 = vand.u32 %v72, 4294901760
    %1962 = vmatmul.f32.gmra.mxu0 %v1961
    %v1963 = vpop.f32.mrf.mxu0
    %v1964 = vadd.f32 %v1881, %v1963
    %v1965 = vand.u32 %v75, 4294901760
    %1966 = vmatmul.f32.gmra.mxu0 %v1965
    %v1967 = vpop.f32.mrf.mxu0
    %v1968 = vadd.f32 %v1885, %v1967
    %v1969 = vand.u32 %v78, 4294901760
    %1970 = vmatmul.f32.gmra.mxu0 %v1969
    %v1971 = vpop.f32.mrf.mxu0
    %v1972 = vadd.f32 %v1889, %v1971
    %v1973 = vand.u32 %v81, 4294901760
    %1974 = vmatmul.f32.gmra.mxu0 %v1973
    %v1975 = vpop.f32.mrf.mxu0
    %v1976 = vadd.f32 %v1893, %v1975
    %v1977 = vand.u32 %v84, 4294901760
    %1978 = vmatmul.f32.gmra.mxu0 %v1977
    %v1979 = vpop.f32.mrf.mxu0
    %v1980 = vadd.f32 %v1897, %v1979
    %v1981 = vand.u32 %v87, 4294901760
    %1982 = vmatmul.f32.gmra.mxu0 %v1981
    %v1983 = vpop.f32.mrf.mxu0
    %v1984 = vadd.f32 %v1901, %v1983
    %v1985 = vand.u32 %v90, 4294901760
    %1986 = vmatmul.f32.gmra.mxu0 %v1985
    %v1987 = vpop.f32.mrf.mxu0
    %v1988 = vadd.f32 %v1905, %v1987
    %v1989 = vand.u32 %v93, 4294901760
    %1990 = vmatmul.f32.gmra.mxu0 %v1989
    %v1991 = vpop.f32.mrf.mxu0
    %v1992 = vadd.f32 %v1909, %v1991
    %v1993 = vand.u32 %v96, 4294901760
    %1994 = vmatmul.f32.gmra.mxu0 %v1993
    %v1995 = vpop.f32.mrf.mxu0
    %v1996 = vadd.f32 %v1913, %v1995
    %v1997 = vand.u32 %v99, 4294901760
    %1998 = vmatmul.f32.gmra.mxu0 %v1997
    %v1999 = vpop.f32.mrf.mxu0
    %v2000 = vadd.f32 %v1917, %v1999
    %v2001 = vand.u32 %v102, 4294901760
    %2002 = vmatmul.f32.gmra.mxu0 %v2001
    %v2003 = vpop.f32.mrf.mxu0
    %v2004 = vadd.f32 %v1921, %v2003
    %v2005 = vand.u32 %v105, 4294901760
    %2006 = vmatmul.f32.gmra.mxu0 %v2005
    %v2007 = vpop.f32.mrf.mxu0
    %v2008 = vadd.f32 %v1925, %v2007
    %v2009 = vand.u32 %v108, 4294901760
    %2010 = vmatmul.f32.gmra.mxu0 %v2009
    %v2011 = vpop.f32.mrf.mxu0
    %v2012 = vadd.f32 %v1929, %v2011
    %2013 = vdwg.mxu0
    %v2014 = vmax.f32 %v1952, 0.0
    %v2015 = vmax.f32 %v1956, 0.0
    %v2016 = vmax.f32 %v1960, 0.0
    %v2017 = vmax.f32 %v1964, 0.0
    %v2018 = vmax.f32 %v1968, 0.0
    %v2019 = vmax.f32 %v1972, 0.0
    %v2020 = vmax.f32 %v1976, 0.0
    %v2021 = vmax.f32 %v1980, 0.0
    %v2022 = vmax.f32 %v1984, 0.0
    %v2023 = vmax.f32 %v1988, 0.0
    %v2024 = vmax.f32 %v1992, 0.0
    %v2025 = vmax.f32 %v1996, 0.0
    %v2026 = vmax.f32 %v2000, 0.0
    %v2027 = vmax.f32 %v2004, 0.0
    %v2028 = vmax.f32 %v2008, 0.0
    %v2029 = vmax.f32 %v2012, 0.0
    %v2030 = vld [vmem:[%s8] sm:$0xff]
    %v2031 = vld [vmem:[%s8 + $0x8] sm:$0xff]
    %v2032 = vld [vmem:[%s8 + $0x10] sm:$0xff]
    %v2033 = vld [vmem:[%s8 + $0x18] sm:$0xff]
    %s2034 = sld [smem:[#allocation2]]
    %v2035 = vstv %s2034
    %vm2036 = vcmask 261120
    %v2038 = vsel %vm2036, %v2014, 0
    %v2041 = vsel %vm2036, %v2015, 0
    %v2044 = vsel %vm2036, %v2016, 0
    %v2047 = vsel %vm2036, %v2017, 0
    %v2050 = vsel %vm2036, %v2018, 0
    %v2053 = vsel %vm2036, %v2019, 0
    %v2056 = vsel %vm2036, %v2020, 0
    %v2059 = vsel %vm2036, %v2021, 0
    %v2062 = vsel %vm2036, %v2022, 0
    %v2065 = vsel %vm2036, %v2023, 0
    %v2068 = vsel %vm2036, %v2024, 0
    %v2071 = vsel %vm2036, %v2025, 0
    %v2074 = vsel %vm2036, %v2026, 0
    %v2077 = vsel %vm2036, %v2027, 0
    %v2080 = vsel %vm2036, %v2028, 0
    %v2083 = vsel %vm2036, %v2029, 0
    %2085 = vmatpush.msra.mxu0 0.0
    %2086 = vmatpush.msra.mxu0 0.0
    %2087 = vmatpush.msra.mxu0 0.0
    %2088 = vmatpush.msra.mxu0 0.0
    %2089 = vmatpush.msra.mxu0 0.0
    %2090 = vmatpush.msra.mxu0 0.0
    %2091 = vmatpush.msra.mxu0 0.0
    %2092 = vmatpush.msra.mxu0 0.0
    %2093 = vmatpush.msra.mxu0 0.0
    %2094 = vmatpush.msra.mxu0 0.0
    %2095 = vmatpush.msra.mxu0 0.0
    %2096 = vmatpush.msra.mxu0 0.0
    %v2097 = vand.u32 %v2033, 4294901760
    %2098 = vmatpush.msra.mxu0 %v2097
    %v2099 = vand.u32 %v2032, 4294901760
    %2100 = vmatpush.msra.mxu0 %v2099
    %v2101 = vand.u32 %v2031, 4294901760
    %2102 = vmatpush.msra.mxu0 %v2101
    %v2103 = vand.u32 %v2030, 4294901760
    %2104 = vmatpush.msra.mxu0 %v2103
    %v2105 = vand.u32 %v2038, 4294901760
    %v2106 = vsub.f32 %v2038, %v2105
    %v2107 = vand.u32 %v2106, 4294901760
    %v2108 = vsub.f32 %v2106, %v2107
    %v2109 = vand.u32 %v2108, 4294901760
    %2110 = vmatmul.f32.gmra.mxu0 %v2109
    %v2111 = vpop.f32.mrf.mxu0
    %v2112 = vadd.f32 %v2035, %v2111
    %v2113 = vand.u32 %v2041, 4294901760
    %v2114 = vsub.f32 %v2041, %v2113
    %v2115 = vand.u32 %v2114, 4294901760
    %v2116 = vsub.f32 %v2114, %v2115
    %v2117 = vand.u32 %v2116, 4294901760
    %2118 = vmatmul.f32.gmra.mxu0 %v2117
    %v2119 = vpop.f32.mrf.mxu0
    %v2120 = vadd.f32 %v2035, %v2119
    %v2121 = vand.u32 %v2044, 4294901760
    %v2122 = vsub.f32 %v2044, %v2121
    %v2123 = vand.u32 %v2122, 4294901760
    %v2124 = vsub.f32 %v2122, %v2123
    %v2125 = vand.u32 %v2124, 4294901760
    %2126 = vmatmul.f32.gmra.mxu0 %v2125
    %v2127 = vpop.f32.mrf.mxu0
    %v2128 = vadd.f32 %v2035, %v2127
    %v2129 = vand.u32 %v2047, 4294901760
    %v2130 = vsub.f32 %v2047, %v2129
    %v2131 = vand.u32 %v2130, 4294901760
    %v2132 = vsub.f32 %v2130, %v2131
    %v2133 = vand.u32 %v2132, 4294901760
    %2134 = vmatmul.f32.gmra.mxu0 %v2133
    %v2135 = vpop.f32.mrf.mxu0
    %v2136 = vadd.f32 %v2035, %v2135
    %v2137 = vand.u32 %v2050, 4294901760
    %v2138 = vsub.f32 %v2050, %v2137
    %v2139 = vand.u32 %v2138, 4294901760
    %v2140 = vsub.f32 %v2138, %v2139
    %v2141 = vand.u32 %v2140, 4294901760
    %2142 = vmatmul.f32.gmra.mxu0 %v2141
    %v2143 = vpop.f32.mrf.mxu0
    %v2144 = vadd.f32 %v2035, %v2143
    %v2145 = vand.u32 %v2053, 4294901760
    %v2146 = vsub.f32 %v2053, %v2145
    %v2147 = vand.u32 %v2146, 4294901760
    %v2148 = vsub.f32 %v2146, %v2147
    %v2149 = vand.u32 %v2148, 4294901760
    %2150 = vmatmul.f32.gmra.mxu0 %v2149
    %v2151 = vpop.f32.mrf.mxu0
    %v2152 = vadd.f32 %v2035, %v2151
    %v2153 = vand.u32 %v2056, 4294901760
    %v2154 = vsub.f32 %v2056, %v2153
    %v2155 = vand.u32 %v2154, 4294901760
    %v2156 = vsub.f32 %v2154, %v2155
    %v2157 = vand.u32 %v2156, 4294901760
    %2158 = vmatmul.f32.gmra.mxu0 %v2157
    %v2159 = vpop.f32.mrf.mxu0
    %v2160 = vadd.f32 %v2035, %v2159
    %v2161 = vand.u32 %v2059, 4294901760
    %v2162 = vsub.f32 %v2059, %v2161
    %v2163 = vand.u32 %v2162, 4294901760
    %v2164 = vsub.f32 %v2162, %v2163
    %v2165 = vand.u32 %v2164, 4294901760
    %2166 = vmatmul.f32.gmra.mxu0 %v2165
    %v2167 = vpop.f32.mrf.mxu0
    %v2168 = vadd.f32 %v2035, %v2167
    %v2169 = vand.u32 %v2062, 4294901760
    %v2170 = vsub.f32 %v2062, %v2169
    %v2171 = vand.u32 %v2170, 4294901760
    %v2172 = vsub.f32 %v2170, %v2171
    %v2173 = vand.u32 %v2172, 4294901760
    %2174 = vmatmul.f32.gmra.mxu0 %v2173
    %v2175 = vpop.f32.mrf.mxu0
    %v2176 = vadd.f32 %v2035, %v2175
    %v2177 = vand.u32 %v2065, 4294901760
    %v2178 = vsub.f32 %v2065, %v2177
    %v2179 = vand.u32 %v2178, 4294901760
    %v2180 = vsub.f32 %v2178, %v2179
    %v2181 = vand.u32 %v2180, 4294901760
    %2182 = vmatmul.f32.gmra.mxu0 %v2181
    %v2183 = vpop.f32.mrf.mxu0
    %v2184 = vadd.f32 %v2035, %v2183
    %v2185 = vand.u32 %v2068, 4294901760
    %v2186 = vsub.f32 %v2068, %v2185
    %v2187 = vand.u32 %v2186, 4294901760
    %v2188 = vsub.f32 %v2186, %v2187
    %v2189 = vand.u32 %v2188, 4294901760
    %2190 = vmatmul.f32.gmra.mxu0 %v2189
    %v2191 = vpop.f32.mrf.mxu0
    %v2192 = vadd.f32 %v2035, %v2191
    %v2193 = vand.u32 %v2071, 4294901760
    %v2194 = vsub.f32 %v2071, %v2193
    %v2195 = vand.u32 %v2194, 4294901760
    %v2196 = vsub.f32 %v2194, %v2195
    %v2197 = vand.u32 %v2196, 4294901760
    %2198 = vmatmul.f32.gmra.mxu0 %v2197
    %v2199 = vpop.f32.mrf.mxu0
    %v2200 = vadd.f32 %v2035, %v2199
    %v2201 = vand.u32 %v2074, 4294901760
    %v2202 = vsub.f32 %v2074, %v2201
    %v2203 = vand.u32 %v2202, 4294901760
    %v2204 = vsub.f32 %v2202, %v2203
    %v2205 = vand.u32 %v2204, 4294901760
    %2206 = vmatmul.f32.gmra.mxu0 %v2205
    %v2207 = vpop.f32.mrf.mxu0
    %v2208 = vadd.f32 %v2035, %v2207
    %v2209 = vand.u32 %v2077, 4294901760
    %v2210 = vsub.f32 %v2077, %v2209
    %v2211 = vand.u32 %v2210, 4294901760
    %v2212 = vsub.f32 %v2210, %v2211
    %v2213 = vand.u32 %v2212, 4294901760
    %2214 = vmatmul.f32.gmra.mxu0 %v2213
    %v2215 = vpop.f32.mrf.mxu0
    %v2216 = vadd.f32 %v2035, %v2215
    %v2217 = vand.u32 %v2080, 4294901760
    %v2218 = vsub.f32 %v2080, %v2217
    %v2219 = vand.u32 %v2218, 4294901760
    %v2220 = vsub.f32 %v2218, %v2219
    %v2221 = vand.u32 %v2220, 4294901760
    %2222 = vmatmul.f32.gmra.mxu0 %v2221
    %v2223 = vpop.f32.mrf.mxu0
    %v2224 = vadd.f32 %v2035, %v2223
    %v2225 = vand.u32 %v2083, 4294901760
    %v2226 = vsub.f32 %v2083, %v2225
    %v2227 = vand.u32 %v2226, 4294901760
    %v2228 = vsub.f32 %v2226, %v2227
    %v2229 = vand.u32 %v2228, 4294901760
    %2230 = vmatmul.f32.gmra.mxu0 %v2229
    %v2231 = vpop.f32.mrf.mxu0
    %v2232 = vadd.f32 %v2035, %v2231
    %2233 = vdwg.mxu0
    %2234 = vmatpush.msra.mxu0 0.0
    %2235 = vmatpush.msra.mxu0 0.0
    %2236 = vmatpush.msra.mxu0 0.0
    %2237 = vmatpush.msra.mxu0 0.0
    %2238 = vmatpush.msra.mxu0 0.0
    %2239 = vmatpush.msra.mxu0 0.0
    %2240 = vmatpush.msra.mxu0 0.0
    %2241 = vmatpush.msra.mxu0 0.0
    %2242 = vmatpush.msra.mxu0 0.0
    %2243 = vmatpush.msra.mxu0 0.0
    %2244 = vmatpush.msra.mxu0 0.0
    %2245 = vmatpush.msra.mxu0 0.0
    %v2246 = vand.u32 %v2033, 4294901760
    %v2247 = vsub.f32 %v2033, %v2246
    %v2248 = vand.u32 %v2247, 4294901760
    %v2249 = vsub.f32 %v2247, %v2248
    %v2250 = vand.u32 %v2249, 4294901760
    %2251 = vmatpush.msra.mxu0 %v2250
    %v2252 = vand.u32 %v2032, 4294901760
    %v2253 = vsub.f32 %v2032, %v2252
    %v2254 = vand.u32 %v2253, 4294901760
    %v2255 = vsub.f32 %v2253, %v2254
    %v2256 = vand.u32 %v2255, 4294901760
    %2257 = vmatpush.msra.mxu0 %v2256
    %v2258 = vand.u32 %v2031, 4294901760
    %v2259 = vsub.f32 %v2031, %v2258
    %v2260 = vand.u32 %v2259, 4294901760
    %v2261 = vsub.f32 %v2259, %v2260
    %v2262 = vand.u32 %v2261, 4294901760
    %2263 = vmatpush.msra.mxu0 %v2262
    %v2264 = vand.u32 %v2030, 4294901760
    %v2265 = vsub.f32 %v2030, %v2264
    %v2266 = vand.u32 %v2265, 4294901760
    %v2267 = vsub.f32 %v2265, %v2266
    %v2268 = vand.u32 %v2267, 4294901760
    %2269 = vmatpush.msra.mxu0 %v2268
    %v2270 = vand.u32 %v2038, 4294901760
    %2271 = vmatmul.f32.gmra.mxu0 %v2270
    %v2272 = vpop.f32.mrf.mxu0
    %v2273 = vadd.f32 %v2112, %v2272
    %v2274 = vand.u32 %v2041, 4294901760
    %2275 = vmatmul.f32.gmra.mxu0 %v2274
    %v2276 = vpop.f32.mrf.mxu0
    %v2277 = vadd.f32 %v2120, %v2276
    %v2278 = vand.u32 %v2044, 4294901760
    %2279 = vmatmul.f32.gmra.mxu0 %v2278
    %v2280 = vpop.f32.mrf.mxu0
    %v2281 = vadd.f32 %v2128, %v2280
    %v2282 = vand.u32 %v2047, 4294901760
    %2283 = vmatmul.f32.gmra.mxu0 %v2282
    %v2284 = vpop.f32.mrf.mxu0
    %v2285 = vadd.f32 %v2136, %v2284
    %v2286 = vand.u32 %v2050, 4294901760
    %2287 = vmatmul.f32.gmra.mxu0 %v2286
    %v2288 = vpop.f32.mrf.mxu0
    %v2289 = vadd.f32 %v2144, %v2288
    %v2290 = vand.u32 %v2053, 4294901760
    %2291 = vmatmul.f32.gmra.mxu0 %v2290
    %v2292 = vpop.f32.mrf.mxu0
    %v2293 = vadd.f32 %v2152, %v2292
    %v2294 = vand.u32 %v2056, 4294901760
    %2295 = vmatmul.f32.gmra.mxu0 %v2294
    %v2296 = vpop.f32.mrf.mxu0
    %v2297 = vadd.f32 %v2160, %v2296
    %v2298 = vand.u32 %v2059, 4294901760
    %2299 = vmatmul.f32.gmra.mxu0 %v2298
    %v2300 = vpop.f32.mrf.mxu0
    %v2301 = vadd.f32 %v2168, %v2300
    %v2302 = vand.u32 %v2062, 4294901760
    %2303 = vmatmul.f32.gmra.mxu0 %v2302
    %v2304 = vpop.f32.mrf.mxu0
    %v2305 = vadd.f32 %v2176, %v2304
    %v2306 = vand.u32 %v2065, 4294901760
    %2307 = vmatmul.f32.gmra.mxu0 %v2306
    %v2308 = vpop.f32.mrf.mxu0
    %v2309 = vadd.f32 %v2184, %v2308
    %v2310 = vand.u32 %v2068, 4294901760
    %2311 = vmatmul.f32.gmra.mxu0 %v2310
    %v2312 = vpop.f32.mrf.mxu0
    %v2313 = vadd.f32 %v2192, %v2312
    %v2314 = vand.u32 %v2071, 4294901760
    %2315 = vmatmul.f32.gmra.mxu0 %v2314
    %v2316 = vpop.f32.mrf.mxu0
    %v2317 = vadd.f32 %v2200, %v2316
    %v2318 = vand.u32 %v2074, 4294901760
    %2319 = vmatmul.f32.gmra.mxu0 %v2318
    %v2320 = vpop.f32.mrf.mxu0
    %v2321 = vadd.f32 %v2208, %v2320
    %v2322 = vand.u32 %v2077, 4294901760
    %2323 = vmatmul.f32.gmra.mxu0 %v2322
    %v2324 = vpop.f32.mrf.mxu0
    %v2325 = vadd.f32 %v2216, %v2324
    %v2326 = vand.u32 %v2080, 4294901760
    %2327 = vmatmul.f32.gmra.mxu0 %v2326
    %v2328 = vpop.f32.mrf.mxu0
    %v2329 = vadd.f32 %v2224, %v2328
    %v2330 = vand.u32 %v2083, 4294901760
    %2331 = vmatmul.f32.gmra.mxu0 %v2330
    %v2332 = vpop.f32.mrf.mxu0
    %v2333 = vadd.f32 %v2232, %v2332
    %2334 = vdwg.mxu0
    %2335 = vmatpush.msra.mxu0 0.0
    %2336 = vmatpush.msra.mxu0 0.0
    %2337 = vmatpush.msra.mxu0 0.0
    %2338 = vmatpush.msra.mxu0 0.0
    %2339 = vmatpush.msra.mxu0 0.0
    %2340 = vmatpush.msra.mxu0 0.0
    %2341 = vmatpush.msra.mxu0 0.0
    %2342 = vmatpush.msra.mxu0 0.0
    %2343 = vmatpush.msra.mxu0 0.0
    %2344 = vmatpush.msra.mxu0 0.0
    %2345 = vmatpush.msra.mxu0 0.0
    %2346 = vmatpush.msra.mxu0 0.0
    %v2347 = vand.u32 %v2033, 4294901760
    %v2348 = vsub.f32 %v2033, %v2347
    %2349 = vmatpush.msra.mxu0 %v2348
    %v2350 = vand.u32 %v2032, 4294901760
    %v2351 = vsub.f32 %v2032, %v2350
    %2352 = vmatpush.msra.mxu0 %v2351
    %v2353 = vand.u32 %v2031, 4294901760
    %v2354 = vsub.f32 %v2031, %v2353
    %2355 = vmatpush.msra.mxu0 %v2354
    %v2356 = vand.u32 %v2030, 4294901760
    %v2357 = vsub.f32 %v2030, %v2356
    %2358 = vmatpush.msra.mxu0 %v2357
    %v2359 = vand.u32 %v2038, 4294901760
    %v2360 = vsub.f32 %v2038, %v2359
    %2361 = vmatmul.f32.gmra.mxu0 %v2360
    %v2362 = vpop.f32.mrf.mxu0
    %v2363 = vadd.f32 %v2273, %v2362
    %v2364 = vand.u32 %v2041, 4294901760
    %v2365 = vsub.f32 %v2041, %v2364
    %2366 = vmatmul.f32.gmra.mxu0 %v2365
    %v2367 = vpop.f32.mrf.mxu0
    %v2368 = vadd.f32 %v2277, %v2367
    %v2369 = vand.u32 %v2044, 4294901760
    %v2370 = vsub.f32 %v2044, %v2369
    %2371 = vmatmul.f32.gmra.mxu0 %v2370
    %v2372 = vpop.f32.mrf.mxu0
    %v2373 = vadd.f32 %v2281, %v2372
    %v2374 = vand.u32 %v2047, 4294901760
    %v2375 = vsub.f32 %v2047, %v2374
    %2376 = vmatmul.f32.gmra.mxu0 %v2375
    %v2377 = vpop.f32.mrf.mxu0
    %v2378 = vadd.f32 %v2285, %v2377
    %v2379 = vand.u32 %v2050, 4294901760
    %v2380 = vsub.f32 %v2050, %v2379
    %2381 = vmatmul.f32.gmra.mxu0 %v2380
    %v2382 = vpop.f32.mrf.mxu0
    %v2383 = vadd.f32 %v2289, %v2382
    %v2384 = vand.u32 %v2053, 4294901760
    %v2385 = vsub.f32 %v2053, %v2384
    %2386 = vmatmul.f32.gmra.mxu0 %v2385
    %v2387 = vpop.f32.mrf.mxu0
    %v2388 = vadd.f32 %v2293, %v2387
    %v2389 = vand.u32 %v2056, 4294901760
    %v2390 = vsub.f32 %v2056, %v2389
    %2391 = vmatmul.f32.gmra.mxu0 %v2390
    %v2392 = vpop.f32.mrf.mxu0
    %v2393 = vadd.f32 %v2297, %v2392
    %v2394 = vand.u32 %v2059, 4294901760
    %v2395 = vsub.f32 %v2059, %v2394
    %2396 = vmatmul.f32.gmra.mxu0 %v2395
    %v2397 = vpop.f32.mrf.mxu0
    %v2398 = vadd.f32 %v2301, %v2397
    %v2399 = vand.u32 %v2062, 4294901760
    %v2400 = vsub.f32 %v2062, %v2399
    %2401 = vmatmul.f32.gmra.mxu0 %v2400
    %v2402 = vpop.f32.mrf.mxu0
    %v2403 = vadd.f32 %v2305, %v2402
    %v2404 = vand.u32 %v2065, 4294901760
    %v2405 = vsub.f32 %v2065, %v2404
    %2406 = vmatmul.f32.gmra.mxu0 %v2405
    %v2407 = vpop.f32.mrf.mxu0
    %v2408 = vadd.f32 %v2309, %v2407
    %v2409 = vand.u32 %v2068, 4294901760
    %v2410 = vsub.f32 %v2068, %v2409
    %2411 = vmatmul.f32.gmra.mxu0 %v2410
    %v2412 = vpop.f32.mrf.mxu0
    %v2413 = vadd.f32 %v2313, %v2412
    %v2414 = vand.u32 %v2071, 4294901760
    %v2415 = vsub.f32 %v2071, %v2414
    %2416 = vmatmul.f32.gmra.mxu0 %v2415
    %v2417 = vpop.f32.mrf.mxu0
    %v2418 = vadd.f32 %v2317, %v2417
    %v2419 = vand.u32 %v2074, 4294901760
    %v2420 = vsub.f32 %v2074, %v2419
    %2421 = vmatmul.f32.gmra.mxu0 %v2420
    %v2422 = vpop.f32.mrf.mxu0
    %v2423 = vadd.f32 %v2321, %v2422
    %v2424 = vand.u32 %v2077, 4294901760
    %v2425 = vsub.f32 %v2077, %v2424
    %2426 = vmatmul.f32.gmra.mxu0 %v2425
    %v2427 = vpop.f32.mrf.mxu0
    %v2428 = vadd.f32 %v2325, %v2427
    %v2429 = vand.u32 %v2080, 4294901760
    %v2430 = vsub.f32 %v2080, %v2429
    %2431 = vmatmul.f32.gmra.mxu0 %v2430
    %v2432 = vpop.f32.mrf.mxu0
    %v2433 = vadd.f32 %v2329, %v2432
    %v2434 = vand.u32 %v2083, 4294901760
    %v2435 = vsub.f32 %v2083, %v2434
    %2436 = vmatmul.f32.gmra.mxu0 %v2435
    %v2437 = vpop.f32.mrf.mxu0
    %v2438 = vadd.f32 %v2333, %v2437
    %2439 = vdwg.mxu0
    %2440 = vmatpush.msra.mxu0 0.0
    %2441 = vmatpush.msra.mxu0 0.0
    %2442 = vmatpush.msra.mxu0 0.0
    %2443 = vmatpush.msra.mxu0 0.0
    %2444 = vmatpush.msra.mxu0 0.0
    %2445 = vmatpush.msra.mxu0 0.0
    %2446 = vmatpush.msra.mxu0 0.0
    %2447 = vmatpush.msra.mxu0 0.0
    %2448 = vmatpush.msra.mxu0 0.0
    %2449 = vmatpush.msra.mxu0 0.0
    %2450 = vmatpush.msra.mxu0 0.0
    %2451 = vmatpush.msra.mxu0 0.0
    %v2452 = vand.u32 %v2033, 4294901760
    %2453 = vmatpush.msra.mxu0 %v2452
    %v2454 = vand.u32 %v2032, 4294901760
    %2455 = vmatpush.msra.mxu0 %v2454
    %v2456 = vand.u32 %v2031, 4294901760
    %2457 = vmatpush.msra.mxu0 %v2456
    %v2458 = vand.u32 %v2030, 4294901760
    %2459 = vmatpush.msra.mxu0 %v2458
    %v2460 = vand.u32 %v2038, 4294901760
    %v2461 = vsub.f32 %v2038, %v2460
    %v2462 = vand.u32 %v2461, 4294901760
    %2463 = vmatmul.f32.gmra.mxu0 %v2462
    %v2464 = vpop.f32.mrf.mxu0
    %v2465 = vadd.f32 %v2363, %v2464
    %v2466 = vand.u32 %v2041, 4294901760
    %v2467 = vsub.f32 %v2041, %v2466
    %v2468 = vand.u32 %v2467, 4294901760
    %2469 = vmatmul.f32.gmra.mxu0 %v2468
    %v2470 = vpop.f32.mrf.mxu0
    %v2471 = vadd.f32 %v2368, %v2470
    %v2472 = vand.u32 %v2044, 4294901760
    %v2473 = vsub.f32 %v2044, %v2472
    %v2474 = vand.u32 %v2473, 4294901760
    %2475 = vmatmul.f32.gmra.mxu0 %v2474
    %v2476 = vpop.f32.mrf.mxu0
    %v2477 = vadd.f32 %v2373, %v2476
    %v2478 = vand.u32 %v2047, 4294901760
    %v2479 = vsub.f32 %v2047, %v2478
    %v2480 = vand.u32 %v2479, 4294901760
    %2481 = vmatmul.f32.gmra.mxu0 %v2480
    %v2482 = vpop.f32.mrf.mxu0
    %v2483 = vadd.f32 %v2378, %v2482
    %v2484 = vand.u32 %v2050, 4294901760
    %v2485 = vsub.f32 %v2050, %v2484
    %v2486 = vand.u32 %v2485, 4294901760
    %2487 = vmatmul.f32.gmra.mxu0 %v2486
    %v2488 = vpop.f32.mrf.mxu0
    %v2489 = vadd.f32 %v2383, %v2488
    %v2490 = vand.u32 %v2053, 4294901760
    %v2491 = vsub.f32 %v2053, %v2490
    %v2492 = vand.u32 %v2491, 4294901760
    %2493 = vmatmul.f32.gmra.mxu0 %v2492
    %v2494 = vpop.f32.mrf.mxu0
    %v2495 = vadd.f32 %v2388, %v2494
    %v2496 = vand.u32 %v2056, 4294901760
    %v2497 = vsub.f32 %v2056, %v2496
    %v2498 = vand.u32 %v2497, 4294901760
    %2499 = vmatmul.f32.gmra.mxu0 %v2498
    %v2500 = vpop.f32.mrf.mxu0
    %v2501 = vadd.f32 %v2393, %v2500
    %v2502 = vand.u32 %v2059, 4294901760
    %v2503 = vsub.f32 %v2059, %v2502
    %v2504 = vand.u32 %v2503, 4294901760
    %2505 = vmatmul.f32.gmra.mxu0 %v2504
    %v2506 = vpop.f32.mrf.mxu0
    %v2507 = vadd.f32 %v2398, %v2506
    %v2508 = vand.u32 %v2062, 4294901760
    %v2509 = vsub.f32 %v2062, %v2508
    %v2510 = vand.u32 %v2509, 4294901760
    %2511 = vmatmul.f32.gmra.mxu0 %v2510
    %v2512 = vpop.f32.mrf.mxu0
    %v2513 = vadd.f32 %v2403, %v2512
    %v2514 = vand.u32 %v2065, 4294901760
    %v2515 = vsub.f32 %v2065, %v2514
    %v2516 = vand.u32 %v2515, 4294901760
    %2517 = vmatmul.f32.gmra.mxu0 %v2516
    %v2518 = vpop.f32.mrf.mxu0
    %v2519 = vadd.f32 %v2408, %v2518
    %v2520 = vand.u32 %v2068, 4294901760
    %v2521 = vsub.f32 %v2068, %v2520
    %v2522 = vand.u32 %v2521, 4294901760
    %2523 = vmatmul.f32.gmra.mxu0 %v2522
    %v2524 = vpop.f32.mrf.mxu0
    %v2525 = vadd.f32 %v2413, %v2524
    %v2526 = vand.u32 %v2071, 4294901760
    %v2527 = vsub.f32 %v2071, %v2526
    %v2528 = vand.u32 %v2527, 4294901760
    %2529 = vmatmul.f32.gmra.mxu0 %v2528
    %v2530 = vpop.f32.mrf.mxu0
    %v2531 = vadd.f32 %v2418, %v2530
    %v2532 = vand.u32 %v2074, 4294901760
    %v2533 = vsub.f32 %v2074, %v2532
    %v2534 = vand.u32 %v2533, 4294901760
    %2535 = vmatmul.f32.gmra.mxu0 %v2534
    %v2536 = vpop.f32.mrf.mxu0
    %v2537 = vadd.f32 %v2423, %v2536
    %v2538 = vand.u32 %v2077, 4294901760
    %v2539 = vsub.f32 %v2077, %v2538
    %v2540 = vand.u32 %v2539, 4294901760
    %2541 = vmatmul.f32.gmra.mxu0 %v2540
    %v2542 = vpop.f32.mrf.mxu0
    %v2543 = vadd.f32 %v2428, %v2542
    %v2544 = vand.u32 %v2080, 4294901760
    %v2545 = vsub.f32 %v2080, %v2544
    %v2546 = vand.u32 %v2545, 4294901760
    %2547 = vmatmul.f32.gmra.mxu0 %v2546
    %v2548 = vpop.f32.mrf.mxu0
    %v2549 = vadd.f32 %v2433, %v2548
    %v2550 = vand.u32 %v2083, 4294901760
    %v2551 = vsub.f32 %v2083, %v2550
    %v2552 = vand.u32 %v2551, 4294901760
    %2553 = vmatmul.f32.gmra.mxu0 %v2552
    %v2554 = vpop.f32.mrf.mxu0
    %v2555 = vadd.f32 %v2438, %v2554
    %2556 = vdwg.mxu0
    %2557 = vmatpush.msra.mxu0 0.0
    %2558 = vmatpush.msra.mxu0 0.0
    %2559 = vmatpush.msra.mxu0 0.0
    %2560 = vmatpush.msra.mxu0 0.0
    %2561 = vmatpush.msra.mxu0 0.0
    %2562 = vmatpush.msra.mxu0 0.0
    %2563 = vmatpush.msra.mxu0 0.0
    %2564 = vmatpush.msra.mxu0 0.0
    %2565 = vmatpush.msra.mxu0 0.0
    %2566 = vmatpush.msra.mxu0 0.0
    %2567 = vmatpush.msra.mxu0 0.0
    %2568 = vmatpush.msra.mxu0 0.0
    %v2569 = vand.u32 %v2033, 4294901760
    %v2570 = vsub.f32 %v2033, %v2569
    %v2571 = vand.u32 %v2570, 4294901760
    %2572 = vmatpush.msra.mxu0 %v2571
    %v2573 = vand.u32 %v2032, 4294901760
    %v2574 = vsub.f32 %v2032, %v2573
    %v2575 = vand.u32 %v2574, 4294901760
    %2576 = vmatpush.msra.mxu0 %v2575
    %v2577 = vand.u32 %v2031, 4294901760
    %v2578 = vsub.f32 %v2031, %v2577
    %v2579 = vand.u32 %v2578, 4294901760
    %2580 = vmatpush.msra.mxu0 %v2579
    %v2581 = vand.u32 %v2030, 4294901760
    %v2582 = vsub.f32 %v2030, %v2581
    %v2583 = vand.u32 %v2582, 4294901760
    %2584 = vmatpush.msra.mxu0 %v2583
    %v2585 = vand.u32 %v2038, 4294901760
    %2586 = vmatmul.f32.gmra.mxu0 %v2585
    %v2587 = vpop.f32.mrf.mxu0
    %v2588 = vadd.f32 %v2465, %v2587
    %v2589 = vand.u32 %v2041, 4294901760
    %2590 = vmatmul.f32.gmra.mxu0 %v2589
    %v2591 = vpop.f32.mrf.mxu0
    %v2592 = vadd.f32 %v2471, %v2591
    %v2593 = vand.u32 %v2044, 4294901760
    %2594 = vmatmul.f32.gmra.mxu0 %v2593
    %v2595 = vpop.f32.mrf.mxu0
    %v2596 = vadd.f32 %v2477, %v2595
    %v2597 = vand.u32 %v2047, 4294901760
    %2598 = vmatmul.f32.gmra.mxu0 %v2597
    %v2599 = vpop.f32.mrf.mxu0
    %v2600 = vadd.f32 %v2483, %v2599
    %v2601 = vand.u32 %v2050, 4294901760
    %2602 = vmatmul.f32.gmra.mxu0 %v2601
    %v2603 = vpop.f32.mrf.mxu0
    %v2604 = vadd.f32 %v2489, %v2603
    %v2605 = vand.u32 %v2053, 4294901760
    %2606 = vmatmul.f32.gmra.mxu0 %v2605
    %v2607 = vpop.f32.mrf.mxu0
    %v2608 = vadd.f32 %v2495, %v2607
    %v2609 = vand.u32 %v2056, 4294901760
    %2610 = vmatmul.f32.gmra.mxu0 %v2609
    %v2611 = vpop.f32.mrf.mxu0
    %v2612 = vadd.f32 %v2501, %v2611
    %v2613 = vand.u32 %v2059, 4294901760
    %2614 = vmatmul.f32.gmra.mxu0 %v2613
    %v2615 = vpop.f32.mrf.mxu0
    %v2616 = vadd.f32 %v2507, %v2615
    %v2617 = vand.u32 %v2062, 4294901760
    %2618 = vmatmul.f32.gmra.mxu0 %v2617
    %v2619 = vpop.f32.mrf.mxu0
    %v2620 = vadd.f32 %v2513, %v2619
    %v2621 = vand.u32 %v2065, 4294901760
    %2622 = vmatmul.f32.gmra.mxu0 %v2621
    %v2623 = vpop.f32.mrf.mxu0
    %v2624 = vadd.f32 %v2519, %v2623
    %v2625 = vand.u32 %v2068, 4294901760
    %2626 = vmatmul.f32.gmra.mxu0 %v2625
    %v2627 = vpop.f32.mrf.mxu0
    %v2628 = vadd.f32 %v2525, %v2627
    %v2629 = vand.u32 %v2071, 4294901760
    %2630 = vmatmul.f32.gmra.mxu0 %v2629
    %v2631 = vpop.f32.mrf.mxu0
    %v2632 = vadd.f32 %v2531, %v2631
    %v2633 = vand.u32 %v2074, 4294901760
    %2634 = vmatmul.f32.gmra.mxu0 %v2633
    %v2635 = vpop.f32.mrf.mxu0
    %v2636 = vadd.f32 %v2537, %v2635
    %v2637 = vand.u32 %v2077, 4294901760
    %2638 = vmatmul.f32.gmra.mxu0 %v2637
    %v2639 = vpop.f32.mrf.mxu0
    %v2640 = vadd.f32 %v2543, %v2639
    %v2641 = vand.u32 %v2080, 4294901760
    %2642 = vmatmul.f32.gmra.mxu0 %v2641
    %v2643 = vpop.f32.mrf.mxu0
    %v2644 = vadd.f32 %v2549, %v2643
    %v2645 = vand.u32 %v2083, 4294901760
    %2646 = vmatmul.f32.gmra.mxu0 %v2645
    %v2647 = vpop.f32.mrf.mxu0
    %v2648 = vadd.f32 %v2555, %v2647
    %2649 = vdwg.mxu0
    %2650 = vmatpush.msra.mxu0 0.0
    %2651 = vmatpush.msra.mxu0 0.0
    %2652 = vmatpush.msra.mxu0 0.0
    %2653 = vmatpush.msra.mxu0 0.0
    %2654 = vmatpush.msra.mxu0 0.0
    %2655 = vmatpush.msra.mxu0 0.0
    %2656 = vmatpush.msra.mxu0 0.0
    %2657 = vmatpush.msra.mxu0 0.0
    %2658 = vmatpush.msra.mxu0 0.0
    %2659 = vmatpush.msra.mxu0 0.0
    %2660 = vmatpush.msra.mxu0 0.0
    %2661 = vmatpush.msra.mxu0 0.0
    %v2662 = vand.u32 %v2033, 4294901760
    %2663 = vmatpush.msra.mxu0 %v2662
    %v2664 = vand.u32 %v2032, 4294901760
    %2665 = vmatpush.msra.mxu0 %v2664
    %v2666 = vand.u32 %v2031, 4294901760
    %2667 = vmatpush.msra.mxu0 %v2666
    %v2668 = vand.u32 %v2030, 4294901760
    %2669 = vmatpush.msra.mxu0 %v2668
    %v2670 = vand.u32 %v2038, 4294901760
    %2671 = vmatmul.f32.gmra.mxu0 %v2670
    %v2672 = vpop.f32.mrf.mxu0
    %v2673 = vadd.f32 %v2588, %v2672
    %v2674 = vand.u32 %v2041, 4294901760
    %2675 = vmatmul.f32.gmra.mxu0 %v2674
    %v2676 = vpop.f32.mrf.mxu0
    %v2677 = vadd.f32 %v2592, %v2676
    %v2678 = vand.u32 %v2044, 4294901760
    %2679 = vmatmul.f32.gmra.mxu0 %v2678
    %v2680 = vpop.f32.mrf.mxu0
    %v2681 = vadd.f32 %v2596, %v2680
    %v2682 = vand.u32 %v2047, 4294901760
    %2683 = vmatmul.f32.gmra.mxu0 %v2682
    %v2684 = vpop.f32.mrf.mxu0
    %v2685 = vadd.f32 %v2600, %v2684
    %v2686 = vand.u32 %v2050, 4294901760
    %2687 = vmatmul.f32.gmra.mxu0 %v2686
    %v2688 = vpop.f32.mrf.mxu0
    %v2689 = vadd.f32 %v2604, %v2688
    %v2690 = vand.u32 %v2053, 4294901760
    %2691 = vmatmul.f32.gmra.mxu0 %v2690
    %v2692 = vpop.f32.mrf.mxu0
    %v2693 = vadd.f32 %v2608, %v2692
    %v2694 = vand.u32 %v2056, 4294901760
    %2695 = vmatmul.f32.gmra.mxu0 %v2694
    %v2696 = vpop.f32.mrf.mxu0
    %v2697 = vadd.f32 %v2612, %v2696
    %v2698 = vand.u32 %v2059, 4294901760
    %2699 = vmatmul.f32.gmra.mxu0 %v2698
    %v2700 = vpop.f32.mrf.mxu0
    %v2701 = vadd.f32 %v2616, %v2700
    %v2702 = vand.u32 %v2062, 4294901760
    %2703 = vmatmul.f32.gmra.mxu0 %v2702
    %v2704 = vpop.f32.mrf.mxu0
    %v2705 = vadd.f32 %v2620, %v2704
    %v2706 = vand.u32 %v2065, 4294901760
    %2707 = vmatmul.f32.gmra.mxu0 %v2706
    %v2708 = vpop.f32.mrf.mxu0
    %v2709 = vadd.f32 %v2624, %v2708
    %v2710 = vand.u32 %v2068, 4294901760
    %2711 = vmatmul.f32.gmra.mxu0 %v2710
    %v2712 = vpop.f32.mrf.mxu0
    %v2713 = vadd.f32 %v2628, %v2712
    %v2714 = vand.u32 %v2071, 4294901760
    %2715 = vmatmul.f32.gmra.mxu0 %v2714
    %v2716 = vpop.f32.mrf.mxu0
    %v2717 = vadd.f32 %v2632, %v2716
    %v2718 = vand.u32 %v2074, 4294901760
    %2719 = vmatmul.f32.gmra.mxu0 %v2718
    %v2720 = vpop.f32.mrf.mxu0
    %v2721 = vadd.f32 %v2636, %v2720
    %v2722 = vand.u32 %v2077, 4294901760
    %2723 = vmatmul.f32.gmra.mxu0 %v2722
    %v2724 = vpop.f32.mrf.mxu0
    %v2725 = vadd.f32 %v2640, %v2724
    %v2726 = vand.u32 %v2080, 4294901760
    %2727 = vmatmul.f32.gmra.mxu0 %v2726
    %v2728 = vpop.f32.mrf.mxu0
    %v2729 = vadd.f32 %v2644, %v2728
    %v2730 = vand.u32 %v2083, 4294901760
    %2731 = vmatmul.f32.gmra.mxu0 %v2730
    %v2732 = vpop.f32.mrf.mxu0
    %v2733 = vadd.f32 %v2648, %v2732
    %2734 = vdwg.mxu0
    %v2735 = vmax.f32 %v2673, 0.0
    %v2736 = vmax.f32 %v2677, 0.0
    %v2737 = vmax.f32 %v2681, 0.0
    %v2738 = vmax.f32 %v2685, 0.0
    %v2739 = vmax.f32 %v2689, 0.0
    %v2740 = vmax.f32 %v2693, 0.0
    %v2741 = vmax.f32 %v2697, 0.0
    %v2742 = vmax.f32 %v2701, 0.0
    %v2743 = vmax.f32 %v2705, 0.0
    %v2744 = vmax.f32 %v2709, 0.0
    %v2745 = vmax.f32 %v2713, 0.0
    %v2746 = vmax.f32 %v2717, 0.0
    %v2747 = vmax.f32 %v2721, 0.0
    %v2748 = vmax.f32 %v2725, 0.0
    %v2749 = vmax.f32 %v2729, 0.0
    %v2750 = vmax.f32 %v2733, 0.0
    %v2751 = vadd.f32 %v2735, 1.0
    %v2752 = vadd.f32 %v2736, 1.0
    %v2753 = vadd.f32 %v2737, 1.0
    %v2754 = vadd.f32 %v2738, 1.0
    %v2755 = vadd.f32 %v2739, 1.0
    %v2756 = vadd.f32 %v2740, 1.0
    %v2757 = vadd.f32 %v2741, 1.0
    %v2758 = vadd.f32 %v2742, 1.0
    %v2759 = vadd.f32 %v2743, 1.0
    %v2760 = vadd.f32 %v2744, 1.0
    %v2761 = vadd.f32 %v2745, 1.0
    %v2762 = vadd.f32 %v2746, 1.0
    %v2763 = vadd.f32 %v2747, 1.0
    %v2764 = vadd.f32 %v2748, 1.0
    %v2765 = vadd.f32 %v2749, 1.0
    %v2766 = vadd.f32 %v2750, 1.0
    %v2767 = vrcp.pop %v2751
    %v2768 = vmul.f32 %v2751, %v2767
    %v2769 = vsub.f32 1.0, %v2768
    %v2770 = vmul.f32 %v2767, %v2769
    %v2771 = vadd.f32 %v2767, %v2770
    %vm2772 = vweird.f32 %v2751
    %vm2773 = vweird.f32 %v2767
    %vm2774 = vmor %vm2772, %vm2773
    %v2775 = vsel %vm2774, %v2767, %v2771
    %v2776 = vand.u32 2147483647, %v2751
    %vm2777 = vcmp.eq.f32.partialorder %v2776, 8.507059e+37
    %v2778 = vand.u32 %v2751, 2147483648
    %v2779 = vor.u32 1.1754944e-38, %v2778
    %v2780 = vsel %vm2777, %v2779, %v2775
    %v2781 = vmul.f32 1.0, %v2780
    %v2782 = vrcp.pop %v2752
    %v2783 = vmul.f32 %v2752, %v2782
    %v2784 = vsub.f32 1.0, %v2783
    %v2785 = vmul.f32 %v2782, %v2784
    %v2786 = vadd.f32 %v2782, %v2785
    %vm2787 = vweird.f32 %v2752
    %vm2788 = vweird.f32 %v2782
    %vm2789 = vmor %vm2787, %vm2788
    %v2790 = vsel %vm2789, %v2782, %v2786
    %v2791 = vand.u32 2147483647, %v2752
    %vm2792 = vcmp.eq.f32.partialorder %v2791, 8.507059e+37
    %v2793 = vand.u32 %v2752, 2147483648
    %v2794 = vor.u32 1.1754944e-38, %v2793
    %v2795 = vsel %vm2792, %v2794, %v2790
    %v2796 = vmul.f32 1.0, %v2795
    %v2797 = vrcp.pop %v2753
    %v2798 = vmul.f32 %v2753, %v2797
    %v2799 = vsub.f32 1.0, %v2798
    %v2800 = vmul.f32 %v2797, %v2799
    %v2801 = vadd.f32 %v2797, %v2800
    %vm2802 = vweird.f32 %v2753
    %vm2803 = vweird.f32 %v2797
    %vm2804 = vmor %vm2802, %vm2803
    %v2805 = vsel %vm2804, %v2797, %v2801
    %v2806 = vand.u32 2147483647, %v2753
    %vm2807 = vcmp.eq.f32.partialorder %v2806, 8.507059e+37
    %v2808 = vand.u32 %v2753, 2147483648
    %v2809 = vor.u32 1.1754944e-38, %v2808
    %v2810 = vsel %vm2807, %v2809, %v2805
    %v2811 = vmul.f32 1.0, %v2810
    %v2812 = vrcp.pop %v2754
    %v2813 = vmul.f32 %v2754, %v2812
    %v2814 = vsub.f32 1.0, %v2813
    %v2815 = vmul.f32 %v2812, %v2814
    %v2816 = vadd.f32 %v2812, %v2815
    %vm2817 = vweird.f32 %v2754
    %vm2818 = vweird.f32 %v2812
    %vm2819 = vmor %vm2817, %vm2818
    %v2820 = vsel %vm2819, %v2812, %v2816
    %v2821 = vand.u32 2147483647, %v2754
    %vm2822 = vcmp.eq.f32.partialorder %v2821, 8.507059e+37
    %v2823 = vand.u32 %v2754, 2147483648
    %v2824 = vor.u32 1.1754944e-38, %v2823
    %v2825 = vsel %vm2822, %v2824, %v2820
    %v2826 = vmul.f32 1.0, %v2825
    %v2827 = vrcp.pop %v2755
    %v2828 = vmul.f32 %v2755, %v2827
    %v2829 = vsub.f32 1.0, %v2828
    %v2830 = vmul.f32 %v2827, %v2829
    %v2831 = vadd.f32 %v2827, %v2830
    %vm2832 = vweird.f32 %v2755
    %vm2833 = vweird.f32 %v2827
    %vm2834 = vmor %vm2832, %vm2833
    %v2835 = vsel %vm2834, %v2827, %v2831
    %v2836 = vand.u32 2147483647, %v2755
    %vm2837 = vcmp.eq.f32.partialorder %v2836, 8.507059e+37
    %v2838 = vand.u32 %v2755, 2147483648
    %v2839 = vor.u32 1.1754944e-38, %v2838
    %v2840 = vsel %vm2837, %v2839, %v2835
    %v2841 = vmul.f32 1.0, %v2840
    %v2842 = vrcp.pop %v2756
    %v2843 = vmul.f32 %v2756, %v2842
    %v2844 = vsub.f32 1.0, %v2843
    %v2845 = vmul.f32 %v2842, %v2844
    %v2846 = vadd.f32 %v2842, %v2845
    %vm2847 = vweird.f32 %v2756
    %vm2848 = vweird.f32 %v2842
    %vm2849 = vmor %vm2847, %vm2848
    %v2850 = vsel %vm2849, %v2842, %v2846
    %v2851 = vand.u32 2147483647, %v2756
    %vm2852 = vcmp.eq.f32.partialorder %v2851, 8.507059e+37
    %v2853 = vand.u32 %v2756, 2147483648
    %v2854 = vor.u32 1.1754944e-38, %v2853
    %v2855 = vsel %vm2852, %v2854, %v2850
    %v2856 = vmul.f32 1.0, %v2855
    %v2857 = vrcp.pop %v2757
    %v2858 = vmul.f32 %v2757, %v2857
    %v2859 = vsub.f32 1.0, %v2858
    %v2860 = vmul.f32 %v2857, %v2859
    %v2861 = vadd.f32 %v2857, %v2860
    %vm2862 = vweird.f32 %v2757
    %vm2863 = vweird.f32 %v2857
    %vm2864 = vmor %vm2862, %vm2863
    %v2865 = vsel %vm2864, %v2857, %v2861
    %v2866 = vand.u32 2147483647, %v2757
    %vm2867 = vcmp.eq.f32.partialorder %v2866, 8.507059e+37
    %v2868 = vand.u32 %v2757, 2147483648
    %v2869 = vor.u32 1.1754944e-38, %v2868
    %v2870 = vsel %vm2867, %v2869, %v2865
    %v2871 = vmul.f32 1.0, %v2870
    %v2872 = vrcp.pop %v2758
    %v2873 = vmul.f32 %v2758, %v2872
    %v2874 = vsub.f32 1.0, %v2873
    %v2875 = vmul.f32 %v2872, %v2874
    %v2876 = vadd.f32 %v2872, %v2875
    %vm2877 = vweird.f32 %v2758
    %vm2878 = vweird.f32 %v2872
    %vm2879 = vmor %vm2877, %vm2878
    %v2880 = vsel %vm2879, %v2872, %v2876
    %v2881 = vand.u32 2147483647, %v2758
    %vm2882 = vcmp.eq.f32.partialorder %v2881, 8.507059e+37
    %v2883 = vand.u32 %v2758, 2147483648
    %v2884 = vor.u32 1.1754944e-38, %v2883
    %v2885 = vsel %vm2882, %v2884, %v2880
    %v2886 = vmul.f32 1.0, %v2885
    %v2887 = vrcp.pop %v2759
    %v2888 = vmul.f32 %v2759, %v2887
    %v2889 = vsub.f32 1.0, %v2888
    %v2890 = vmul.f32 %v2887, %v2889
    %v2891 = vadd.f32 %v2887, %v2890
    %vm2892 = vweird.f32 %v2759
    %vm2893 = vweird.f32 %v2887
    %vm2894 = vmor %vm2892, %vm2893
    %v2895 = vsel %vm2894, %v2887, %v2891
    %v2896 = vand.u32 2147483647, %v2759
    %vm2897 = vcmp.eq.f32.partialorder %v2896, 8.507059e+37
    %v2898 = vand.u32 %v2759, 2147483648
    %v2899 = vor.u32 1.1754944e-38, %v2898
    %v2900 = vsel %vm2897, %v2899, %v2895
    %v2901 = vmul.f32 1.0, %v2900
    %v2902 = vrcp.pop %v2760
    %v2903 = vmul.f32 %v2760, %v2902
    %v2904 = vsub.f32 1.0, %v2903
    %v2905 = vmul.f32 %v2902, %v2904
    %v2906 = vadd.f32 %v2902, %v2905
    %vm2907 = vweird.f32 %v2760
    %vm2908 = vweird.f32 %v2902
    %vm2909 = vmor %vm2907, %vm2908
    %v2910 = vsel %vm2909, %v2902, %v2906
    %v2911 = vand.u32 2147483647, %v2760
    %vm2912 = vcmp.eq.f32.partialorder %v2911, 8.507059e+37
    %v2913 = vand.u32 %v2760, 2147483648
    %v2914 = vor.u32 1.1754944e-38, %v2913
    %v2915 = vsel %vm2912, %v2914, %v2910
    %v2916 = vmul.f32 1.0, %v2915
    %v2917 = vrcp.pop %v2761
    %v2918 = vmul.f32 %v2761, %v2917
    %v2919 = vsub.f32 1.0, %v2918
    %v2920 = vmul.f32 %v2917, %v2919
    %v2921 = vadd.f32 %v2917, %v2920
    %vm2922 = vweird.f32 %v2761
    %vm2923 = vweird.f32 %v2917
    %vm2924 = vmor %vm2922, %vm2923
    %v2925 = vsel %vm2924, %v2917, %v2921
    %v2926 = vand.u32 2147483647, %v2761
    %vm2927 = vcmp.eq.f32.partialorder %v2926, 8.507059e+37
    %v2928 = vand.u32 %v2761, 2147483648
    %v2929 = vor.u32 1.1754944e-38, %v2928
    %v2930 = vsel %vm2927, %v2929, %v2925
    %v2931 = vmul.f32 1.0, %v2930
    %v2932 = vrcp.pop %v2762
    %v2933 = vmul.f32 %v2762, %v2932
    %v2934 = vsub.f32 1.0, %v2933
    %v2935 = vmul.f32 %v2932, %v2934
    %v2936 = vadd.f32 %v2932, %v2935
    %vm2937 = vweird.f32 %v2762
    %vm2938 = vweird.f32 %v2932
    %vm2939 = vmor %vm2937, %vm2938
    %v2940 = vsel %vm2939, %v2932, %v2936
    %v2941 = vand.u32 2147483647, %v2762
    %vm2942 = vcmp.eq.f32.partialorder %v2941, 8.507059e+37
    %v2943 = vand.u32 %v2762, 2147483648
    %v2944 = vor.u32 1.1754944e-38, %v2943
    %v2945 = vsel %vm2942, %v2944, %v2940
    %v2946 = vmul.f32 1.0, %v2945
    %v2947 = vrcp.pop %v2763
    %v2948 = vmul.f32 %v2763, %v2947
    %v2949 = vsub.f32 1.0, %v2948
    %v2950 = vmul.f32 %v2947, %v2949
    %v2951 = vadd.f32 %v2947, %v2950
    %vm2952 = vweird.f32 %v2763
    %vm2953 = vweird.f32 %v2947
    %vm2954 = vmor %vm2952, %vm2953
    %v2955 = vsel %vm2954, %v2947, %v2951
    %v2956 = vand.u32 2147483647, %v2763
    %vm2957 = vcmp.eq.f32.partialorder %v2956, 8.507059e+37
    %v2958 = vand.u32 %v2763, 2147483648
    %v2959 = vor.u32 1.1754944e-38, %v2958
    %v2960 = vsel %vm2957, %v2959, %v2955
    %v2961 = vmul.f32 1.0, %v2960
    %v2962 = vrcp.pop %v2764
    %v2963 = vmul.f32 %v2764, %v2962
    %v2964 = vsub.f32 1.0, %v2963
    %v2965 = vmul.f32 %v2962, %v2964
    %v2966 = vadd.f32 %v2962, %v2965
    %vm2967 = vweird.f32 %v2764
    %vm2968 = vweird.f32 %v2962
    %vm2969 = vmor %vm2967, %vm2968
    %v2970 = vsel %vm2969, %v2962, %v2966
    %v2971 = vand.u32 2147483647, %v2764
    %vm2972 = vcmp.eq.f32.partialorder %v2971, 8.507059e+37
    %v2973 = vand.u32 %v2764, 2147483648
    %v2974 = vor.u32 1.1754944e-38, %v2973
    %v2975 = vsel %vm2972, %v2974, %v2970
    %v2976 = vmul.f32 1.0, %v2975
    %v2977 = vrcp.pop %v2765
    %v2978 = vmul.f32 %v2765, %v2977
    %v2979 = vsub.f32 1.0, %v2978
    %v2980 = vmul.f32 %v2977, %v2979
    %v2981 = vadd.f32 %v2977, %v2980
    %vm2982 = vweird.f32 %v2765
    %vm2983 = vweird.f32 %v2977
    %vm2984 = vmor %vm2982, %vm2983
    %v2985 = vsel %vm2984, %v2977, %v2981
    %v2986 = vand.u32 2147483647, %v2765
    %vm2987 = vcmp.eq.f32.partialorder %v2986, 8.507059e+37
    %v2988 = vand.u32 %v2765, 2147483648
    %v2989 = vor.u32 1.1754944e-38, %v2988
    %v2990 = vsel %vm2987, %v2989, %v2985
    %v2991 = vmul.f32 1.0, %v2990
    %v2992 = vrcp.pop %v2766
    %v2993 = vmul.f32 %v2766, %v2992
    %v2994 = vsub.f32 1.0, %v2993
    %v2995 = vmul.f32 %v2992, %v2994
    %v2996 = vadd.f32 %v2992, %v2995
    %vm2997 = vweird.f32 %v2766
    %vm2998 = vweird.f32 %v2992
    %vm2999 = vmor %vm2997, %vm2998
    %v3000 = vsel %vm2999, %v2992, %v2996
    %v3001 = vand.u32 2147483647, %v2766
    %vm3002 = vcmp.eq.f32.partialorder %v3001, 8.507059e+37
    %v3003 = vand.u32 %v2766, 2147483648
    %v3004 = vor.u32 1.1754944e-38, %v3003
    %v3005 = vsel %vm3002, %v3004, %v3000
    %v3006 = vmul.f32 1.0, %v3005
    %v3007 = vmul.f32 %v2781, 2.0
    %v3008 = vmul.f32 %v2796, 2.0
    %v3009 = vmul.f32 %v2811, 2.0
    %v3010 = vmul.f32 %v2826, 2.0
    %v3011 = vmul.f32 %v2841, 2.0
    %v3012 = vmul.f32 %v2856, 2.0
    %v3013 = vmul.f32 %v2871, 2.0
    %v3014 = vmul.f32 %v2886, 2.0
    %v3015 = vmul.f32 %v2901, 2.0
    %v3016 = vmul.f32 %v2916, 2.0
    %v3017 = vmul.f32 %v2931, 2.0
    %v3018 = vmul.f32 %v2946, 2.0
    %v3019 = vmul.f32 %v2961, 2.0
    %v3020 = vmul.f32 %v2976, 2.0
    %v3021 = vmul.f32 %v2991, 2.0
    %v3022 = vmul.f32 %v3006, 2.0
    %v3023 = vsub.f32 2.0, %v3007
    %v3024 = vsub.f32 2.0, %v3008
    %v3025 = vsub.f32 2.0, %v3009
    %v3026 = vsub.f32 2.0, %v3010
    %v3027 = vsub.f32 2.0, %v3011
    %v3028 = vsub.f32 2.0, %v3012
    %v3029 = vsub.f32 2.0, %v3013
    %v3030 = vsub.f32 2.0, %v3014
    %v3031 = vsub.f32 2.0, %v3015
    %v3032 = vsub.f32 2.0, %v3016
    %v3033 = vsub.f32 2.0, %v3017
    %v3034 = vsub.f32 2.0, %v3018
    %v3035 = vsub.f32 2.0, %v3019
    %v3036 = vsub.f32 2.0, %v3020
    %v3037 = vsub.f32 2.0, %v3021
    %v3038 = vsub.f32 2.0, %v3022
    %vm3039 = vcmask 7168
    %3040 = vst.msk [vmem:[%s10] sm:$0xff] %vm3039, %v3023
    %3041 = vst.msk [vmem:[%s10 + $0x8] sm:$0xff] %vm3039, %v3024
    %3042 = vst.msk [vmem:[%s10 + $0x10] sm:$0xff] %vm3039, %v3025
    %3043 = vst.msk [vmem:[%s10 + $0x18] sm:$0xff] %vm3039, %v3026
    %3044 = vst.msk [vmem:[%s10 + $0x20] sm:$0xff] %vm3039, %v3027
    %3045 = vst.msk [vmem:[%s10 + $0x28] sm:$0xff] %vm3039, %v3028
    %3046 = vst.msk [vmem:[%s10 + $0x30] sm:$0xff] %vm3039, %v3029
    %3047 = vst.msk [vmem:[%s10 + $0x38] sm:$0xff] %vm3039, %v3030
    %3048 = vst.msk [vmem:[%s10 + $0x40] sm:$0xff] %vm3039, %v3031
    %3049 = vst.msk [vmem:[%s10 + $0x48] sm:$0xff] %vm3039, %v3032
    %3050 = vst.msk [vmem:[%s10 + $0x50] sm:$0xff] %vm3039, %v3033
    %3051 = vst.msk [vmem:[%s10 + $0x58] sm:$0xff] %vm3039, %v3034
    %3052 = vst.msk [vmem:[%s10 + $0x60] sm:$0xff] %vm3039, %v3035
    %3053 = vst.msk [vmem:[%s10 + $0x68] sm:$0xff] %vm3039, %v3036
    %3054 = vst.msk [vmem:[%s10 + $0x70] sm:$0xff] %vm3039, %v3037
    %3055 = vst.msk [vmem:[%s10 + $0x78] sm:$0xff] %vm3039, %v3038
    %v3057 = vsel %vm61, %v738, 0
    %v3060 = vsel %vm61, %v739, 0
    %v3063 = vsel %vm61, %v1322, 0
    %v3066 = vsel %vm61, %v1326, 0
    %3068 = vmatpush.xpose.msra.mxu0 0.0
    %3069 = vmatpush.xpose.msra.mxu0 0.0
    %3070 = vmatpush.xpose.msra.mxu0 0.0
    %3071 = vmatpush.xpose.msra.mxu0 0.0
    %3072 = vmatpush.xpose.msra.mxu0 0.0
    %3073 = vmatpush.xpose.msra.mxu0 0.0
    %3074 = vmatpush.xpose.msra.mxu0 0.0
    %3075 = vmatpush.xpose.msra.mxu0 0.0
    %3076 = vmatpush.xpose.msra.mxu0 0.0
    %3077 = vmatpush.xpose.msra.mxu0 0.0
    %3078 = vmatpush.xpose.msra.mxu0 0.0
    %3079 = vmatpush.xpose.msra.mxu0 0.0
    %3080 = vmatpush.xpose.msra.mxu0 0.0
    %3081 = vmatpush.xpose.msra.mxu0 0.0
    %v3082 = vand.u32 %v3066, 4294901760
    %3083 = vmatpush.xpose.msra.mxu0 %v3082
    %v3084 = vand.u32 %v3063, 4294901760
    %3085 = vmatpush.xpose.msra.mxu0 %v3084
    %v3086 = vand.u32 %v3057, 4294901760
    %v3087 = vsub.f32 %v3057, %v3086
    %v3088 = vand.u32 %v3087, 4294901760
    %v3089 = vsub.f32 %v3087, %v3088
    %v3090 = vand.u32 %v3089, 4294901760
    %3091 = vmatmul.f32.gmra.mxu0 %v3090
    %v3092 = vpop.f32.mrf.mxu0
    %v3093 = vadd.f32 0.0, %v3092
    %v3094 = vand.u32 %v3060, 4294901760
    %v3095 = vsub.f32 %v3060, %v3094
    %v3096 = vand.u32 %v3095, 4294901760
    %v3097 = vsub.f32 %v3095, %v3096
    %v3098 = vand.u32 %v3097, 4294901760
    %3099 = vmatmul.f32.gmra.mxu0 %v3098
    %v3100 = vpop.f32.mrf.mxu0
    %v3101 = vadd.f32 0.0, %v3100
    %3102 = vdwg.mxu0
    %3103 = vmatpush.xpose.msra.mxu0 0.0
    %3104 = vmatpush.xpose.msra.mxu0 0.0
    %3105 = vmatpush.xpose.msra.mxu0 0.0
    %3106 = vmatpush.xpose.msra.mxu0 0.0
    %3107 = vmatpush.xpose.msra.mxu0 0.0
    %3108 = vmatpush.xpose.msra.mxu0 0.0
    %3109 = vmatpush.xpose.msra.mxu0 0.0
    %3110 = vmatpush.xpose.msra.mxu0 0.0
    %3111 = vmatpush.xpose.msra.mxu0 0.0
    %3112 = vmatpush.xpose.msra.mxu0 0.0
    %3113 = vmatpush.xpose.msra.mxu0 0.0
    %3114 = vmatpush.xpose.msra.mxu0 0.0
    %3115 = vmatpush.xpose.msra.mxu0 0.0
    %3116 = vmatpush.xpose.msra.mxu0 0.0
    %v3117 = vand.u32 %v3066, 4294901760
    %v3118 = vsub.f32 %v3066, %v3117
    %v3119 = vand.u32 %v3118, 4294901760
    %v3120 = vsub.f32 %v3118, %v3119
    %v3121 = vand.u32 %v3120, 4294901760
    %3122 = vmatpush.xpose.msra.mxu0 %v3121
    %v3123 = vand.u32 %v3063, 4294901760
    %v3124 = vsub.f32 %v3063, %v3123
    %v3125 = vand.u32 %v3124, 4294901760
    %v3126 = vsub.f32 %v3124, %v3125
    %v3127 = vand.u32 %v3126, 4294901760
    %3128 = vmatpush.xpose.msra.mxu0 %v3127
    %v3129 = vand.u32 %v3057, 4294901760
    %3130 = vmatmul.f32.gmra.mxu0 %v3129
    %v3131 = vpop.f32.mrf.mxu0
    %v3132 = vadd.f32 %v3093, %v3131
    %v3133 = vand.u32 %v3060, 4294901760
    %3134 = vmatmul.f32.gmra.mxu0 %v3133
    %v3135 = vpop.f32.mrf.mxu0
    %v3136 = vadd.f32 %v3101, %v3135
    %3137 = vdwg.mxu0
    %3138 = vmatpush.xpose.msra.mxu0 0.0
    %3139 = vmatpush.xpose.msra.mxu0 0.0
    %3140 = vmatpush.xpose.msra.mxu0 0.0
    %3141 = vmatpush.xpose.msra.mxu0 0.0
    %3142 = vmatpush.xpose.msra.mxu0 0.0
    %3143 = vmatpush.xpose.msra.mxu0 0.0
    %3144 = vmatpush.xpose.msra.mxu0 0.0
    %3145 = vmatpush.xpose.msra.mxu0 0.0
    %3146 = vmatpush.xpose.msra.mxu0 0.0
    %3147 = vmatpush.xpose.msra.mxu0 0.0
    %3148 = vmatpush.xpose.msra.mxu0 0.0
    %3149 = vmatpush.xpose.msra.mxu0 0.0
    %3150 = vmatpush.xpose.msra.mxu0 0.0
    %3151 = vmatpush.xpose.msra.mxu0 0.0
    %v3152 = vand.u32 %v3066, 4294901760
    %v3153 = vsub.f32 %v3066, %v3152
    %3154 = vmatpush.xpose.msra.mxu0 %v3153
    %v3155 = vand.u32 %v3063, 4294901760
    %v3156 = vsub.f32 %v3063, %v3155
    %3157 = vmatpush.xpose.msra.mxu0 %v3156
    %v3158 = vand.u32 %v3057, 4294901760
    %v3159 = vsub.f32 %v3057, %v3158
    %3160 = vmatmul.f32.gmra.mxu0 %v3159
    %v3161 = vpop.f32.mrf.mxu0
    %v3162 = vadd.f32 %v3132, %v3161
    %v3163 = vand.u32 %v3060, 4294901760
    %v3164 = vsub.f32 %v3060, %v3163
    %3165 = vmatmul.f32.gmra.mxu0 %v3164
    %v3166 = vpop.f32.mrf.mxu0
    %v3167 = vadd.f32 %v3136, %v3166
    %3168 = vdwg.mxu0
    %3169 = vmatpush.xpose.msra.mxu0 0.0
    %3170 = vmatpush.xpose.msra.mxu0 0.0
    %3171 = vmatpush.xpose.msra.mxu0 0.0
    %3172 = vmatpush.xpose.msra.mxu0 0.0
    %3173 = vmatpush.xpose.msra.mxu0 0.0
    %3174 = vmatpush.xpose.msra.mxu0 0.0
    %3175 = vmatpush.xpose.msra.mxu0 0.0
    %3176 = vmatpush.xpose.msra.mxu0 0.0
    %3177 = vmatpush.xpose.msra.mxu0 0.0
    %3178 = vmatpush.xpose.msra.mxu0 0.0
    %3179 = vmatpush.xpose.msra.mxu0 0.0
    %3180 = vmatpush.xpose.msra.mxu0 0.0
    %3181 = vmatpush.xpose.msra.mxu0 0.0
    %3182 = vmatpush.xpose.msra.mxu0 0.0
    %v3183 = vand.u32 %v3066, 4294901760
    %3184 = vmatpush.xpose.msra.mxu0 %v3183
    %v3185 = vand.u32 %v3063, 4294901760
    %3186 = vmatpush.xpose.msra.mxu0 %v3185
    %v3187 = vand.u32 %v3057, 4294901760
    %v3188 = vsub.f32 %v3057, %v3187
    %v3189 = vand.u32 %v3188, 4294901760
    %3190 = vmatmul.f32.gmra.mxu0 %v3189
    %v3191 = vpop.f32.mrf.mxu0
    %v3192 = vadd.f32 %v3162, %v3191
    %v3193 = vand.u32 %v3060, 4294901760
    %v3194 = vsub.f32 %v3060, %v3193
    %v3195 = vand.u32 %v3194, 4294901760
    %3196 = vmatmul.f32.gmra.mxu0 %v3195
    %v3197 = vpop.f32.mrf.mxu0
    %v3198 = vadd.f32 %v3167, %v3197
    %3199 = vdwg.mxu0
    %3200 = vmatpush.xpose.msra.mxu0 0.0
    %3201 = vmatpush.xpose.msra.mxu0 0.0
    %3202 = vmatpush.xpose.msra.mxu0 0.0
    %3203 = vmatpush.xpose.msra.mxu0 0.0
    %3204 = vmatpush.xpose.msra.mxu0 0.0
    %3205 = vmatpush.xpose.msra.mxu0 0.0
    %3206 = vmatpush.xpose.msra.mxu0 0.0
    %3207 = vmatpush.xpose.msra.mxu0 0.0
    %3208 = vmatpush.xpose.msra.mxu0 0.0
    %3209 = vmatpush.xpose.msra.mxu0 0.0
    %3210 = vmatpush.xpose.msra.mxu0 0.0
    %3211 = vmatpush.xpose.msra.mxu0 0.0
    %3212 = vmatpush.xpose.msra.mxu0 0.0
    %3213 = vmatpush.xpose.msra.mxu0 0.0
    %v3214 = vand.u32 %v3066, 4294901760
    %v3215 = vsub.f32 %v3066, %v3214
    %v3216 = vand.u32 %v3215, 4294901760
    %3217 = vmatpush.xpose.msra.mxu0 %v3216
    %v3218 = vand.u32 %v3063, 4294901760
    %v3219 = vsub.f32 %v3063, %v3218
    %v3220 = vand.u32 %v3219, 4294901760
    %3221 = vmatpush.xpose.msra.mxu0 %v3220
    %v3222 = vand.u32 %v3057, 4294901760
    %3223 = vmatmul.f32.gmra.mxu0 %v3222
    %v3224 = vpop.f32.mrf.mxu0
    %v3225 = vadd.f32 %v3192, %v3224
    %v3226 = vand.u32 %v3060, 4294901760
    %3227 = vmatmul.f32.gmra.mxu0 %v3226
    %v3228 = vpop.f32.mrf.mxu0
    %v3229 = vadd.f32 %v3198, %v3228
    %3230 = vdwg.mxu0
    %3231 = vmatpush.xpose.msra.mxu0 0.0
    %3232 = vmatpush.xpose.msra.mxu0 0.0
    %3233 = vmatpush.xpose.msra.mxu0 0.0
    %3234 = vmatpush.xpose.msra.mxu0 0.0
    %3235 = vmatpush.xpose.msra.mxu0 0.0
    %3236 = vmatpush.xpose.msra.mxu0 0.0
    %3237 = vmatpush.xpose.msra.mxu0 0.0
    %3238 = vmatpush.xpose.msra.mxu0 0.0
    %3239 = vmatpush.xpose.msra.mxu0 0.0
    %3240 = vmatpush.xpose.msra.mxu0 0.0
    %3241 = vmatpush.xpose.msra.mxu0 0.0
    %3242 = vmatpush.xpose.msra.mxu0 0.0
    %3243 = vmatpush.xpose.msra.mxu0 0.0
    %3244 = vmatpush.xpose.msra.mxu0 0.0
    %v3245 = vand.u32 %v3066, 4294901760
    %3246 = vmatpush.xpose.msra.mxu0 %v3245
    %v3247 = vand.u32 %v3063, 4294901760
    %3248 = vmatpush.xpose.msra.mxu0 %v3247
    %v3249 = vand.u32 %v3057, 4294901760
    %3250 = vmatmul.f32.gmra.mxu0 %v3249
    %v3251 = vpop.f32.mrf.mxu0
    %v3252 = vadd.f32 %v3225, %v3251
    %v3253 = vand.u32 %v3060, 4294901760
    %3254 = vmatmul.f32.gmra.mxu0 %v3253
    %v3255 = vpop.f32.mrf.mxu0
    %v3256 = vadd.f32 %v3229, %v3255
    %3257 = vdwg.mxu0
    %v3259 = vsel %vm61, %v740, 0
    %v3262 = vsel %vm61, %v741, 0
    %v3265 = vsel %vm61, %v1330, 0
    %v3268 = vsel %vm61, %v1334, 0
    %3270 = vmatpush.xpose.msra.mxu0 0.0
    %3271 = vmatpush.xpose.msra.mxu0 0.0
    %3272 = vmatpush.xpose.msra.mxu0 0.0
    %3273 = vmatpush.xpose.msra.mxu0 0.0
    %3274 = vmatpush.xpose.msra.mxu0 0.0
    %3275 = vmatpush.xpose.msra.mxu0 0.0
    %3276 = vmatpush.xpose.msra.mxu0 0.0
    %3277 = vmatpush.xpose.msra.mxu0 0.0
    %3278 = vmatpush.xpose.msra.mxu0 0.0
    %3279 = vmatpush.xpose.msra.mxu0 0.0
    %3280 = vmatpush.xpose.msra.mxu0 0.0
    %3281 = vmatpush.xpose.msra.mxu0 0.0
    %3282 = vmatpush.xpose.msra.mxu0 0.0
    %3283 = vmatpush.xpose.msra.mxu0 0.0
    %v3284 = vand.u32 %v3268, 4294901760
    %3285 = vmatpush.xpose.msra.mxu0 %v3284
    %v3286 = vand.u32 %v3265, 4294901760
    %3287 = vmatpush.xpose.msra.mxu0 %v3286
    %v3288 = vand.u32 %v3259, 4294901760
    %v3289 = vsub.f32 %v3259, %v3288
    %v3290 = vand.u32 %v3289, 4294901760
    %v3291 = vsub.f32 %v3289, %v3290
    %v3292 = vand.u32 %v3291, 4294901760
    %3293 = vmatmul.f32.gmra.mxu0 %v3292
    %v3294 = vpop.f32.mrf.mxu0
    %v3295 = vadd.f32 0.0, %v3294
    %v3296 = vand.u32 %v3262, 4294901760
    %v3297 = vsub.f32 %v3262, %v3296
    %v3298 = vand.u32 %v3297, 4294901760
    %v3299 = vsub.f32 %v3297, %v3298
    %v3300 = vand.u32 %v3299, 4294901760
    %3301 = vmatmul.f32.gmra.mxu0 %v3300
    %v3302 = vpop.f32.mrf.mxu0
    %v3303 = vadd.f32 0.0, %v3302
    %3304 = vdwg.mxu0
    %3305 = vmatpush.xpose.msra.mxu0 0.0
    %3306 = vmatpush.xpose.msra.mxu0 0.0
    %3307 = vmatpush.xpose.msra.mxu0 0.0
    %3308 = vmatpush.xpose.msra.mxu0 0.0
    %3309 = vmatpush.xpose.msra.mxu0 0.0
    %3310 = vmatpush.xpose.msra.mxu0 0.0
    %3311 = vmatpush.xpose.msra.mxu0 0.0
    %3312 = vmatpush.xpose.msra.mxu0 0.0
    %3313 = vmatpush.xpose.msra.mxu0 0.0
    %3314 = vmatpush.xpose.msra.mxu0 0.0
    %3315 = vmatpush.xpose.msra.mxu0 0.0
    %3316 = vmatpush.xpose.msra.mxu0 0.0
    %3317 = vmatpush.xpose.msra.mxu0 0.0
    %3318 = vmatpush.xpose.msra.mxu0 0.0
    %v3319 = vand.u32 %v3268, 4294901760
    %v3320 = vsub.f32 %v3268, %v3319
    %v3321 = vand.u32 %v3320, 4294901760
    %v3322 = vsub.f32 %v3320, %v3321
    %v3323 = vand.u32 %v3322, 4294901760
    %3324 = vmatpush.xpose.msra.mxu0 %v3323
    %v3325 = vand.u32 %v3265, 4294901760
    %v3326 = vsub.f32 %v3265, %v3325
    %v3327 = vand.u32 %v3326, 4294901760
    %v3328 = vsub.f32 %v3326, %v3327
    %v3329 = vand.u32 %v3328, 4294901760
    %3330 = vmatpush.xpose.msra.mxu0 %v3329
    %v3331 = vand.u32 %v3259, 4294901760
    %3332 = vmatmul.f32.gmra.mxu0 %v3331
    %v3333 = vpop.f32.mrf.mxu0
    %v3334 = vadd.f32 %v3295, %v3333
    %v3335 = vand.u32 %v3262, 4294901760
    %3336 = vmatmul.f32.gmra.mxu0 %v3335
    %v3337 = vpop.f32.mrf.mxu0
    %v3338 = vadd.f32 %v3303, %v3337
    %3339 = vdwg.mxu0
    %3340 = vmatpush.xpose.msra.mxu0 0.0
    %3341 = vmatpush.xpose.msra.mxu0 0.0
    %3342 = vmatpush.xpose.msra.mxu0 0.0
    %3343 = vmatpush.xpose.msra.mxu0 0.0
    %3344 = vmatpush.xpose.msra.mxu0 0.0
    %3345 = vmatpush.xpose.msra.mxu0 0.0
    %3346 = vmatpush.xpose.msra.mxu0 0.0
    %3347 = vmatpush.xpose.msra.mxu0 0.0
    %3348 = vmatpush.xpose.msra.mxu0 0.0
    %3349 = vmatpush.xpose.msra.mxu0 0.0
    %3350 = vmatpush.xpose.msra.mxu0 0.0
    %3351 = vmatpush.xpose.msra.mxu0 0.0
    %3352 = vmatpush.xpose.msra.mxu0 0.0
    %3353 = vmatpush.xpose.msra.mxu0 0.0
    %v3354 = vand.u32 %v3268, 4294901760
    %v3355 = vsub.f32 %v3268, %v3354
    %3356 = vmatpush.xpose.msra.mxu0 %v3355
    %v3357 = vand.u32 %v3265, 4294901760
    %v3358 = vsub.f32 %v3265, %v3357
    %3359 = vmatpush.xpose.msra.mxu0 %v3358
    %v3360 = vand.u32 %v3259, 4294901760
    %v3361 = vsub.f32 %v3259, %v3360
    %3362 = vmatmul.f32.gmra.mxu0 %v3361
    %v3363 = vpop.f32.mrf.mxu0
    %v3364 = vadd.f32 %v3334, %v3363
    %v3365 = vand.u32 %v3262, 4294901760
    %v3366 = vsub.f32 %v3262, %v3365
    %3367 = vmatmul.f32.gmra.mxu0 %v3366
    %v3368 = vpop.f32.mrf.mxu0
    %v3369 = vadd.f32 %v3338, %v3368
    %3370 = vdwg.mxu0
    %3371 = vmatpush.xpose.msra.mxu0 0.0
    %3372 = vmatpush.xpose.msra.mxu0 0.0
    %3373 = vmatpush.xpose.msra.mxu0 0.0
    %3374 = vmatpush.xpose.msra.mxu0 0.0
    %3375 = vmatpush.xpose.msra.mxu0 0.0
    %3376 = vmatpush.xpose.msra.mxu0 0.0
    %3377 = vmatpush.xpose.msra.mxu0 0.0
    %3378 = vmatpush.xpose.msra.mxu0 0.0
    %3379 = vmatpush.xpose.msra.mxu0 0.0
    %3380 = vmatpush.xpose.msra.mxu0 0.0
    %3381 = vmatpush.xpose.msra.mxu0 0.0
    %3382 = vmatpush.xpose.msra.mxu0 0.0
    %3383 = vmatpush.xpose.msra.mxu0 0.0
    %3384 = vmatpush.xpose.msra.mxu0 0.0
    %v3385 = vand.u32 %v3268, 4294901760
    %3386 = vmatpush.xpose.msra.mxu0 %v3385
    %v3387 = vand.u32 %v3265, 4294901760
    %3388 = vmatpush.xpose.msra.mxu0 %v3387
    %v3389 = vand.u32 %v3259, 4294901760
    %v3390 = vsub.f32 %v3259, %v3389
    %v3391 = vand.u32 %v3390, 4294901760
    %3392 = vmatmul.f32.gmra.mxu0 %v3391
    %v3393 = vpop.f32.mrf.mxu0
    %v3394 = vadd.f32 %v3364, %v3393
    %v3395 = vand.u32 %v3262, 4294901760
    %v3396 = vsub.f32 %v3262, %v3395
    %v3397 = vand.u32 %v3396, 4294901760
    %3398 = vmatmul.f32.gmra.mxu0 %v3397
    %v3399 = vpop.f32.mrf.mxu0
    %v3400 = vadd.f32 %v3369, %v3399
    %3401 = vdwg.mxu0
    %3402 = vmatpush.xpose.msra.mxu0 0.0
    %3403 = vmatpush.xpose.msra.mxu0 0.0
    %3404 = vmatpush.xpose.msra.mxu0 0.0
    %3405 = vmatpush.xpose.msra.mxu0 0.0
    %3406 = vmatpush.xpose.msra.mxu0 0.0
    %3407 = vmatpush.xpose.msra.mxu0 0.0
    %3408 = vmatpush.xpose.msra.mxu0 0.0
    %3409 = vmatpush.xpose.msra.mxu0 0.0
    %3410 = vmatpush.xpose.msra.mxu0 0.0
    %3411 = vmatpush.xpose.msra.mxu0 0.0
    %3412 = vmatpush.xpose.msra.mxu0 0.0
    %3413 = vmatpush.xpose.msra.mxu0 0.0
    %3414 = vmatpush.xpose.msra.mxu0 0.0
    %3415 = vmatpush.xpose.msra.mxu0 0.0
    %v3416 = vand.u32 %v3268, 4294901760
    %v3417 = vsub.f32 %v3268, %v3416
    %v3418 = vand.u32 %v3417, 4294901760
    %3419 = vmatpush.xpose.msra.mxu0 %v3418
    %v3420 = vand.u32 %v3265, 4294901760
    %v3421 = vsub.f32 %v3265, %v3420
    %v3422 = vand.u32 %v3421, 4294901760
    %3423 = vmatpush.xpose.msra.mxu0 %v3422
    %v3424 = vand.u32 %v3259, 4294901760
    %3425 = vmatmul.f32.gmra.mxu0 %v3424
    %v3426 = vpop.f32.mrf.mxu0
    %v3427 = vadd.f32 %v3394, %v3426
    %v3428 = vand.u32 %v3262, 4294901760
    %3429 = vmatmul.f32.gmra.mxu0 %v3428
    %v3430 = vpop.f32.mrf.mxu0
    %v3431 = vadd.f32 %v3400, %v3430
    %3432 = vdwg.mxu0
    %3433 = vmatpush.xpose.msra.mxu0 0.0
    %3434 = vmatpush.xpose.msra.mxu0 0.0
    %3435 = vmatpush.xpose.msra.mxu0 0.0
    %3436 = vmatpush.xpose.msra.mxu0 0.0
    %3437 = vmatpush.xpose.msra.mxu0 0.0
    %3438 = vmatpush.xpose.msra.mxu0 0.0
    %3439 = vmatpush.xpose.msra.mxu0 0.0
    %3440 = vmatpush.xpose.msra.mxu0 0.0
    %3441 = vmatpush.xpose.msra.mxu0 0.0
    %3442 = vmatpush.xpose.msra.mxu0 0.0
    %3443 = vmatpush.xpose.msra.mxu0 0.0
    %3444 = vmatpush.xpose.msra.mxu0 0.0
    %3445 = vmatpush.xpose.msra.mxu0 0.0
    %3446 = vmatpush.xpose.msra.mxu0 0.0
    %v3447 = vand.u32 %v3268, 4294901760
    %3448 = vmatpush.xpose.msra.mxu0 %v3447
    %v3449 = vand.u32 %v3265, 4294901760
    %3450 = vmatpush.xpose.msra.mxu0 %v3449
    %v3451 = vand.u32 %v3259, 4294901760
    %3452 = vmatmul.f32.gmra.mxu0 %v3451
    %v3453 = vpop.f32.mrf.mxu0
    %v3454 = vadd.f32 %v3427, %v3453
    %v3455 = vand.u32 %v3262, 4294901760
    %3456 = vmatmul.f32.gmra.mxu0 %v3455
    %v3457 = vpop.f32.mrf.mxu0
    %v3458 = vadd.f32 %v3431, %v3457
    %3459 = vdwg.mxu0
    %v3461 = vsel %vm61, %v742, 0
    %v3464 = vsel %vm61, %v743, 0
    %v3467 = vsel %vm61, %v1338, 0
    %v3470 = vsel %vm61, %v1342, 0
    %3472 = vmatpush.xpose.msra.mxu0 0.0
    %3473 = vmatpush.xpose.msra.mxu0 0.0
    %3474 = vmatpush.xpose.msra.mxu0 0.0
    %3475 = vmatpush.xpose.msra.mxu0 0.0
    %3476 = vmatpush.xpose.msra.mxu0 0.0
    %3477 = vmatpush.xpose.msra.mxu0 0.0
    %3478 = vmatpush.xpose.msra.mxu0 0.0
    %3479 = vmatpush.xpose.msra.mxu0 0.0
    %3480 = vmatpush.xpose.msra.mxu0 0.0
    %3481 = vmatpush.xpose.msra.mxu0 0.0
    %3482 = vmatpush.xpose.msra.mxu0 0.0
    %3483 = vmatpush.xpose.msra.mxu0 0.0
    %3484 = vmatpush.xpose.msra.mxu0 0.0
    %3485 = vmatpush.xpose.msra.mxu0 0.0
    %v3486 = vand.u32 %v3470, 4294901760
    %3487 = vmatpush.xpose.msra.mxu0 %v3486
    %v3488 = vand.u32 %v3467, 4294901760
    %3489 = vmatpush.xpose.msra.mxu0 %v3488
    %v3490 = vand.u32 %v3461, 4294901760
    %v3491 = vsub.f32 %v3461, %v3490
    %v3492 = vand.u32 %v3491, 4294901760
    %v3493 = vsub.f32 %v3491, %v3492
    %v3494 = vand.u32 %v3493, 4294901760
    %3495 = vmatmul.f32.gmra.mxu0 %v3494
    %v3496 = vpop.f32.mrf.mxu0
    %v3497 = vadd.f32 0.0, %v3496
    %v3498 = vand.u32 %v3464, 4294901760
    %v3499 = vsub.f32 %v3464, %v3498
    %v3500 = vand.u32 %v3499, 4294901760
    %v3501 = vsub.f32 %v3499, %v3500
    %v3502 = vand.u32 %v3501, 4294901760
    %3503 = vmatmul.f32.gmra.mxu0 %v3502
    %v3504 = vpop.f32.mrf.mxu0
    %v3505 = vadd.f32 0.0, %v3504
    %3506 = vdwg.mxu0
    %3507 = vmatpush.xpose.msra.mxu0 0.0
    %3508 = vmatpush.xpose.msra.mxu0 0.0
    %3509 = vmatpush.xpose.msra.mxu0 0.0
    %3510 = vmatpush.xpose.msra.mxu0 0.0
    %3511 = vmatpush.xpose.msra.mxu0 0.0
    %3512 = vmatpush.xpose.msra.mxu0 0.0
    %3513 = vmatpush.xpose.msra.mxu0 0.0
    %3514 = vmatpush.xpose.msra.mxu0 0.0
    %3515 = vmatpush.xpose.msra.mxu0 0.0
    %3516 = vmatpush.xpose.msra.mxu0 0.0
    %3517 = vmatpush.xpose.msra.mxu0 0.0
    %3518 = vmatpush.xpose.msra.mxu0 0.0
    %3519 = vmatpush.xpose.msra.mxu0 0.0
    %3520 = vmatpush.xpose.msra.mxu0 0.0
    %v3521 = vand.u32 %v3470, 4294901760
    %v3522 = vsub.f32 %v3470, %v3521
    %v3523 = vand.u32 %v3522, 4294901760
    %v3524 = vsub.f32 %v3522, %v3523
    %v3525 = vand.u32 %v3524, 4294901760
    %3526 = vmatpush.xpose.msra.mxu0 %v3525
    %v3527 = vand.u32 %v3467, 4294901760
    %v3528 = vsub.f32 %v3467, %v3527
    %v3529 = vand.u32 %v3528, 4294901760
    %v3530 = vsub.f32 %v3528, %v3529
    %v3531 = vand.u32 %v3530, 4294901760
    %3532 = vmatpush.xpose.msra.mxu0 %v3531
    %v3533 = vand.u32 %v3461, 4294901760
    %3534 = vmatmul.f32.gmra.mxu0 %v3533
    %v3535 = vpop.f32.mrf.mxu0
    %v3536 = vadd.f32 %v3497, %v3535
    %v3537 = vand.u32 %v3464, 4294901760
    %3538 = vmatmul.f32.gmra.mxu0 %v3537
    %v3539 = vpop.f32.mrf.mxu0
    %v3540 = vadd.f32 %v3505, %v3539
    %3541 = vdwg.mxu0
    %3542 = vmatpush.xpose.msra.mxu0 0.0
    %3543 = vmatpush.xpose.msra.mxu0 0.0
    %3544 = vmatpush.xpose.msra.mxu0 0.0
    %3545 = vmatpush.xpose.msra.mxu0 0.0
    %3546 = vmatpush.xpose.msra.mxu0 0.0
    %3547 = vmatpush.xpose.msra.mxu0 0.0
    %3548 = vmatpush.xpose.msra.mxu0 0.0
    %3549 = vmatpush.xpose.msra.mxu0 0.0
    %3550 = vmatpush.xpose.msra.mxu0 0.0
    %3551 = vmatpush.xpose.msra.mxu0 0.0
    %3552 = vmatpush.xpose.msra.mxu0 0.0
    %3553 = vmatpush.xpose.msra.mxu0 0.0
    %3554 = vmatpush.xpose.msra.mxu0 0.0
    %3555 = vmatpush.xpose.msra.mxu0 0.0
    %v3556 = vand.u32 %v3470, 4294901760
    %v3557 = vsub.f32 %v3470, %v3556
    %3558 = vmatpush.xpose.msra.mxu0 %v3557
    %v3559 = vand.u32 %v3467, 4294901760
    %v3560 = vsub.f32 %v3467, %v3559
    %3561 = vmatpush.xpose.msra.mxu0 %v3560
    %v3562 = vand.u32 %v3461, 4294901760
    %v3563 = vsub.f32 %v3461, %v3562
    %3564 = vmatmul.f32.gmra.mxu0 %v3563
    %v3565 = vpop.f32.mrf.mxu0
    %v3566 = vadd.f32 %v3536, %v3565
    %v3567 = vand.u32 %v3464, 4294901760
    %v3568 = vsub.f32 %v3464, %v3567
    %3569 = vmatmul.f32.gmra.mxu0 %v3568
    %v3570 = vpop.f32.mrf.mxu0
    %v3571 = vadd.f32 %v3540, %v3570
    %3572 = vdwg.mxu0
    %3573 = vmatpush.xpose.msra.mxu0 0.0
    %3574 = vmatpush.xpose.msra.mxu0 0.0
    %3575 = vmatpush.xpose.msra.mxu0 0.0
    %3576 = vmatpush.xpose.msra.mxu0 0.0
    %3577 = vmatpush.xpose.msra.mxu0 0.0
    %3578 = vmatpush.xpose.msra.mxu0 0.0
    %3579 = vmatpush.xpose.msra.mxu0 0.0
    %3580 = vmatpush.xpose.msra.mxu0 0.0
    %3581 = vmatpush.xpose.msra.mxu0 0.0
    %3582 = vmatpush.xpose.msra.mxu0 0.0
    %3583 = vmatpush.xpose.msra.mxu0 0.0
    %3584 = vmatpush.xpose.msra.mxu0 0.0
    %3585 = vmatpush.xpose.msra.mxu0 0.0
    %3586 = vmatpush.xpose.msra.mxu0 0.0
    %v3587 = vand.u32 %v3470, 4294901760
    %3588 = vmatpush.xpose.msra.mxu0 %v3587
    %v3589 = vand.u32 %v3467, 4294901760
    %3590 = vmatpush.xpose.msra.mxu0 %v3589
    %v3591 = vand.u32 %v3461, 4294901760
    %v3592 = vsub.f32 %v3461, %v3591
    %v3593 = vand.u32 %v3592, 4294901760
    %3594 = vmatmul.f32.gmra.mxu0 %v3593
    %v3595 = vpop.f32.mrf.mxu0
    %v3596 = vadd.f32 %v3566, %v3595
    %v3597 = vand.u32 %v3464, 4294901760
    %v3598 = vsub.f32 %v3464, %v3597
    %v3599 = vand.u32 %v3598, 4294901760
    %3600 = vmatmul.f32.gmra.mxu0 %v3599
    %v3601 = vpop.f32.mrf.mxu0
    %v3602 = vadd.f32 %v3571, %v3601
    %3603 = vdwg.mxu0
    %3604 = vmatpush.xpose.msra.mxu0 0.0
    %3605 = vmatpush.xpose.msra.mxu0 0.0
    %3606 = vmatpush.xpose.msra.mxu0 0.0
    %3607 = vmatpush.xpose.msra.mxu0 0.0
    %3608 = vmatpush.xpose.msra.mxu0 0.0
    %3609 = vmatpush.xpose.msra.mxu0 0.0
    %3610 = vmatpush.xpose.msra.mxu0 0.0
    %3611 = vmatpush.xpose.msra.mxu0 0.0
    %3612 = vmatpush.xpose.msra.mxu0 0.0
    %3613 = vmatpush.xpose.msra.mxu0 0.0
    %3614 = vmatpush.xpose.msra.mxu0 0.0
    %3615 = vmatpush.xpose.msra.mxu0 0.0
    %3616 = vmatpush.xpose.msra.mxu0 0.0
    %3617 = vmatpush.xpose.msra.mxu0 0.0
    %v3618 = vand.u32 %v3470, 4294901760
    %v3619 = vsub.f32 %v3470, %v3618
    %v3620 = vand.u32 %v3619, 4294901760
    %3621 = vmatpush.xpose.msra.mxu0 %v3620
    %v3622 = vand.u32 %v3467, 4294901760
    %v3623 = vsub.f32 %v3467, %v3622
    %v3624 = vand.u32 %v3623, 4294901760
    %3625 = vmatpush.xpose.msra.mxu0 %v3624
    %v3626 = vand.u32 %v3461, 4294901760
    %3627 = vmatmul.f32.gmra.mxu0 %v3626
    %v3628 = vpop.f32.mrf.mxu0
    %v3629 = vadd.f32 %v3596, %v3628
    %v3630 = vand.u32 %v3464, 4294901760
    %3631 = vmatmul.f32.gmra.mxu0 %v3630
    %v3632 = vpop.f32.mrf.mxu0
    %v3633 = vadd.f32 %v3602, %v3632
    %3634 = vdwg.mxu0
    %3635 = vmatpush.xpose.msra.mxu0 0.0
    %3636 = vmatpush.xpose.msra.mxu0 0.0
    %3637 = vmatpush.xpose.msra.mxu0 0.0
    %3638 = vmatpush.xpose.msra.mxu0 0.0
    %3639 = vmatpush.xpose.msra.mxu0 0.0
    %3640 = vmatpush.xpose.msra.mxu0 0.0
    %3641 = vmatpush.xpose.msra.mxu0 0.0
    %3642 = vmatpush.xpose.msra.mxu0 0.0
    %3643 = vmatpush.xpose.msra.mxu0 0.0
    %3644 = vmatpush.xpose.msra.mxu0 0.0
    %3645 = vmatpush.xpose.msra.mxu0 0.0
    %3646 = vmatpush.xpose.msra.mxu0 0.0
    %3647 = vmatpush.xpose.msra.mxu0 0.0
    %3648 = vmatpush.xpose.msra.mxu0 0.0
    %v3649 = vand.u32 %v3470, 4294901760
    %3650 = vmatpush.xpose.msra.mxu0 %v3649
    %v3651 = vand.u32 %v3467, 4294901760
    %3652 = vmatpush.xpose.msra.mxu0 %v3651
    %v3653 = vand.u32 %v3461, 4294901760
    %3654 = vmatmul.f32.gmra.mxu0 %v3653
    %v3655 = vpop.f32.mrf.mxu0
    %v3656 = vadd.f32 %v3629, %v3655
    %v3657 = vand.u32 %v3464, 4294901760
    %3658 = vmatmul.f32.gmra.mxu0 %v3657
    %v3659 = vpop.f32.mrf.mxu0
    %v3660 = vadd.f32 %v3633, %v3659
    %3661 = vdwg.mxu0
    %v3663 = vsel %vm61, %v744, 0
    %v3666 = vsel %vm61, %v745, 0
    %v3669 = vsel %vm61, %v1346, 0
    %v3672 = vsel %vm61, %v1350, 0
    %3674 = vmatpush.xpose.msra.mxu0 0.0
    %3675 = vmatpush.xpose.msra.mxu0 0.0
    %3676 = vmatpush.xpose.msra.mxu0 0.0
    %3677 = vmatpush.xpose.msra.mxu0 0.0
    %3678 = vmatpush.xpose.msra.mxu0 0.0
    %3679 = vmatpush.xpose.msra.mxu0 0.0
    %3680 = vmatpush.xpose.msra.mxu0 0.0
    %3681 = vmatpush.xpose.msra.mxu0 0.0
    %3682 = vmatpush.xpose.msra.mxu0 0.0
    %3683 = vmatpush.xpose.msra.mxu0 0.0
    %3684 = vmatpush.xpose.msra.mxu0 0.0
    %3685 = vmatpush.xpose.msra.mxu0 0.0
    %3686 = vmatpush.xpose.msra.mxu0 0.0
    %3687 = vmatpush.xpose.msra.mxu0 0.0
    %v3688 = vand.u32 %v3672, 4294901760
    %3689 = vmatpush.xpose.msra.mxu0 %v3688
    %v3690 = vand.u32 %v3669, 4294901760
    %3691 = vmatpush.xpose.msra.mxu0 %v3690
    %v3692 = vand.u32 %v3663, 4294901760
    %v3693 = vsub.f32 %v3663, %v3692
    %v3694 = vand.u32 %v3693, 4294901760
    %v3695 = vsub.f32 %v3693, %v3694
    %v3696 = vand.u32 %v3695, 4294901760
    %3697 = vmatmul.f32.gmra.mxu0 %v3696
    %v3698 = vpop.f32.mrf.mxu0
    %v3699 = vadd.f32 0.0, %v3698
    %v3700 = vand.u32 %v3666, 4294901760
    %v3701 = vsub.f32 %v3666, %v3700
    %v3702 = vand.u32 %v3701, 4294901760
    %v3703 = vsub.f32 %v3701, %v3702
    %v3704 = vand.u32 %v3703, 4294901760
    %3705 = vmatmul.f32.gmra.mxu0 %v3704
    %v3706 = vpop.f32.mrf.mxu0
    %v3707 = vadd.f32 0.0, %v3706
    %3708 = vdwg.mxu0
    %3709 = vmatpush.xpose.msra.mxu0 0.0
    %3710 = vmatpush.xpose.msra.mxu0 0.0
    %3711 = vmatpush.xpose.msra.mxu0 0.0
    %3712 = vmatpush.xpose.msra.mxu0 0.0
    %3713 = vmatpush.xpose.msra.mxu0 0.0
    %3714 = vmatpush.xpose.msra.mxu0 0.0
    %3715 = vmatpush.xpose.msra.mxu0 0.0
    %3716 = vmatpush.xpose.msra.mxu0 0.0
    %3717 = vmatpush.xpose.msra.mxu0 0.0
    %3718 = vmatpush.xpose.msra.mxu0 0.0
    %3719 = vmatpush.xpose.msra.mxu0 0.0
    %3720 = vmatpush.xpose.msra.mxu0 0.0
    %3721 = vmatpush.xpose.msra.mxu0 0.0
    %3722 = vmatpush.xpose.msra.mxu0 0.0
    %v3723 = vand.u32 %v3672, 4294901760
    %v3724 = vsub.f32 %v3672, %v3723
    %v3725 = vand.u32 %v3724, 4294901760
    %v3726 = vsub.f32 %v3724, %v3725
    %v3727 = vand.u32 %v3726, 4294901760
    %3728 = vmatpush.xpose.msra.mxu0 %v3727
    %v3729 = vand.u32 %v3669, 4294901760
    %v3730 = vsub.f32 %v3669, %v3729
    %v3731 = vand.u32 %v3730, 4294901760
    %v3732 = vsub.f32 %v3730, %v3731
    %v3733 = vand.u32 %v3732, 4294901760
    %3734 = vmatpush.xpose.msra.mxu0 %v3733
    %v3735 = vand.u32 %v3663, 4294901760
    %3736 = vmatmul.f32.gmra.mxu0 %v3735
    %v3737 = vpop.f32.mrf.mxu0
    %v3738 = vadd.f32 %v3699, %v3737
    %v3739 = vand.u32 %v3666, 4294901760
    %3740 = vmatmul.f32.gmra.mxu0 %v3739
    %v3741 = vpop.f32.mrf.mxu0
    %v3742 = vadd.f32 %v3707, %v3741
    %3743 = vdwg.mxu0
    %3744 = vmatpush.xpose.msra.mxu0 0.0
    %3745 = vmatpush.xpose.msra.mxu0 0.0
    %3746 = vmatpush.xpose.msra.mxu0 0.0
    %3747 = vmatpush.xpose.msra.mxu0 0.0
    %3748 = vmatpush.xpose.msra.mxu0 0.0
    %3749 = vmatpush.xpose.msra.mxu0 0.0
    %3750 = vmatpush.xpose.msra.mxu0 0.0
    %3751 = vmatpush.xpose.msra.mxu0 0.0
    %3752 = vmatpush.xpose.msra.mxu0 0.0
    %3753 = vmatpush.xpose.msra.mxu0 0.0
    %3754 = vmatpush.xpose.msra.mxu0 0.0
    %3755 = vmatpush.xpose.msra.mxu0 0.0
    %3756 = vmatpush.xpose.msra.mxu0 0.0
    %3757 = vmatpush.xpose.msra.mxu0 0.0
    %v3758 = vand.u32 %v3672, 4294901760
    %v3759 = vsub.f32 %v3672, %v3758
    %3760 = vmatpush.xpose.msra.mxu0 %v3759
    %v3761 = vand.u32 %v3669, 4294901760
    %v3762 = vsub.f32 %v3669, %v3761
    %3763 = vmatpush.xpose.msra.mxu0 %v3762
    %v3764 = vand.u32 %v3663, 4294901760
    %v3765 = vsub.f32 %v3663, %v3764
    %3766 = vmatmul.f32.gmra.mxu0 %v3765
    %v3767 = vpop.f32.mrf.mxu0
    %v3768 = vadd.f32 %v3738, %v3767
    %v3769 = vand.u32 %v3666, 4294901760
    %v3770 = vsub.f32 %v3666, %v3769
    %3771 = vmatmul.f32.gmra.mxu0 %v3770
    %v3772 = vpop.f32.mrf.mxu0
    %v3773 = vadd.f32 %v3742, %v3772
    %3774 = vdwg.mxu0
    %3775 = vmatpush.xpose.msra.mxu0 0.0
    %3776 = vmatpush.xpose.msra.mxu0 0.0
    %3777 = vmatpush.xpose.msra.mxu0 0.0
    %3778 = vmatpush.xpose.msra.mxu0 0.0
    %3779 = vmatpush.xpose.msra.mxu0 0.0
    %3780 = vmatpush.xpose.msra.mxu0 0.0
    %3781 = vmatpush.xpose.msra.mxu0 0.0
    %3782 = vmatpush.xpose.msra.mxu0 0.0
    %3783 = vmatpush.xpose.msra.mxu0 0.0
    %3784 = vmatpush.xpose.msra.mxu0 0.0
    %3785 = vmatpush.xpose.msra.mxu0 0.0
    %3786 = vmatpush.xpose.msra.mxu0 0.0
    %3787 = vmatpush.xpose.msra.mxu0 0.0
    %3788 = vmatpush.xpose.msra.mxu0 0.0
    %v3789 = vand.u32 %v3672, 4294901760
    %3790 = vmatpush.xpose.msra.mxu0 %v3789
    %v3791 = vand.u32 %v3669, 4294901760
    %3792 = vmatpush.xpose.msra.mxu0 %v3791
    %v3793 = vand.u32 %v3663, 4294901760
    %v3794 = vsub.f32 %v3663, %v3793
    %v3795 = vand.u32 %v3794, 4294901760
    %3796 = vmatmul.f32.gmra.mxu0 %v3795
    %v3797 = vpop.f32.mrf.mxu0
    %v3798 = vadd.f32 %v3768, %v3797
    %v3799 = vand.u32 %v3666, 4294901760
    %v3800 = vsub.f32 %v3666, %v3799
    %v3801 = vand.u32 %v3800, 4294901760
    %3802 = vmatmul.f32.gmra.mxu0 %v3801
    %v3803 = vpop.f32.mrf.mxu0
    %v3804 = vadd.f32 %v3773, %v3803
    %3805 = vdwg.mxu0
    %3806 = vmatpush.xpose.msra.mxu0 0.0
    %3807 = vmatpush.xpose.msra.mxu0 0.0
    %3808 = vmatpush.xpose.msra.mxu0 0.0
    %3809 = vmatpush.xpose.msra.mxu0 0.0
    %3810 = vmatpush.xpose.msra.mxu0 0.0
    %3811 = vmatpush.xpose.msra.mxu0 0.0
    %3812 = vmatpush.xpose.msra.mxu0 0.0
    %3813 = vmatpush.xpose.msra.mxu0 0.0
    %3814 = vmatpush.xpose.msra.mxu0 0.0
    %3815 = vmatpush.xpose.msra.mxu0 0.0
    %3816 = vmatpush.xpose.msra.mxu0 0.0
    %3817 = vmatpush.xpose.msra.mxu0 0.0
    %3818 = vmatpush.xpose.msra.mxu0 0.0
    %3819 = vmatpush.xpose.msra.mxu0 0.0
    %v3820 = vand.u32 %v3672, 4294901760
    %v3821 = vsub.f32 %v3672, %v3820
    %v3822 = vand.u32 %v3821, 4294901760
    %3823 = vmatpush.xpose.msra.mxu0 %v3822
    %v3824 = vand.u32 %v3669, 4294901760
    %v3825 = vsub.f32 %v3669, %v3824
    %v3826 = vand.u32 %v3825, 4294901760
    %3827 = vmatpush.xpose.msra.mxu0 %v3826
    %v3828 = vand.u32 %v3663, 4294901760
    %3829 = vmatmul.f32.gmra.mxu0 %v3828
    %v3830 = vpop.f32.mrf.mxu0
    %v3831 = vadd.f32 %v3798, %v3830
    %v3832 = vand.u32 %v3666, 4294901760
    %3833 = vmatmul.f32.gmra.mxu0 %v3832
    %v3834 = vpop.f32.mrf.mxu0
    %v3835 = vadd.f32 %v3804, %v3834
    %3836 = vdwg.mxu0
    %3837 = vmatpush.xpose.msra.mxu0 0.0
    %3838 = vmatpush.xpose.msra.mxu0 0.0
    %3839 = vmatpush.xpose.msra.mxu0 0.0
    %3840 = vmatpush.xpose.msra.mxu0 0.0
    %3841 = vmatpush.xpose.msra.mxu0 0.0
    %3842 = vmatpush.xpose.msra.mxu0 0.0
    %3843 = vmatpush.xpose.msra.mxu0 0.0
    %3844 = vmatpush.xpose.msra.mxu0 0.0
    %3845 = vmatpush.xpose.msra.mxu0 0.0
    %3846 = vmatpush.xpose.msra.mxu0 0.0
    %3847 = vmatpush.xpose.msra.mxu0 0.0
    %3848 = vmatpush.xpose.msra.mxu0 0.0
    %3849 = vmatpush.xpose.msra.mxu0 0.0
    %3850 = vmatpush.xpose.msra.mxu0 0.0
    %v3851 = vand.u32 %v3672, 4294901760
    %3852 = vmatpush.xpose.msra.mxu0 %v3851
    %v3853 = vand.u32 %v3669, 4294901760
    %3854 = vmatpush.xpose.msra.mxu0 %v3853
    %v3855 = vand.u32 %v3663, 4294901760
    %3856 = vmatmul.f32.gmra.mxu0 %v3855
    %v3857 = vpop.f32.mrf.mxu0
    %v3858 = vadd.f32 %v3831, %v3857
    %v3859 = vand.u32 %v3666, 4294901760
    %3860 = vmatmul.f32.gmra.mxu0 %v3859
    %v3861 = vpop.f32.mrf.mxu0
    %v3862 = vadd.f32 %v3835, %v3861
    %3863 = vdwg.mxu0
    %v3865 = vsel %vm61, %v746, 0
    %v3868 = vsel %vm61, %v747, 0
    %v3871 = vsel %vm61, %v1354, 0
    %v3874 = vsel %vm61, %v1358, 0
    %3876 = vmatpush.xpose.msra.mxu0 0.0
    %3877 = vmatpush.xpose.msra.mxu0 0.0
    %3878 = vmatpush.xpose.msra.mxu0 0.0
    %3879 = vmatpush.xpose.msra.mxu0 0.0
    %3880 = vmatpush.xpose.msra.mxu0 0.0
    %3881 = vmatpush.xpose.msra.mxu0 0.0
    %3882 = vmatpush.xpose.msra.mxu0 0.0
    %3883 = vmatpush.xpose.msra.mxu0 0.0
    %3884 = vmatpush.xpose.msra.mxu0 0.0
    %3885 = vmatpush.xpose.msra.mxu0 0.0
    %3886 = vmatpush.xpose.msra.mxu0 0.0
    %3887 = vmatpush.xpose.msra.mxu0 0.0
    %3888 = vmatpush.xpose.msra.mxu0 0.0
    %3889 = vmatpush.xpose.msra.mxu0 0.0
    %v3890 = vand.u32 %v3874, 4294901760
    %3891 = vmatpush.xpose.msra.mxu0 %v3890
    %v3892 = vand.u32 %v3871, 4294901760
    %3893 = vmatpush.xpose.msra.mxu0 %v3892
    %v3894 = vand.u32 %v3865, 4294901760
    %v3895 = vsub.f32 %v3865, %v3894
    %v3896 = vand.u32 %v3895, 4294901760
    %v3897 = vsub.f32 %v3895, %v3896
    %v3898 = vand.u32 %v3897, 4294901760
    %3899 = vmatmul.f32.gmra.mxu0 %v3898
    %v3900 = vpop.f32.mrf.mxu0
    %v3901 = vadd.f32 0.0, %v3900
    %v3902 = vand.u32 %v3868, 4294901760
    %v3903 = vsub.f32 %v3868, %v3902
    %v3904 = vand.u32 %v3903, 4294901760
    %v3905 = vsub.f32 %v3903, %v3904
    %v3906 = vand.u32 %v3905, 4294901760
    %3907 = vmatmul.f32.gmra.mxu0 %v3906
    %v3908 = vpop.f32.mrf.mxu0
    %v3909 = vadd.f32 0.0, %v3908
    %3910 = vdwg.mxu0
    %3911 = vmatpush.xpose.msra.mxu0 0.0
    %3912 = vmatpush.xpose.msra.mxu0 0.0
    %3913 = vmatpush.xpose.msra.mxu0 0.0
    %3914 = vmatpush.xpose.msra.mxu0 0.0
    %3915 = vmatpush.xpose.msra.mxu0 0.0
    %3916 = vmatpush.xpose.msra.mxu0 0.0
    %3917 = vmatpush.xpose.msra.mxu0 0.0
    %3918 = vmatpush.xpose.msra.mxu0 0.0
    %3919 = vmatpush.xpose.msra.mxu0 0.0
    %3920 = vmatpush.xpose.msra.mxu0 0.0
    %3921 = vmatpush.xpose.msra.mxu0 0.0
    %3922 = vmatpush.xpose.msra.mxu0 0.0
    %3923 = vmatpush.xpose.msra.mxu0 0.0
    %3924 = vmatpush.xpose.msra.mxu0 0.0
    %v3925 = vand.u32 %v3874, 4294901760
    %v3926 = vsub.f32 %v3874, %v3925
    %v3927 = vand.u32 %v3926, 4294901760
    %v3928 = vsub.f32 %v3926, %v3927
    %v3929 = vand.u32 %v3928, 4294901760
    %3930 = vmatpush.xpose.msra.mxu0 %v3929
    %v3931 = vand.u32 %v3871, 4294901760
    %v3932 = vsub.f32 %v3871, %v3931
    %v3933 = vand.u32 %v3932, 4294901760
    %v3934 = vsub.f32 %v3932, %v3933
    %v3935 = vand.u32 %v3934, 4294901760
    %3936 = vmatpush.xpose.msra.mxu0 %v3935
    %v3937 = vand.u32 %v3865, 4294901760
    %3938 = vmatmul.f32.gmra.mxu0 %v3937
    %v3939 = vpop.f32.mrf.mxu0
    %v3940 = vadd.f32 %v3901, %v3939
    %v3941 = vand.u32 %v3868, 4294901760
    %3942 = vmatmul.f32.gmra.mxu0 %v3941
    %v3943 = vpop.f32.mrf.mxu0
    %v3944 = vadd.f32 %v3909, %v3943
    %3945 = vdwg.mxu0
    %3946 = vmatpush.xpose.msra.mxu0 0.0
    %3947 = vmatpush.xpose.msra.mxu0 0.0
    %3948 = vmatpush.xpose.msra.mxu0 0.0
    %3949 = vmatpush.xpose.msra.mxu0 0.0
    %3950 = vmatpush.xpose.msra.mxu0 0.0
    %3951 = vmatpush.xpose.msra.mxu0 0.0
    %3952 = vmatpush.xpose.msra.mxu0 0.0
    %3953 = vmatpush.xpose.msra.mxu0 0.0
    %3954 = vmatpush.xpose.msra.mxu0 0.0
    %3955 = vmatpush.xpose.msra.mxu0 0.0
    %3956 = vmatpush.xpose.msra.mxu0 0.0
    %3957 = vmatpush.xpose.msra.mxu0 0.0
    %3958 = vmatpush.xpose.msra.mxu0 0.0
    %3959 = vmatpush.xpose.msra.mxu0 0.0
    %v3960 = vand.u32 %v3874, 4294901760
    %v3961 = vsub.f32 %v3874, %v3960
    %3962 = vmatpush.xpose.msra.mxu0 %v3961
    %v3963 = vand.u32 %v3871, 4294901760
    %v3964 = vsub.f32 %v3871, %v3963
    %3965 = vmatpush.xpose.msra.mxu0 %v3964
    %v3966 = vand.u32 %v3865, 4294901760
    %v3967 = vsub.f32 %v3865, %v3966
    %3968 = vmatmul.f32.gmra.mxu0 %v3967
    %v3969 = vpop.f32.mrf.mxu0
    %v3970 = vadd.f32 %v3940, %v3969
    %v3971 = vand.u32 %v3868, 4294901760
    %v3972 = vsub.f32 %v3868, %v3971
    %3973 = vmatmul.f32.gmra.mxu0 %v3972
    %v3974 = vpop.f32.mrf.mxu0
    %v3975 = vadd.f32 %v3944, %v3974
    %3976 = vdwg.mxu0
    %3977 = vmatpush.xpose.msra.mxu0 0.0
    %3978 = vmatpush.xpose.msra.mxu0 0.0
    %3979 = vmatpush.xpose.msra.mxu0 0.0
    %3980 = vmatpush.xpose.msra.mxu0 0.0
    %3981 = vmatpush.xpose.msra.mxu0 0.0
    %3982 = vmatpush.xpose.msra.mxu0 0.0
    %3983 = vmatpush.xpose.msra.mxu0 0.0
    %3984 = vmatpush.xpose.msra.mxu0 0.0
    %3985 = vmatpush.xpose.msra.mxu0 0.0
    %3986 = vmatpush.xpose.msra.mxu0 0.0
    %3987 = vmatpush.xpose.msra.mxu0 0.0
    %3988 = vmatpush.xpose.msra.mxu0 0.0
    %3989 = vmatpush.xpose.msra.mxu0 0.0
    %3990 = vmatpush.xpose.msra.mxu0 0.0
    %v3991 = vand.u32 %v3874, 4294901760
    %3992 = vmatpush.xpose.msra.mxu0 %v3991
    %v3993 = vand.u32 %v3871, 4294901760
    %3994 = vmatpush.xpose.msra.mxu0 %v3993
    %v3995 = vand.u32 %v3865, 4294901760
    %v3996 = vsub.f32 %v3865, %v3995
    %v3997 = vand.u32 %v3996, 4294901760
    %3998 = vmatmul.f32.gmra.mxu0 %v3997
    %v3999 = vpop.f32.mrf.mxu0
    %v4000 = vadd.f32 %v3970, %v3999
    %v4001 = vand.u32 %v3868, 4294901760
    %v4002 = vsub.f32 %v3868, %v4001
    %v4003 = vand.u32 %v4002, 4294901760
    %4004 = vmatmul.f32.gmra.mxu0 %v4003
    %v4005 = vpop.f32.mrf.mxu0
    %v4006 = vadd.f32 %v3975, %v4005
    %4007 = vdwg.mxu0
    %4008 = vmatpush.xpose.msra.mxu0 0.0
    %4009 = vmatpush.xpose.msra.mxu0 0.0
    %4010 = vmatpush.xpose.msra.mxu0 0.0
    %4011 = vmatpush.xpose.msra.mxu0 0.0
    %4012 = vmatpush.xpose.msra.mxu0 0.0
    %4013 = vmatpush.xpose.msra.mxu0 0.0
    %4014 = vmatpush.xpose.msra.mxu0 0.0
    %4015 = vmatpush.xpose.msra.mxu0 0.0
    %4016 = vmatpush.xpose.msra.mxu0 0.0
    %4017 = vmatpush.xpose.msra.mxu0 0.0
    %4018 = vmatpush.xpose.msra.mxu0 0.0
    %4019 = vmatpush.xpose.msra.mxu0 0.0
    %4020 = vmatpush.xpose.msra.mxu0 0.0
    %4021 = vmatpush.xpose.msra.mxu0 0.0
    %v4022 = vand.u32 %v3874, 4294901760
    %v4023 = vsub.f32 %v3874, %v4022
    %v4024 = vand.u32 %v4023, 4294901760
    %4025 = vmatpush.xpose.msra.mxu0 %v4024
    %v4026 = vand.u32 %v3871, 4294901760
    %v4027 = vsub.f32 %v3871, %v4026
    %v4028 = vand.u32 %v4027, 4294901760
    %4029 = vmatpush.xpose.msra.mxu0 %v4028
    %v4030 = vand.u32 %v3865, 4294901760
    %4031 = vmatmul.f32.gmra.mxu0 %v4030
    %v4032 = vpop.f32.mrf.mxu0
    %v4033 = vadd.f32 %v4000, %v4032
    %v4034 = vand.u32 %v3868, 4294901760
    %4035 = vmatmul.f32.gmra.mxu0 %v4034
    %v4036 = vpop.f32.mrf.mxu0
    %v4037 = vadd.f32 %v4006, %v4036
    %4038 = vdwg.mxu0
    %4039 = vmatpush.xpose.msra.mxu0 0.0
    %4040 = vmatpush.xpose.msra.mxu0 0.0
    %4041 = vmatpush.xpose.msra.mxu0 0.0
    %4042 = vmatpush.xpose.msra.mxu0 0.0
    %4043 = vmatpush.xpose.msra.mxu0 0.0
    %4044 = vmatpush.xpose.msra.mxu0 0.0
    %4045 = vmatpush.xpose.msra.mxu0 0.0
    %4046 = vmatpush.xpose.msra.mxu0 0.0
    %4047 = vmatpush.xpose.msra.mxu0 0.0
    %4048 = vmatpush.xpose.msra.mxu0 0.0
    %4049 = vmatpush.xpose.msra.mxu0 0.0
    %4050 = vmatpush.xpose.msra.mxu0 0.0
    %4051 = vmatpush.xpose.msra.mxu0 0.0
    %4052 = vmatpush.xpose.msra.mxu0 0.0
    %v4053 = vand.u32 %v3874, 4294901760
    %4054 = vmatpush.xpose.msra.mxu0 %v4053
    %v4055 = vand.u32 %v3871, 4294901760
    %4056 = vmatpush.xpose.msra.mxu0 %v4055
    %v4057 = vand.u32 %v3865, 4294901760
    %4058 = vmatmul.f32.gmra.mxu0 %v4057
    %v4059 = vpop.f32.mrf.mxu0
    %v4060 = vadd.f32 %v4033, %v4059
    %v4061 = vand.u32 %v3868, 4294901760
    %4062 = vmatmul.f32.gmra.mxu0 %v4061
    %v4063 = vpop.f32.mrf.mxu0
    %v4064 = vadd.f32 %v4037, %v4063
    %4065 = vdwg.mxu0
    %v4067 = vsel %vm61, %v748, 0
    %v4070 = vsel %vm61, %v749, 0
    %v4073 = vsel %vm61, %v1362, 0
    %v4076 = vsel %vm61, %v1366, 0
    %4078 = vmatpush.xpose.msra.mxu0 0.0
    %4079 = vmatpush.xpose.msra.mxu0 0.0
    %4080 = vmatpush.xpose.msra.mxu0 0.0
    %4081 = vmatpush.xpose.msra.mxu0 0.0
    %4082 = vmatpush.xpose.msra.mxu0 0.0
    %4083 = vmatpush.xpose.msra.mxu0 0.0
    %4084 = vmatpush.xpose.msra.mxu0 0.0
    %4085 = vmatpush.xpose.msra.mxu0 0.0
    %4086 = vmatpush.xpose.msra.mxu0 0.0
    %4087 = vmatpush.xpose.msra.mxu0 0.0
    %4088 = vmatpush.xpose.msra.mxu0 0.0
    %4089 = vmatpush.xpose.msra.mxu0 0.0
    %4090 = vmatpush.xpose.msra.mxu0 0.0
    %4091 = vmatpush.xpose.msra.mxu0 0.0
    %v4092 = vand.u32 %v4076, 4294901760
    %4093 = vmatpush.xpose.msra.mxu0 %v4092
    %v4094 = vand.u32 %v4073, 4294901760
    %4095 = vmatpush.xpose.msra.mxu0 %v4094
    %v4096 = vand.u32 %v4067, 4294901760
    %v4097 = vsub.f32 %v4067, %v4096
    %v4098 = vand.u32 %v4097, 4294901760
    %v4099 = vsub.f32 %v4097, %v4098
    %v4100 = vand.u32 %v4099, 4294901760
    %4101 = vmatmul.f32.gmra.mxu0 %v4100
    %v4102 = vpop.f32.mrf.mxu0
    %v4103 = vadd.f32 0.0, %v4102
    %v4104 = vand.u32 %v4070, 4294901760
    %v4105 = vsub.f32 %v4070, %v4104
    %v4106 = vand.u32 %v4105, 4294901760
    %v4107 = vsub.f32 %v4105, %v4106
    %v4108 = vand.u32 %v4107, 4294901760
    %4109 = vmatmul.f32.gmra.mxu0 %v4108
    %v4110 = vpop.f32.mrf.mxu0
    %v4111 = vadd.f32 0.0, %v4110
    %4112 = vdwg.mxu0
    %4113 = vmatpush.xpose.msra.mxu0 0.0
    %4114 = vmatpush.xpose.msra.mxu0 0.0
    %4115 = vmatpush.xpose.msra.mxu0 0.0
    %4116 = vmatpush.xpose.msra.mxu0 0.0
    %4117 = vmatpush.xpose.msra.mxu0 0.0
    %4118 = vmatpush.xpose.msra.mxu0 0.0
    %4119 = vmatpush.xpose.msra.mxu0 0.0
    %4120 = vmatpush.xpose.msra.mxu0 0.0
    %4121 = vmatpush.xpose.msra.mxu0 0.0
    %4122 = vmatpush.xpose.msra.mxu0 0.0
    %4123 = vmatpush.xpose.msra.mxu0 0.0
    %4124 = vmatpush.xpose.msra.mxu0 0.0
    %4125 = vmatpush.xpose.msra.mxu0 0.0
    %4126 = vmatpush.xpose.msra.mxu0 0.0
    %v4127 = vand.u32 %v4076, 4294901760
    %v4128 = vsub.f32 %v4076, %v4127
    %v4129 = vand.u32 %v4128, 4294901760
    %v4130 = vsub.f32 %v4128, %v4129
    %v4131 = vand.u32 %v4130, 4294901760
    %4132 = vmatpush.xpose.msra.mxu0 %v4131
    %v4133 = vand.u32 %v4073, 4294901760
    %v4134 = vsub.f32 %v4073, %v4133
    %v4135 = vand.u32 %v4134, 4294901760
    %v4136 = vsub.f32 %v4134, %v4135
    %v4137 = vand.u32 %v4136, 4294901760
    %4138 = vmatpush.xpose.msra.mxu0 %v4137
    %v4139 = vand.u32 %v4067, 4294901760
    %4140 = vmatmul.f32.gmra.mxu0 %v4139
    %v4141 = vpop.f32.mrf.mxu0
    %v4142 = vadd.f32 %v4103, %v4141
    %v4143 = vand.u32 %v4070, 4294901760
    %4144 = vmatmul.f32.gmra.mxu0 %v4143
    %v4145 = vpop.f32.mrf.mxu0
    %v4146 = vadd.f32 %v4111, %v4145
    %4147 = vdwg.mxu0
    %4148 = vmatpush.xpose.msra.mxu0 0.0
    %4149 = vmatpush.xpose.msra.mxu0 0.0
    %4150 = vmatpush.xpose.msra.mxu0 0.0
    %4151 = vmatpush.xpose.msra.mxu0 0.0
    %4152 = vmatpush.xpose.msra.mxu0 0.0
    %4153 = vmatpush.xpose.msra.mxu0 0.0
    %4154 = vmatpush.xpose.msra.mxu0 0.0
    %4155 = vmatpush.xpose.msra.mxu0 0.0
    %4156 = vmatpush.xpose.msra.mxu0 0.0
    %4157 = vmatpush.xpose.msra.mxu0 0.0
    %4158 = vmatpush.xpose.msra.mxu0 0.0
    %4159 = vmatpush.xpose.msra.mxu0 0.0
    %4160 = vmatpush.xpose.msra.mxu0 0.0
    %4161 = vmatpush.xpose.msra.mxu0 0.0
    %v4162 = vand.u32 %v4076, 4294901760
    %v4163 = vsub.f32 %v4076, %v4162
    %4164 = vmatpush.xpose.msra.mxu0 %v4163
    %v4165 = vand.u32 %v4073, 4294901760
    %v4166 = vsub.f32 %v4073, %v4165
    %4167 = vmatpush.xpose.msra.mxu0 %v4166
    %v4168 = vand.u32 %v4067, 4294901760
    %v4169 = vsub.f32 %v4067, %v4168
    %4170 = vmatmul.f32.gmra.mxu0 %v4169
    %v4171 = vpop.f32.mrf.mxu0
    %v4172 = vadd.f32 %v4142, %v4171
    %v4173 = vand.u32 %v4070, 4294901760
    %v4174 = vsub.f32 %v4070, %v4173
    %4175 = vmatmul.f32.gmra.mxu0 %v4174
    %v4176 = vpop.f32.mrf.mxu0
    %v4177 = vadd.f32 %v4146, %v4176
    %4178 = vdwg.mxu0
    %4179 = vmatpush.xpose.msra.mxu0 0.0
    %4180 = vmatpush.xpose.msra.mxu0 0.0
    %4181 = vmatpush.xpose.msra.mxu0 0.0
    %4182 = vmatpush.xpose.msra.mxu0 0.0
    %4183 = vmatpush.xpose.msra.mxu0 0.0
    %4184 = vmatpush.xpose.msra.mxu0 0.0
    %4185 = vmatpush.xpose.msra.mxu0 0.0
    %4186 = vmatpush.xpose.msra.mxu0 0.0
    %4187 = vmatpush.xpose.msra.mxu0 0.0
    %4188 = vmatpush.xpose.msra.mxu0 0.0
    %4189 = vmatpush.xpose.msra.mxu0 0.0
    %4190 = vmatpush.xpose.msra.mxu0 0.0
    %4191 = vmatpush.xpose.msra.mxu0 0.0
    %4192 = vmatpush.xpose.msra.mxu0 0.0
    %v4193 = vand.u32 %v4076, 4294901760
    %4194 = vmatpush.xpose.msra.mxu0 %v4193
    %v4195 = vand.u32 %v4073, 4294901760
    %4196 = vmatpush.xpose.msra.mxu0 %v4195
    %v4197 = vand.u32 %v4067, 4294901760
    %v4198 = vsub.f32 %v4067, %v4197
    %v4199 = vand.u32 %v4198, 4294901760
    %4200 = vmatmul.f32.gmra.mxu0 %v4199
    %v4201 = vpop.f32.mrf.mxu0
    %v4202 = vadd.f32 %v4172, %v4201
    %v4203 = vand.u32 %v4070, 4294901760
    %v4204 = vsub.f32 %v4070, %v4203
    %v4205 = vand.u32 %v4204, 4294901760
    %4206 = vmatmul.f32.gmra.mxu0 %v4205
    %v4207 = vpop.f32.mrf.mxu0
    %v4208 = vadd.f32 %v4177, %v4207
    %4209 = vdwg.mxu0
    %4210 = vmatpush.xpose.msra.mxu0 0.0
    %4211 = vmatpush.xpose.msra.mxu0 0.0
    %4212 = vmatpush.xpose.msra.mxu0 0.0
    %4213 = vmatpush.xpose.msra.mxu0 0.0
    %4214 = vmatpush.xpose.msra.mxu0 0.0
    %4215 = vmatpush.xpose.msra.mxu0 0.0
    %4216 = vmatpush.xpose.msra.mxu0 0.0
    %4217 = vmatpush.xpose.msra.mxu0 0.0
    %4218 = vmatpush.xpose.msra.mxu0 0.0
    %4219 = vmatpush.xpose.msra.mxu0 0.0
    %4220 = vmatpush.xpose.msra.mxu0 0.0
    %4221 = vmatpush.xpose.msra.mxu0 0.0
    %4222 = vmatpush.xpose.msra.mxu0 0.0
    %4223 = vmatpush.xpose.msra.mxu0 0.0
    %v4224 = vand.u32 %v4076, 4294901760
    %v4225 = vsub.f32 %v4076, %v4224
    %v4226 = vand.u32 %v4225, 4294901760
    %4227 = vmatpush.xpose.msra.mxu0 %v4226
    %v4228 = vand.u32 %v4073, 4294901760
    %v4229 = vsub.f32 %v4073, %v4228
    %v4230 = vand.u32 %v4229, 4294901760
    %4231 = vmatpush.xpose.msra.mxu0 %v4230
    %v4232 = vand.u32 %v4067, 4294901760
    %4233 = vmatmul.f32.gmra.mxu0 %v4232
    %v4234 = vpop.f32.mrf.mxu0
    %v4235 = vadd.f32 %v4202, %v4234
    %v4236 = vand.u32 %v4070, 4294901760
    %4237 = vmatmul.f32.gmra.mxu0 %v4236
    %v4238 = vpop.f32.mrf.mxu0
    %v4239 = vadd.f32 %v4208, %v4238
    %4240 = vdwg.mxu0
    %4241 = vmatpush.xpose.msra.mxu0 0.0
    %4242 = vmatpush.xpose.msra.mxu0 0.0
    %4243 = vmatpush.xpose.msra.mxu0 0.0
    %4244 = vmatpush.xpose.msra.mxu0 0.0
    %4245 = vmatpush.xpose.msra.mxu0 0.0
    %4246 = vmatpush.xpose.msra.mxu0 0.0
    %4247 = vmatpush.xpose.msra.mxu0 0.0
    %4248 = vmatpush.xpose.msra.mxu0 0.0
    %4249 = vmatpush.xpose.msra.mxu0 0.0
    %4250 = vmatpush.xpose.msra.mxu0 0.0
    %4251 = vmatpush.xpose.msra.mxu0 0.0
    %4252 = vmatpush.xpose.msra.mxu0 0.0
    %4253 = vmatpush.xpose.msra.mxu0 0.0
    %4254 = vmatpush.xpose.msra.mxu0 0.0
    %v4255 = vand.u32 %v4076, 4294901760
    %4256 = vmatpush.xpose.msra.mxu0 %v4255
    %v4257 = vand.u32 %v4073, 4294901760
    %4258 = vmatpush.xpose.msra.mxu0 %v4257
    %v4259 = vand.u32 %v4067, 4294901760
    %4260 = vmatmul.f32.gmra.mxu0 %v4259
    %v4261 = vpop.f32.mrf.mxu0
    %v4262 = vadd.f32 %v4235, %v4261
    %v4263 = vand.u32 %v4070, 4294901760
    %4264 = vmatmul.f32.gmra.mxu0 %v4263
    %v4265 = vpop.f32.mrf.mxu0
    %v4266 = vadd.f32 %v4239, %v4265
    %4267 = vdwg.mxu0
    %v4269 = vsel %vm61, %v750, 0
    %v4272 = vsel %vm61, %v751, 0
    %v4275 = vsel %vm61, %v1370, 0
    %v4278 = vsel %vm61, %v1374, 0
    %4280 = vmatpush.xpose.msra.mxu0 0.0
    %4281 = vmatpush.xpose.msra.mxu0 0.0
    %4282 = vmatpush.xpose.msra.mxu0 0.0
    %4283 = vmatpush.xpose.msra.mxu0 0.0
    %4284 = vmatpush.xpose.msra.mxu0 0.0
    %4285 = vmatpush.xpose.msra.mxu0 0.0
    %4286 = vmatpush.xpose.msra.mxu0 0.0
    %4287 = vmatpush.xpose.msra.mxu0 0.0
    %4288 = vmatpush.xpose.msra.mxu0 0.0
    %4289 = vmatpush.xpose.msra.mxu0 0.0
    %4290 = vmatpush.xpose.msra.mxu0 0.0
    %4291 = vmatpush.xpose.msra.mxu0 0.0
    %4292 = vmatpush.xpose.msra.mxu0 0.0
    %4293 = vmatpush.xpose.msra.mxu0 0.0
    %v4294 = vand.u32 %v4278, 4294901760
    %4295 = vmatpush.xpose.msra.mxu0 %v4294
    %v4296 = vand.u32 %v4275, 4294901760
    %4297 = vmatpush.xpose.msra.mxu0 %v4296
    %v4298 = vand.u32 %v4269, 4294901760
    %v4299 = vsub.f32 %v4269, %v4298
    %v4300 = vand.u32 %v4299, 4294901760
    %v4301 = vsub.f32 %v4299, %v4300
    %v4302 = vand.u32 %v4301, 4294901760
    %4303 = vmatmul.f32.gmra.mxu0 %v4302
    %v4304 = vpop.f32.mrf.mxu0
    %v4305 = vadd.f32 0.0, %v4304
    %v4306 = vand.u32 %v4272, 4294901760
    %v4307 = vsub.f32 %v4272, %v4306
    %v4308 = vand.u32 %v4307, 4294901760
    %v4309 = vsub.f32 %v4307, %v4308
    %v4310 = vand.u32 %v4309, 4294901760
    %4311 = vmatmul.f32.gmra.mxu0 %v4310
    %v4312 = vpop.f32.mrf.mxu0
    %v4313 = vadd.f32 0.0, %v4312
    %4314 = vdwg.mxu0
    %4315 = vmatpush.xpose.msra.mxu0 0.0
    %4316 = vmatpush.xpose.msra.mxu0 0.0
    %4317 = vmatpush.xpose.msra.mxu0 0.0
    %4318 = vmatpush.xpose.msra.mxu0 0.0
    %4319 = vmatpush.xpose.msra.mxu0 0.0
    %4320 = vmatpush.xpose.msra.mxu0 0.0
    %4321 = vmatpush.xpose.msra.mxu0 0.0
    %4322 = vmatpush.xpose.msra.mxu0 0.0
    %4323 = vmatpush.xpose.msra.mxu0 0.0
    %4324 = vmatpush.xpose.msra.mxu0 0.0
    %4325 = vmatpush.xpose.msra.mxu0 0.0
    %4326 = vmatpush.xpose.msra.mxu0 0.0
    %4327 = vmatpush.xpose.msra.mxu0 0.0
    %4328 = vmatpush.xpose.msra.mxu0 0.0
    %v4329 = vand.u32 %v4278, 4294901760
    %v4330 = vsub.f32 %v4278, %v4329
    %v4331 = vand.u32 %v4330, 4294901760
    %v4332 = vsub.f32 %v4330, %v4331
    %v4333 = vand.u32 %v4332, 4294901760
    %4334 = vmatpush.xpose.msra.mxu0 %v4333
    %v4335 = vand.u32 %v4275, 4294901760
    %v4336 = vsub.f32 %v4275, %v4335
    %v4337 = vand.u32 %v4336, 4294901760
    %v4338 = vsub.f32 %v4336, %v4337
    %v4339 = vand.u32 %v4338, 4294901760
    %4340 = vmatpush.xpose.msra.mxu0 %v4339
    %v4341 = vand.u32 %v4269, 4294901760
    %4342 = vmatmul.f32.gmra.mxu0 %v4341
    %v4343 = vpop.f32.mrf.mxu0
    %v4344 = vadd.f32 %v4305, %v4343
    %v4345 = vand.u32 %v4272, 4294901760
    %4346 = vmatmul.f32.gmra.mxu0 %v4345
    %v4347 = vpop.f32.mrf.mxu0
    %v4348 = vadd.f32 %v4313, %v4347
    %4349 = vdwg.mxu0
    %4350 = vmatpush.xpose.msra.mxu0 0.0
    %4351 = vmatpush.xpose.msra.mxu0 0.0
    %4352 = vmatpush.xpose.msra.mxu0 0.0
    %4353 = vmatpush.xpose.msra.mxu0 0.0
    %4354 = vmatpush.xpose.msra.mxu0 0.0
    %4355 = vmatpush.xpose.msra.mxu0 0.0
    %4356 = vmatpush.xpose.msra.mxu0 0.0
    %4357 = vmatpush.xpose.msra.mxu0 0.0
    %4358 = vmatpush.xpose.msra.mxu0 0.0
    %4359 = vmatpush.xpose.msra.mxu0 0.0
    %4360 = vmatpush.xpose.msra.mxu0 0.0
    %4361 = vmatpush.xpose.msra.mxu0 0.0
    %4362 = vmatpush.xpose.msra.mxu0 0.0
    %4363 = vmatpush.xpose.msra.mxu0 0.0
    %v4364 = vand.u32 %v4278, 4294901760
    %v4365 = vsub.f32 %v4278, %v4364
    %4366 = vmatpush.xpose.msra.mxu0 %v4365
    %v4367 = vand.u32 %v4275, 4294901760
    %v4368 = vsub.f32 %v4275, %v4367
    %4369 = vmatpush.xpose.msra.mxu0 %v4368
    %v4370 = vand.u32 %v4269, 4294901760
    %v4371 = vsub.f32 %v4269, %v4370
    %4372 = vmatmul.f32.gmra.mxu0 %v4371
    %v4373 = vpop.f32.mrf.mxu0
    %v4374 = vadd.f32 %v4344, %v4373
    %v4375 = vand.u32 %v4272, 4294901760
    %v4376 = vsub.f32 %v4272, %v4375
    %4377 = vmatmul.f32.gmra.mxu0 %v4376
    %v4378 = vpop.f32.mrf.mxu0
    %v4379 = vadd.f32 %v4348, %v4378
    %4380 = vdwg.mxu0
    %4381 = vmatpush.xpose.msra.mxu0 0.0
    %4382 = vmatpush.xpose.msra.mxu0 0.0
    %4383 = vmatpush.xpose.msra.mxu0 0.0
    %4384 = vmatpush.xpose.msra.mxu0 0.0
    %4385 = vmatpush.xpose.msra.mxu0 0.0
    %4386 = vmatpush.xpose.msra.mxu0 0.0
    %4387 = vmatpush.xpose.msra.mxu0 0.0
    %4388 = vmatpush.xpose.msra.mxu0 0.0
    %4389 = vmatpush.xpose.msra.mxu0 0.0
    %4390 = vmatpush.xpose.msra.mxu0 0.0
    %4391 = vmatpush.xpose.msra.mxu0 0.0
    %4392 = vmatpush.xpose.msra.mxu0 0.0
    %4393 = vmatpush.xpose.msra.mxu0 0.0
    %4394 = vmatpush.xpose.msra.mxu0 0.0
    %v4395 = vand.u32 %v4278, 4294901760
    %4396 = vmatpush.xpose.msra.mxu0 %v4395
    %v4397 = vand.u32 %v4275, 4294901760
    %4398 = vmatpush.xpose.msra.mxu0 %v4397
    %v4399 = vand.u32 %v4269, 4294901760
    %v4400 = vsub.f32 %v4269, %v4399
    %v4401 = vand.u32 %v4400, 4294901760
    %4402 = vmatmul.f32.gmra.mxu0 %v4401
    %v4403 = vpop.f32.mrf.mxu0
    %v4404 = vadd.f32 %v4374, %v4403
    %v4405 = vand.u32 %v4272, 4294901760
    %v4406 = vsub.f32 %v4272, %v4405
    %v4407 = vand.u32 %v4406, 4294901760
    %4408 = vmatmul.f32.gmra.mxu0 %v4407
    %v4409 = vpop.f32.mrf.mxu0
    %v4410 = vadd.f32 %v4379, %v4409
    %4411 = vdwg.mxu0
    %4412 = vmatpush.xpose.msra.mxu0 0.0
    %4413 = vmatpush.xpose.msra.mxu0 0.0
    %4414 = vmatpush.xpose.msra.mxu0 0.0
    %4415 = vmatpush.xpose.msra.mxu0 0.0
    %4416 = vmatpush.xpose.msra.mxu0 0.0
    %4417 = vmatpush.xpose.msra.mxu0 0.0
    %4418 = vmatpush.xpose.msra.mxu0 0.0
    %4419 = vmatpush.xpose.msra.mxu0 0.0
    %4420 = vmatpush.xpose.msra.mxu0 0.0
    %4421 = vmatpush.xpose.msra.mxu0 0.0
    %4422 = vmatpush.xpose.msra.mxu0 0.0
    %4423 = vmatpush.xpose.msra.mxu0 0.0
    %4424 = vmatpush.xpose.msra.mxu0 0.0
    %4425 = vmatpush.xpose.msra.mxu0 0.0
    %v4426 = vand.u32 %v4278, 4294901760
    %v4427 = vsub.f32 %v4278, %v4426
    %v4428 = vand.u32 %v4427, 4294901760
    %4429 = vmatpush.xpose.msra.mxu0 %v4428
    %v4430 = vand.u32 %v4275, 4294901760
    %v4431 = vsub.f32 %v4275, %v4430
    %v4432 = vand.u32 %v4431, 4294901760
    %4433 = vmatpush.xpose.msra.mxu0 %v4432
    %v4434 = vand.u32 %v4269, 4294901760
    %4435 = vmatmul.f32.gmra.mxu0 %v4434
    %v4436 = vpop.f32.mrf.mxu0
    %v4437 = vadd.f32 %v4404, %v4436
    %v4438 = vand.u32 %v4272, 4294901760
    %4439 = vmatmul.f32.gmra.mxu0 %v4438
    %v4440 = vpop.f32.mrf.mxu0
    %v4441 = vadd.f32 %v4410, %v4440
    %4442 = vdwg.mxu0
    %4443 = vmatpush.xpose.msra.mxu0 0.0
    %4444 = vmatpush.xpose.msra.mxu0 0.0
    %4445 = vmatpush.xpose.msra.mxu0 0.0
    %4446 = vmatpush.xpose.msra.mxu0 0.0
    %4447 = vmatpush.xpose.msra.mxu0 0.0
    %4448 = vmatpush.xpose.msra.mxu0 0.0
    %4449 = vmatpush.xpose.msra.mxu0 0.0
    %4450 = vmatpush.xpose.msra.mxu0 0.0
    %4451 = vmatpush.xpose.msra.mxu0 0.0
    %4452 = vmatpush.xpose.msra.mxu0 0.0
    %4453 = vmatpush.xpose.msra.mxu0 0.0
    %4454 = vmatpush.xpose.msra.mxu0 0.0
    %4455 = vmatpush.xpose.msra.mxu0 0.0
    %4456 = vmatpush.xpose.msra.mxu0 0.0
    %v4457 = vand.u32 %v4278, 4294901760
    %4458 = vmatpush.xpose.msra.mxu0 %v4457
    %v4459 = vand.u32 %v4275, 4294901760
    %4460 = vmatpush.xpose.msra.mxu0 %v4459
    %v4461 = vand.u32 %v4269, 4294901760
    %4462 = vmatmul.f32.gmra.mxu0 %v4461
    %v4463 = vpop.f32.mrf.mxu0
    %v4464 = vadd.f32 %v4437, %v4463
    %v4465 = vand.u32 %v4272, 4294901760
    %4466 = vmatmul.f32.gmra.mxu0 %v4465
    %v4467 = vpop.f32.mrf.mxu0
    %v4468 = vadd.f32 %v4441, %v4467
    %4469 = vdwg.mxu0
    %v4471 = vsel %vm61, %v752, 0
    %v4474 = vsel %vm61, %v753, 0
    %v4477 = vsel %vm61, %v1378, 0
    %v4480 = vsel %vm61, %v1382, 0
    %4482 = vmatpush.xpose.msra.mxu0 0.0
    %4483 = vmatpush.xpose.msra.mxu0 0.0
    %4484 = vmatpush.xpose.msra.mxu0 0.0
    %4485 = vmatpush.xpose.msra.mxu0 0.0
    %4486 = vmatpush.xpose.msra.mxu0 0.0
    %4487 = vmatpush.xpose.msra.mxu0 0.0
    %4488 = vmatpush.xpose.msra.mxu0 0.0
    %4489 = vmatpush.xpose.msra.mxu0 0.0
    %4490 = vmatpush.xpose.msra.mxu0 0.0
    %4491 = vmatpush.xpose.msra.mxu0 0.0
    %4492 = vmatpush.xpose.msra.mxu0 0.0
    %4493 = vmatpush.xpose.msra.mxu0 0.0
    %4494 = vmatpush.xpose.msra.mxu0 0.0
    %4495 = vmatpush.xpose.msra.mxu0 0.0
    %v4496 = vand.u32 %v4480, 4294901760
    %4497 = vmatpush.xpose.msra.mxu0 %v4496
    %v4498 = vand.u32 %v4477, 4294901760
    %4499 = vmatpush.xpose.msra.mxu0 %v4498
    %v4500 = vand.u32 %v4471, 4294901760
    %v4501 = vsub.f32 %v4471, %v4500
    %v4502 = vand.u32 %v4501, 4294901760
    %v4503 = vsub.f32 %v4501, %v4502
    %v4504 = vand.u32 %v4503, 4294901760
    %4505 = vmatmul.f32.gmra.mxu0 %v4504
    %v4506 = vpop.f32.mrf.mxu0
    %v4507 = vadd.f32 0.0, %v4506
    %v4508 = vand.u32 %v4474, 4294901760
    %v4509 = vsub.f32 %v4474, %v4508
    %v4510 = vand.u32 %v4509, 4294901760
    %v4511 = vsub.f32 %v4509, %v4510
    %v4512 = vand.u32 %v4511, 4294901760
    %4513 = vmatmul.f32.gmra.mxu0 %v4512
    %v4514 = vpop.f32.mrf.mxu0
    %v4515 = vadd.f32 0.0, %v4514
    %4516 = vdwg.mxu0
    %4517 = vmatpush.xpose.msra.mxu0 0.0
    %4518 = vmatpush.xpose.msra.mxu0 0.0
    %4519 = vmatpush.xpose.msra.mxu0 0.0
    %4520 = vmatpush.xpose.msra.mxu0 0.0
    %4521 = vmatpush.xpose.msra.mxu0 0.0
    %4522 = vmatpush.xpose.msra.mxu0 0.0
    %4523 = vmatpush.xpose.msra.mxu0 0.0
    %4524 = vmatpush.xpose.msra.mxu0 0.0
    %4525 = vmatpush.xpose.msra.mxu0 0.0
    %4526 = vmatpush.xpose.msra.mxu0 0.0
    %4527 = vmatpush.xpose.msra.mxu0 0.0
    %4528 = vmatpush.xpose.msra.mxu0 0.0
    %4529 = vmatpush.xpose.msra.mxu0 0.0
    %4530 = vmatpush.xpose.msra.mxu0 0.0
    %v4531 = vand.u32 %v4480, 4294901760
    %v4532 = vsub.f32 %v4480, %v4531
    %v4533 = vand.u32 %v4532, 4294901760
    %v4534 = vsub.f32 %v4532, %v4533
    %v4535 = vand.u32 %v4534, 4294901760
    %4536 = vmatpush.xpose.msra.mxu0 %v4535
    %v4537 = vand.u32 %v4477, 4294901760
    %v4538 = vsub.f32 %v4477, %v4537
    %v4539 = vand.u32 %v4538, 4294901760
    %v4540 = vsub.f32 %v4538, %v4539
    %v4541 = vand.u32 %v4540, 4294901760
    %4542 = vmatpush.xpose.msra.mxu0 %v4541
    %v4543 = vand.u32 %v4471, 4294901760
    %4544 = vmatmul.f32.gmra.mxu0 %v4543
    %v4545 = vpop.f32.mrf.mxu0
    %v4546 = vadd.f32 %v4507, %v4545
    %v4547 = vand.u32 %v4474, 4294901760
    %4548 = vmatmul.f32.gmra.mxu0 %v4547
    %v4549 = vpop.f32.mrf.mxu0
    %v4550 = vadd.f32 %v4515, %v4549
    %4551 = vdwg.mxu0
    %4552 = vmatpush.xpose.msra.mxu0 0.0
    %4553 = vmatpush.xpose.msra.mxu0 0.0
    %4554 = vmatpush.xpose.msra.mxu0 0.0
    %4555 = vmatpush.xpose.msra.mxu0 0.0
    %4556 = vmatpush.xpose.msra.mxu0 0.0
    %4557 = vmatpush.xpose.msra.mxu0 0.0
    %4558 = vmatpush.xpose.msra.mxu0 0.0
    %4559 = vmatpush.xpose.msra.mxu0 0.0
    %4560 = vmatpush.xpose.msra.mxu0 0.0
    %4561 = vmatpush.xpose.msra.mxu0 0.0
    %4562 = vmatpush.xpose.msra.mxu0 0.0
    %4563 = vmatpush.xpose.msra.mxu0 0.0
    %4564 = vmatpush.xpose.msra.mxu0 0.0
    %4565 = vmatpush.xpose.msra.mxu0 0.0
    %v4566 = vand.u32 %v4480, 4294901760
    %v4567 = vsub.f32 %v4480, %v4566
    %4568 = vmatpush.xpose.msra.mxu0 %v4567
    %v4569 = vand.u32 %v4477, 4294901760
    %v4570 = vsub.f32 %v4477, %v4569
    %4571 = vmatpush.xpose.msra.mxu0 %v4570
    %v4572 = vand.u32 %v4471, 4294901760
    %v4573 = vsub.f32 %v4471, %v4572
    %4574 = vmatmul.f32.gmra.mxu0 %v4573
    %v4575 = vpop.f32.mrf.mxu0
    %v4576 = vadd.f32 %v4546, %v4575
    %v4577 = vand.u32 %v4474, 4294901760
    %v4578 = vsub.f32 %v4474, %v4577
    %4579 = vmatmul.f32.gmra.mxu0 %v4578
    %v4580 = vpop.f32.mrf.mxu0
    %v4581 = vadd.f32 %v4550, %v4580
    %4582 = vdwg.mxu0
    %4583 = vmatpush.xpose.msra.mxu0 0.0
    %4584 = vmatpush.xpose.msra.mxu0 0.0
    %4585 = vmatpush.xpose.msra.mxu0 0.0
    %4586 = vmatpush.xpose.msra.mxu0 0.0
    %4587 = vmatpush.xpose.msra.mxu0 0.0
    %4588 = vmatpush.xpose.msra.mxu0 0.0
    %4589 = vmatpush.xpose.msra.mxu0 0.0
    %4590 = vmatpush.xpose.msra.mxu0 0.0
    %4591 = vmatpush.xpose.msra.mxu0 0.0
    %4592 = vmatpush.xpose.msra.mxu0 0.0
    %4593 = vmatpush.xpose.msra.mxu0 0.0
    %4594 = vmatpush.xpose.msra.mxu0 0.0
    %4595 = vmatpush.xpose.msra.mxu0 0.0
    %4596 = vmatpush.xpose.msra.mxu0 0.0
    %v4597 = vand.u32 %v4480, 4294901760
    %4598 = vmatpush.xpose.msra.mxu0 %v4597
    %v4599 = vand.u32 %v4477, 4294901760
    %4600 = vmatpush.xpose.msra.mxu0 %v4599
    %v4601 = vand.u32 %v4471, 4294901760
    %v4602 = vsub.f32 %v4471, %v4601
    %v4603 = vand.u32 %v4602, 4294901760
    %4604 = vmatmul.f32.gmra.mxu0 %v4603
    %v4605 = vpop.f32.mrf.mxu0
    %v4606 = vadd.f32 %v4576, %v4605
    %v4607 = vand.u32 %v4474, 4294901760
    %v4608 = vsub.f32 %v4474, %v4607
    %v4609 = vand.u32 %v4608, 4294901760
    %4610 = vmatmul.f32.gmra.mxu0 %v4609
    %v4611 = vpop.f32.mrf.mxu0
    %v4612 = vadd.f32 %v4581, %v4611
    %4613 = vdwg.mxu0
    %4614 = vmatpush.xpose.msra.mxu0 0.0
    %4615 = vmatpush.xpose.msra.mxu0 0.0
    %4616 = vmatpush.xpose.msra.mxu0 0.0
    %4617 = vmatpush.xpose.msra.mxu0 0.0
    %4618 = vmatpush.xpose.msra.mxu0 0.0
    %4619 = vmatpush.xpose.msra.mxu0 0.0
    %4620 = vmatpush.xpose.msra.mxu0 0.0
    %4621 = vmatpush.xpose.msra.mxu0 0.0
    %4622 = vmatpush.xpose.msra.mxu0 0.0
    %4623 = vmatpush.xpose.msra.mxu0 0.0
    %4624 = vmatpush.xpose.msra.mxu0 0.0
    %4625 = vmatpush.xpose.msra.mxu0 0.0
    %4626 = vmatpush.xpose.msra.mxu0 0.0
    %4627 = vmatpush.xpose.msra.mxu0 0.0
    %v4628 = vand.u32 %v4480, 4294901760
    %v4629 = vsub.f32 %v4480, %v4628
    %v4630 = vand.u32 %v4629, 4294901760
    %4631 = vmatpush.xpose.msra.mxu0 %v4630
    %v4632 = vand.u32 %v4477, 4294901760
    %v4633 = vsub.f32 %v4477, %v4632
    %v4634 = vand.u32 %v4633, 4294901760
    %4635 = vmatpush.xpose.msra.mxu0 %v4634
    %v4636 = vand.u32 %v4471, 4294901760
    %4637 = vmatmul.f32.gmra.mxu0 %v4636
    %v4638 = vpop.f32.mrf.mxu0
    %v4639 = vadd.f32 %v4606, %v4638
    %v4640 = vand.u32 %v4474, 4294901760
    %4641 = vmatmul.f32.gmra.mxu0 %v4640
    %v4642 = vpop.f32.mrf.mxu0
    %v4643 = vadd.f32 %v4612, %v4642
    %4644 = vdwg.mxu0
    %4645 = vmatpush.xpose.msra.mxu0 0.0
    %4646 = vmatpush.xpose.msra.mxu0 0.0
    %4647 = vmatpush.xpose.msra.mxu0 0.0
    %4648 = vmatpush.xpose.msra.mxu0 0.0
    %4649 = vmatpush.xpose.msra.mxu0 0.0
    %4650 = vmatpush.xpose.msra.mxu0 0.0
    %4651 = vmatpush.xpose.msra.mxu0 0.0
    %4652 = vmatpush.xpose.msra.mxu0 0.0
    %4653 = vmatpush.xpose.msra.mxu0 0.0
    %4654 = vmatpush.xpose.msra.mxu0 0.0
    %4655 = vmatpush.xpose.msra.mxu0 0.0
    %4656 = vmatpush.xpose.msra.mxu0 0.0
    %4657 = vmatpush.xpose.msra.mxu0 0.0
    %4658 = vmatpush.xpose.msra.mxu0 0.0
    %v4659 = vand.u32 %v4480, 4294901760
    %4660 = vmatpush.xpose.msra.mxu0 %v4659
    %v4661 = vand.u32 %v4477, 4294901760
    %4662 = vmatpush.xpose.msra.mxu0 %v4661
    %v4663 = vand.u32 %v4471, 4294901760
    %4664 = vmatmul.f32.gmra.mxu0 %v4663
    %v4665 = vpop.f32.mrf.mxu0
    %v4666 = vadd.f32 %v4639, %v4665
    %v4667 = vand.u32 %v4474, 4294901760
    %4668 = vmatmul.f32.gmra.mxu0 %v4667
    %v4669 = vpop.f32.mrf.mxu0
    %v4670 = vadd.f32 %v4643, %v4669
    %4671 = vdwg.mxu0
    %v4672 = vsel %vm61, %v3252, -inf
    %4673 = vmax.xlane.f32.xlu0 %v4672
    %v4674 = vpop.xlane.xlu0 %4673
    %v4675 = vsel %vm61, %v3256, -inf
    %4676 = vmax.xlane.f32.xlu0 %v4675
    %v4677 = vpop.xlane.xlu0 %4676
    %v4678 = vsel %vm61, %v3454, -inf
    %4679 = vmax.xlane.f32.xlu0 %v4678
    %v4680 = vpop.xlane.xlu0 %4679
    %v4681 = vsel %vm61, %v3458, -inf
    %4682 = vmax.xlane.f32.xlu0 %v4681
    %v4683 = vpop.xlane.xlu0 %4682
    %v4684 = vsel %vm61, %v3656, -inf
    %4685 = vmax.xlane.f32.xlu0 %v4684
    %v4686 = vpop.xlane.xlu0 %4685
    %v4687 = vsel %vm61, %v3660, -inf
    %4688 = vmax.xlane.f32.xlu0 %v4687
    %v4689 = vpop.xlane.xlu0 %4688
    %v4690 = vsel %vm61, %v3858, -inf
    %4691 = vmax.xlane.f32.xlu0 %v4690
    %v4692 = vpop.xlane.xlu0 %4691
    %v4693 = vsel %vm61, %v3862, -inf
    %4694 = vmax.xlane.f32.xlu0 %v4693
    %v4695 = vpop.xlane.xlu0 %4694
    %v4696 = vsel %vm61, %v4060, -inf
    %4697 = vmax.xlane.f32.xlu0 %v4696
    %v4698 = vpop.xlane.xlu0 %4697
    %v4699 = vsel %vm61, %v4064, -inf
    %4700 = vmax.xlane.f32.xlu0 %v4699
    %v4701 = vpop.xlane.xlu0 %4700
    %v4702 = vsel %vm61, %v4262, -inf
    %4703 = vmax.xlane.f32.xlu0 %v4702
    %v4704 = vpop.xlane.xlu0 %4703
    %v4705 = vsel %vm61, %v4266, -inf
    %4706 = vmax.xlane.f32.xlu0 %v4705
    %v4707 = vpop.xlane.xlu0 %4706
    %v4708 = vsel %vm61, %v4464, -inf
    %4709 = vmax.xlane.f32.xlu0 %v4708
    %v4710 = vpop.xlane.xlu0 %4709
    %v4711 = vsel %vm61, %v4468, -inf
    %4712 = vmax.xlane.f32.xlu0 %v4711
    %v4713 = vpop.xlane.xlu0 %4712
    %v4714 = vsel %vm61, %v4666, -inf
    %4715 = vmax.xlane.f32.xlu0 %v4714
    %v4716 = vpop.xlane.xlu0 %4715
    %v4717 = vsel %vm61, %v4670, -inf
    %4718 = vmax.xlane.f32.xlu0 %v4717
    %v4719 = vpop.xlane.xlu0 %4718
    %v4720 = vsub.f32 %v3252, %v4674
    %v4721 = vsub.f32 %v3256, %v4677
    %v4722 = vsub.f32 %v3454, %v4680
    %v4723 = vsub.f32 %v3458, %v4683
    %v4724 = vsub.f32 %v3656, %v4686
    %v4725 = vsub.f32 %v3660, %v4689
    %v4726 = vsub.f32 %v3858, %v4692
    %v4727 = vsub.f32 %v3862, %v4695
    %v4728 = vsub.f32 %v4060, %v4698
    %v4729 = vsub.f32 %v4064, %v4701
    %v4730 = vsub.f32 %v4262, %v4704
    %v4731 = vsub.f32 %v4266, %v4707
    %v4732 = vsub.f32 %v4464, %v4710
    %v4733 = vsub.f32 %v4468, %v4713
    %v4734 = vsub.f32 %v4666, %v4716
    %v4735 = vsub.f32 %v4670, %v4719
    %v4736 = vmul.f32 %v4720, 1.442695
    %v4737 = vpow.pop %v4736
    %v4738 = vmul.f32 %v4721, 1.442695
    %v4739 = vpow.pop %v4738
    %v4740 = vmul.f32 %v4722, 1.442695
    %v4741 = vpow.pop %v4740
    %v4742 = vmul.f32 %v4723, 1.442695
    %v4743 = vpow.pop %v4742
    %v4744 = vmul.f32 %v4724, 1.442695
    %v4745 = vpow.pop %v4744
    %v4746 = vmul.f32 %v4725, 1.442695
    %v4747 = vpow.pop %v4746
    %v4748 = vmul.f32 %v4726, 1.442695
    %v4749 = vpow.pop %v4748
    %v4750 = vmul.f32 %v4727, 1.442695
    %v4751 = vpow.pop %v4750
    %v4752 = vmul.f32 %v4728, 1.442695
    %v4753 = vpow.pop %v4752
    %v4754 = vmul.f32 %v4729, 1.442695
    %v4755 = vpow.pop %v4754
    %v4756 = vmul.f32 %v4730, 1.442695
    %v4757 = vpow.pop %v4756
    %v4758 = vmul.f32 %v4731, 1.442695
    %v4759 = vpow.pop %v4758
    %v4760 = vmul.f32 %v4732, 1.442695
    %v4761 = vpow.pop %v4760
    %v4762 = vmul.f32 %v4733, 1.442695
    %v4763 = vpow.pop %v4762
    %v4764 = vmul.f32 %v4734, 1.442695
    %v4765 = vpow.pop %v4764
    %v4766 = vmul.f32 %v4735, 1.442695
    %v4767 = vpow.pop %v4766
    %v4768 = vsel %vm61, %v4737, 0.0
    %4769 = vadd.xlane.f32.xlu0 %v4768
    %v4770 = vpop.xlane.xlu0 %4769
    %v4771 = vsel %vm61, %v4739, 0.0
    %4772 = vadd.xlane.f32.xlu0 %v4771
    %v4773 = vpop.xlane.xlu0 %4772
    %v4774 = vsel %vm61, %v4741, 0.0
    %4775 = vadd.xlane.f32.xlu0 %v4774
    %v4776 = vpop.xlane.xlu0 %4775
    %v4777 = vsel %vm61, %v4743, 0.0
    %4778 = vadd.xlane.f32.xlu0 %v4777
    %v4779 = vpop.xlane.xlu0 %4778
    %v4780 = vsel %vm61, %v4745, 0.0
    %4781 = vadd.xlane.f32.xlu0 %v4780
    %v4782 = vpop.xlane.xlu0 %4781
    %v4783 = vsel %vm61, %v4747, 0.0
    %4784 = vadd.xlane.f32.xlu0 %v4783
    %v4785 = vpop.xlane.xlu0 %4784
    %v4786 = vsel %vm61, %v4749, 0.0
    %4787 = vadd.xlane.f32.xlu0 %v4786
    %v4788 = vpop.xlane.xlu0 %4787
    %v4789 = vsel %vm61, %v4751, 0.0
    %4790 = vadd.xlane.f32.xlu0 %v4789
    %v4791 = vpop.xlane.xlu0 %4790
    %v4792 = vsel %vm61, %v4753, 0.0
    %4793 = vadd.xlane.f32.xlu0 %v4792
    %v4794 = vpop.xlane.xlu0 %4793
    %v4795 = vsel %vm61, %v4755, 0.0
    %4796 = vadd.xlane.f32.xlu0 %v4795
    %v4797 = vpop.xlane.xlu0 %4796
    %v4798 = vsel %vm61, %v4757, 0.0
    %4799 = vadd.xlane.f32.xlu0 %v4798
    %v4800 = vpop.xlane.xlu0 %4799
    %v4801 = vsel %vm61, %v4759, 0.0
    %4802 = vadd.xlane.f32.xlu0 %v4801
    %v4803 = vpop.xlane.xlu0 %4802
    %v4804 = vsel %vm61, %v4761, 0.0
    %4805 = vadd.xlane.f32.xlu0 %v4804
    %v4806 = vpop.xlane.xlu0 %4805
    %v4807 = vsel %vm61, %v4763, 0.0
    %4808 = vadd.xlane.f32.xlu0 %v4807
    %v4809 = vpop.xlane.xlu0 %4808
    %v4810 = vsel %vm61, %v4765, 0.0
    %4811 = vadd.xlane.f32.xlu0 %v4810
    %v4812 = vpop.xlane.xlu0 %4811
    %v4813 = vsel %vm61, %v4767, 0.0
    %4814 = vadd.xlane.f32.xlu0 %v4813
    %v4815 = vpop.xlane.xlu0 %4814
    %v4816 = vrcp.pop %v4770
    %v4817 = vmul.f32 %v4770, %v4816
    %v4818 = vsub.f32 1.0, %v4817
    %v4819 = vmul.f32 %v4816, %v4818
    %v4820 = vadd.f32 %v4816, %v4819
    %vm4821 = vweird.f32 %v4770
    %vm4822 = vweird.f32 %v4816
    %vm4823 = vmor %vm4821, %vm4822
    %v4824 = vsel %vm4823, %v4816, %v4820
    %v4825 = vand.u32 2147483647, %v4770
    %vm4826 = vcmp.eq.f32.partialorder %v4825, 8.507059e+37
    %v4827 = vand.u32 %v4770, 2147483648
    %v4828 = vor.u32 1.1754944e-38, %v4827
    %v4829 = vsel %vm4826, %v4828, %v4824
    %v4830 = vmul.f32 %v3007, %v4829
    %v4831 = vrcp.pop %v4773
    %v4832 = vmul.f32 %v4773, %v4831
    %v4833 = vsub.f32 1.0, %v4832
    %v4834 = vmul.f32 %v4831, %v4833
    %v4835 = vadd.f32 %v4831, %v4834
    %vm4836 = vweird.f32 %v4773
    %vm4837 = vweird.f32 %v4831
    %vm4838 = vmor %vm4836, %vm4837
    %v4839 = vsel %vm4838, %v4831, %v4835
    %v4840 = vand.u32 2147483647, %v4773
    %vm4841 = vcmp.eq.f32.partialorder %v4840, 8.507059e+37
    %v4842 = vand.u32 %v4773, 2147483648
    %v4843 = vor.u32 1.1754944e-38, %v4842
    %v4844 = vsel %vm4841, %v4843, %v4839
    %v4845 = vmul.f32 %v3008, %v4844
    %v4846 = vrcp.pop %v4776
    %v4847 = vmul.f32 %v4776, %v4846
    %v4848 = vsub.f32 1.0, %v4847
    %v4849 = vmul.f32 %v4846, %v4848
    %v4850 = vadd.f32 %v4846, %v4849
    %vm4851 = vweird.f32 %v4776
    %vm4852 = vweird.f32 %v4846
    %vm4853 = vmor %vm4851, %vm4852
    %v4854 = vsel %vm4853, %v4846, %v4850
    %v4855 = vand.u32 2147483647, %v4776
    %vm4856 = vcmp.eq.f32.partialorder %v4855, 8.507059e+37
    %v4857 = vand.u32 %v4776, 2147483648
    %v4858 = vor.u32 1.1754944e-38, %v4857
    %v4859 = vsel %vm4856, %v4858, %v4854
    %v4860 = vmul.f32 %v3009, %v4859
    %v4861 = vrcp.pop %v4779
    %v4862 = vmul.f32 %v4779, %v4861
    %v4863 = vsub.f32 1.0, %v4862
    %v4864 = vmul.f32 %v4861, %v4863
    %v4865 = vadd.f32 %v4861, %v4864
    %vm4866 = vweird.f32 %v4779
    %vm4867 = vweird.f32 %v4861
    %vm4868 = vmor %vm4866, %vm4867
    %v4869 = vsel %vm4868, %v4861, %v4865
    %v4870 = vand.u32 2147483647, %v4779
    %vm4871 = vcmp.eq.f32.partialorder %v4870, 8.507059e+37
    %v4872 = vand.u32 %v4779, 2147483648
    %v4873 = vor.u32 1.1754944e-38, %v4872
    %v4874 = vsel %vm4871, %v4873, %v4869
    %v4875 = vmul.f32 %v3010, %v4874
    %v4876 = vrcp.pop %v4782
    %v4877 = vmul.f32 %v4782, %v4876
    %v4878 = vsub.f32 1.0, %v4877
    %v4879 = vmul.f32 %v4876, %v4878
    %v4880 = vadd.f32 %v4876, %v4879
    %vm4881 = vweird.f32 %v4782
    %vm4882 = vweird.f32 %v4876
    %vm4883 = vmor %vm4881, %vm4882
    %v4884 = vsel %vm4883, %v4876, %v4880
    %v4885 = vand.u32 2147483647, %v4782
    %vm4886 = vcmp.eq.f32.partialorder %v4885, 8.507059e+37
    %v4887 = vand.u32 %v4782, 2147483648
    %v4888 = vor.u32 1.1754944e-38, %v4887
    %v4889 = vsel %vm4886, %v4888, %v4884
    %v4890 = vmul.f32 %v3011, %v4889
    %v4891 = vrcp.pop %v4785
    %v4892 = vmul.f32 %v4785, %v4891
    %v4893 = vsub.f32 1.0, %v4892
    %v4894 = vmul.f32 %v4891, %v4893
    %v4895 = vadd.f32 %v4891, %v4894
    %vm4896 = vweird.f32 %v4785
    %vm4897 = vweird.f32 %v4891
    %vm4898 = vmor %vm4896, %vm4897
    %v4899 = vsel %vm4898, %v4891, %v4895
    %v4900 = vand.u32 2147483647, %v4785
    %vm4901 = vcmp.eq.f32.partialorder %v4900, 8.507059e+37
    %v4902 = vand.u32 %v4785, 2147483648
    %v4903 = vor.u32 1.1754944e-38, %v4902
    %v4904 = vsel %vm4901, %v4903, %v4899
    %v4905 = vmul.f32 %v3012, %v4904
    %v4906 = vrcp.pop %v4788
    %v4907 = vmul.f32 %v4788, %v4906
    %v4908 = vsub.f32 1.0, %v4907
    %v4909 = vmul.f32 %v4906, %v4908
    %v4910 = vadd.f32 %v4906, %v4909
    %vm4911 = vweird.f32 %v4788
    %vm4912 = vweird.f32 %v4906
    %vm4913 = vmor %vm4911, %vm4912
    %v4914 = vsel %vm4913, %v4906, %v4910
    %v4915 = vand.u32 2147483647, %v4788
    %vm4916 = vcmp.eq.f32.partialorder %v4915, 8.507059e+37
    %v4917 = vand.u32 %v4788, 2147483648
    %v4918 = vor.u32 1.1754944e-38, %v4917
    %v4919 = vsel %vm4916, %v4918, %v4914
    %v4920 = vmul.f32 %v3013, %v4919
    %v4921 = vrcp.pop %v4791
    %v4922 = vmul.f32 %v4791, %v4921
    %v4923 = vsub.f32 1.0, %v4922
    %v4924 = vmul.f32 %v4921, %v4923
    %v4925 = vadd.f32 %v4921, %v4924
    %vm4926 = vweird.f32 %v4791
    %vm4927 = vweird.f32 %v4921
    %vm4928 = vmor %vm4926, %vm4927
    %v4929 = vsel %vm4928, %v4921, %v4925
    %v4930 = vand.u32 2147483647, %v4791
    %vm4931 = vcmp.eq.f32.partialorder %v4930, 8.507059e+37
    %v4932 = vand.u32 %v4791, 2147483648
    %v4933 = vor.u32 1.1754944e-38, %v4932
    %v4934 = vsel %vm4931, %v4933, %v4929
    %v4935 = vmul.f32 %v3014, %v4934
    %v4936 = vrcp.pop %v4794
    %v4937 = vmul.f32 %v4794, %v4936
    %v4938 = vsub.f32 1.0, %v4937
    %v4939 = vmul.f32 %v4936, %v4938
    %v4940 = vadd.f32 %v4936, %v4939
    %vm4941 = vweird.f32 %v4794
    %vm4942 = vweird.f32 %v4936
    %vm4943 = vmor %vm4941, %vm4942
    %v4944 = vsel %vm4943, %v4936, %v4940
    %v4945 = vand.u32 2147483647, %v4794
    %vm4946 = vcmp.eq.f32.partialorder %v4945, 8.507059e+37
    %v4947 = vand.u32 %v4794, 2147483648
    %v4948 = vor.u32 1.1754944e-38, %v4947
    %v4949 = vsel %vm4946, %v4948, %v4944
    %v4950 = vmul.f32 %v3015, %v4949
    %v4951 = vrcp.pop %v4797
    %v4952 = vmul.f32 %v4797, %v4951
    %v4953 = vsub.f32 1.0, %v4952
    %v4954 = vmul.f32 %v4951, %v4953
    %v4955 = vadd.f32 %v4951, %v4954
    %vm4956 = vweird.f32 %v4797
    %vm4957 = vweird.f32 %v4951
    %vm4958 = vmor %vm4956, %vm4957
    %v4959 = vsel %vm4958, %v4951, %v4955
    %v4960 = vand.u32 2147483647, %v4797
    %vm4961 = vcmp.eq.f32.partialorder %v4960, 8.507059e+37
    %v4962 = vand.u32 %v4797, 2147483648
    %v4963 = vor.u32 1.1754944e-38, %v4962
    %v4964 = vsel %vm4961, %v4963, %v4959
    %v4965 = vmul.f32 %v3016, %v4964
    %v4966 = vrcp.pop %v4800
    %v4967 = vmul.f32 %v4800, %v4966
    %v4968 = vsub.f32 1.0, %v4967
    %v4969 = vmul.f32 %v4966, %v4968
    %v4970 = vadd.f32 %v4966, %v4969
    %vm4971 = vweird.f32 %v4800
    %vm4972 = vweird.f32 %v4966
    %vm4973 = vmor %vm4971, %vm4972
    %v4974 = vsel %vm4973, %v4966, %v4970
    %v4975 = vand.u32 2147483647, %v4800
    %vm4976 = vcmp.eq.f32.partialorder %v4975, 8.507059e+37
    %v4977 = vand.u32 %v4800, 2147483648
    %v4978 = vor.u32 1.1754944e-38, %v4977
    %v4979 = vsel %vm4976, %v4978, %v4974
    %v4980 = vmul.f32 %v3017, %v4979
    %v4981 = vrcp.pop %v4803
    %v4982 = vmul.f32 %v4803, %v4981
    %v4983 = vsub.f32 1.0, %v4982
    %v4984 = vmul.f32 %v4981, %v4983
    %v4985 = vadd.f32 %v4981, %v4984
    %vm4986 = vweird.f32 %v4803
    %vm4987 = vweird.f32 %v4981
    %vm4988 = vmor %vm4986, %vm4987
    %v4989 = vsel %vm4988, %v4981, %v4985
    %v4990 = vand.u32 2147483647, %v4803
    %vm4991 = vcmp.eq.f32.partialorder %v4990, 8.507059e+37
    %v4992 = vand.u32 %v4803, 2147483648
    %v4993 = vor.u32 1.1754944e-38, %v4992
    %v4994 = vsel %vm4991, %v4993, %v4989
    %v4995 = vmul.f32 %v3018, %v4994
    %v4996 = vrcp.pop %v4806
    %v4997 = vmul.f32 %v4806, %v4996
    %v4998 = vsub.f32 1.0, %v4997
    %v4999 = vmul.f32 %v4996, %v4998
    %v5000 = vadd.f32 %v4996, %v4999
    %vm5001 = vweird.f32 %v4806
    %vm5002 = vweird.f32 %v4996
    %vm5003 = vmor %vm5001, %vm5002
    %v5004 = vsel %vm5003, %v4996, %v5000
    %v5005 = vand.u32 2147483647, %v4806
    %vm5006 = vcmp.eq.f32.partialorder %v5005, 8.507059e+37
    %v5007 = vand.u32 %v4806, 2147483648
    %v5008 = vor.u32 1.1754944e-38, %v5007
    %v5009 = vsel %vm5006, %v5008, %v5004
    %v5010 = vmul.f32 %v3019, %v5009
    %v5011 = vrcp.pop %v4809
    %v5012 = vmul.f32 %v4809, %v5011
    %v5013 = vsub.f32 1.0, %v5012
    %v5014 = vmul.f32 %v5011, %v5013
    %v5015 = vadd.f32 %v5011, %v5014
    %vm5016 = vweird.f32 %v4809
    %vm5017 = vweird.f32 %v5011
    %vm5018 = vmor %vm5016, %vm5017
    %v5019 = vsel %vm5018, %v5011, %v5015
    %v5020 = vand.u32 2147483647, %v4809
    %vm5021 = vcmp.eq.f32.partialorder %v5020, 8.507059e+37
    %v5022 = vand.u32 %v4809, 2147483648
    %v5023 = vor.u32 1.1754944e-38, %v5022
    %v5024 = vsel %vm5021, %v5023, %v5019
    %v5025 = vmul.f32 %v3020, %v5024
    %v5026 = vrcp.pop %v4812
    %v5027 = vmul.f32 %v4812, %v5026
    %v5028 = vsub.f32 1.0, %v5027
    %v5029 = vmul.f32 %v5026, %v5028
    %v5030 = vadd.f32 %v5026, %v5029
    %vm5031 = vweird.f32 %v4812
    %vm5032 = vweird.f32 %v5026
    %vm5033 = vmor %vm5031, %vm5032
    %v5034 = vsel %vm5033, %v5026, %v5030
    %v5035 = vand.u32 2147483647, %v4812
    %vm5036 = vcmp.eq.f32.partialorder %v5035, 8.507059e+37
    %v5037 = vand.u32 %v4812, 2147483648
    %v5038 = vor.u32 1.1754944e-38, %v5037
    %v5039 = vsel %vm5036, %v5038, %v5034
    %v5040 = vmul.f32 %v3021, %v5039
    %v5041 = vrcp.pop %v4815
    %v5042 = vmul.f32 %v4815, %v5041
    %v5043 = vsub.f32 1.0, %v5042
    %v5044 = vmul.f32 %v5041, %v5043
    %v5045 = vadd.f32 %v5041, %v5044
    %vm5046 = vweird.f32 %v4815
    %vm5047 = vweird.f32 %v5041
    %vm5048 = vmor %vm5046, %vm5047
    %v5049 = vsel %vm5048, %v5041, %v5045
    %v5050 = vand.u32 2147483647, %v4815
    %vm5051 = vcmp.eq.f32.partialorder %v5050, 8.507059e+37
    %v5052 = vand.u32 %v4815, 2147483648
    %v5053 = vor.u32 1.1754944e-38, %v5052
    %v5054 = vsel %vm5051, %v5053, %v5049
    %v5055 = vmul.f32 %v3022, %v5054
    %5057 = vset.pattern.permute.xlu0 0
    %5058 = vperm.xlu0 %5057, %v4830
    %v5059 = vpop.permute.xlu0 %5058
    %5062 = vset.pattern.permute.xlu0 0
    %5063 = vperm.xlu0 %5062, %v4845
    %v5064 = vpop.permute.xlu0 %5063
    %5067 = vset.pattern.permute.xlu0 0
    %5068 = vperm.xlu0 %5067, %v4860
    %v5069 = vpop.permute.xlu0 %5068
    %5072 = vset.pattern.permute.xlu0 0
    %5073 = vperm.xlu0 %5072, %v4875
    %v5074 = vpop.permute.xlu0 %5073
    %5077 = vset.pattern.permute.xlu0 0
    %5078 = vperm.xlu0 %5077, %v4890
    %v5079 = vpop.permute.xlu0 %5078
    %5082 = vset.pattern.permute.xlu0 0
    %5083 = vperm.xlu0 %5082, %v4905
    %v5084 = vpop.permute.xlu0 %5083
    %5087 = vset.pattern.permute.xlu0 0
    %5088 = vperm.xlu0 %5087, %v4920
    %v5089 = vpop.permute.xlu0 %5088
    %5092 = vset.pattern.permute.xlu0 0
    %5093 = vperm.xlu0 %5092, %v4935
    %v5094 = vpop.permute.xlu0 %5093
    %5097 = vset.pattern.permute.xlu0 0
    %5098 = vperm.xlu0 %5097, %v4950
    %v5099 = vpop.permute.xlu0 %5098
    %5102 = vset.pattern.permute.xlu0 0
    %5103 = vperm.xlu0 %5102, %v4965
    %v5104 = vpop.permute.xlu0 %5103
    %5107 = vset.pattern.permute.xlu0 0
    %5108 = vperm.xlu0 %5107, %v4980
    %v5109 = vpop.permute.xlu0 %5108
    %5112 = vset.pattern.permute.xlu0 0
    %5113 = vperm.xlu0 %5112, %v4995
    %v5114 = vpop.permute.xlu0 %5113
    %5117 = vset.pattern.permute.xlu0 0
    %5118 = vperm.xlu0 %5117, %v5010
    %v5119 = vpop.permute.xlu0 %5118
    %5122 = vset.pattern.permute.xlu0 0
    %5123 = vperm.xlu0 %5122, %v5025
    %v5124 = vpop.permute.xlu0 %5123
    %5127 = vset.pattern.permute.xlu0 0
    %5128 = vperm.xlu0 %5127, %v5040
    %v5129 = vpop.permute.xlu0 %5128
    %5132 = vset.pattern.permute.xlu0 0
    %5133 = vperm.xlu0 %5132, %v5055
    %v5134 = vpop.permute.xlu0 %5133
    %v5136 = vmul.f32 %v4737, %v5059
    %v5137 = vmul.f32 %v4739, %v5064
    %v5138 = vmul.f32 %v4741, %v5069
    %v5139 = vmul.f32 %v4743, %v5074
    %v5140 = vmul.f32 %v4745, %v5079
    %v5141 = vmul.f32 %v4747, %v5084
    %v5142 = vmul.f32 %v4749, %v5089
    %v5143 = vmul.f32 %v4751, %v5094
    %v5144 = vmul.f32 %v4753, %v5099
    %v5145 = vmul.f32 %v4755, %v5104
    %v5146 = vmul.f32 %v4757, %v5109
    %v5147 = vmul.f32 %v4759, %v5114
    %v5148 = vmul.f32 %v4761, %v5119
    %v5149 = vmul.f32 %v4763, %v5124
    %v5150 = vmul.f32 %v4765, %v5129
    %v5151 = vmul.f32 %v4767, %v5134
    %5152 = vst.msk [vmem:[#allocation3] sm:$0xff] %vm61, %v5136
    %5153 = vst.msk [vmem:[#allocation3 + $0x8] sm:$0xff] %vm61, %v5137
    %5154 = vst.msk [vmem:[#allocation3 + $0x10] sm:$0xff] %vm61, %v5138
    %5155 = vst.msk [vmem:[#allocation3 + $0x18] sm:$0xff] %vm61, %v5139
    %5156 = vst.msk [vmem:[#allocation3 + $0x20] sm:$0xff] %vm61, %v5140
    %5157 = vst.msk [vmem:[#allocation3 + $0x28] sm:$0xff] %vm61, %v5141
    %5158 = vst.msk [vmem:[#allocation3 + $0x30] sm:$0xff] %vm61, %v5142
    %5159 = vst.msk [vmem:[#allocation3 + $0x38] sm:$0xff] %vm61, %v5143
    %5160 = vst.msk [vmem:[#allocation3 + $0x40] sm:$0xff] %vm61, %v5144
    %5161 = vst.msk [vmem:[#allocation3 + $0x48] sm:$0xff] %vm61, %v5145
    %5162 = vst.msk [vmem:[#allocation3 + $0x50] sm:$0xff] %vm61, %v5146
    %5163 = vst.msk [vmem:[#allocation3 + $0x58] sm:$0xff] %vm61, %v5147
    %5164 = vst.msk [vmem:[#allocation3 + $0x60] sm:$0xff] %vm61, %v5148
    %5165 = vst.msk [vmem:[#allocation3 + $0x68] sm:$0xff] %vm61, %v5149
    %5166 = vst.msk [vmem:[#allocation3 + $0x70] sm:$0xff] %vm61, %v5150
    %5167 = vst.msk [vmem:[#allocation3 + $0x78] sm:$0xff] %vm61, %v5151
    // Predicated region
    $region42: #{tpu_custom_call.1} parent=1 // pred_check
      _
    $region43: #{tpu_custom_call.1} parent=1 // pred_check_branch
      %5169 = sbr.rel (0) target = $region45
    $region44: #{tpu_custom_call.1} parent=1 // pred_region
      _
    $region45: #{tpu_custom_call.1} parent=1 // pred_fallthru
      _
    // Predicated region
    $region46: #{tpu_custom_call.1} parent=1 // pred_check
      _
    $region47: #{tpu_custom_call.1} parent=1 // pred_check_branch
      %5171 = sbr.rel (0) target = $region49
    $region48: #{tpu_custom_call.1} parent=1 // pred_region
      %5173 = vsyncadd [#allocation4], 0
      %s5174 = sshll.u32 [#allocation3], 4
      %s5175 = int_to_ptr.vmem [resolvable:$true] %s5174
      %s5176 = sshll.u32 %s11, 4
      %s5177 = int_to_ptr.hbm [resolvable:$true] %s5176
      %5182 = dma.vmem_to_hbm [thread:$0]  %s5175, 2048, %s5177, [#allocation4], 128, 128, 8
    $region49: #{tpu_custom_call.1} parent=1 // pred_fallthru
      _
    // Predicated region
    $region50: #{tpu_custom_call.1} parent=1 // pred_check
      _
    $region51: #{tpu_custom_call.1} parent=1 // pred_check_branch
      %5184 = sbr.rel (0) target = $region53
    $region52: #{tpu_custom_call.1} parent=1 // pred_region
      _
    $region53: #{tpu_custom_call.1} parent=1 // pred_fallthru
      _
    // Predicated region
    $region54: #{tpu_custom_call.1} parent=1 // pred_check
      _
    $region55: #{tpu_custom_call.1} parent=1 // pred_check_branch
      %5186 = sbr.rel (0) target = $region57
    $region56: #{tpu_custom_call.1} parent=1 // pred_region
      %5188 = dma.done [#allocation4], 2048
    $region57: #{tpu_custom_call.1} parent=1 // pred_fallthru
      _
    %5189 = vsyncpa [#allocation4], 1

</llo_original>
